<compile_context>
chip_gen: v5e
topology: v5e:2x2
jax: 0.10.0
libtpu: 0.0.40
codegen_flags: <defaults>
</compile_context>

<pallas_src>
import functools

import jax
import jax.numpy as jnp
import numpy as np
from jax.experimental import pallas as pl
from jax.experimental.pallas import tpu as pltpu

SIGMA = 0.1
SIGMA_COLOR = -0.5 * SIGMA * SIGMA  # -0.005

# (dy, dx) for the 12 unique neighbour pairs, in the order the torch code
# enumerates them (w1/w2, w3/w4, ..., w23/w24); each contributes twice.
OFFSETS = ((1, 0), (0, 1), (1, 1), (1, -1),
           (2, 0), (0, 2), (2, 1), (2, -1),
           (1, 2), (1, -2), (2, 2), (2, -2))


# ---------------------------------------------------------------------------
# rgb2yCbCr: faithful to torch's `input.contiguous().view(-1, 3).mm(mat)+bias`
# (NCHW memory order grouped in consecutive triples -- NOT per-pixel channels)
# ---------------------------------------------------------------------------
def _rgb2ycbcr_torch_faithful(x):
    h, w = x.shape[2], x.shape[3]
    mat = jnp.array([[0.257, -0.148, 0.439],
                     [0.564, -0.291, -0.368],
                     [0.098, 0.439, -0.071]], jnp.float32)
    bias = jnp.array([16.0 / 255.0, 128.0 / 255.0, 128.0 / 255.0], jnp.float32)
    flat = x.reshape(-1, 3).astype(jnp.float32)
    return (flat @ mat + bias).reshape(1, 3, h, w)


# ---------------------------------------------------------------------------
# Pallas kernel: 24-way weighted smoothness term, gridded over row strips
# ---------------------------------------------------------------------------
def _pair_sums(ya, yb, oa, ob):
    """Partial sums over one window: sum(exp(sc*||dY||^2)) and sum(|dO|)."""
    d = ya - yb
    ssq = jnp.sum(d * d, axis=0)                           # (rows, cols)
    sw = jnp.sum(jnp.exp(ssq * SIGMA_COLOR))               # scalar
    sg = jnp.sum(jnp.sum(jnp.abs(oa - ob), axis=0))        # scalar
    return sw, sg


def _smooth_kernel(y_ref, o_ref, out_ref,
                   ycar_ref, ocar_ref, wsum_ref, gsum_ref, *, full_h):
    i = pl.program_id(0)
    th = y_ref.shape[1]          # strip rows (static)
    w = y_ref.shape[2]           # full image width (static)
    co = o_ref.shape[0]          # network-output channels (static)

    @pl.when(i == 0)
    def _init():
        for k in range(len(OFFSETS)):
            wsum_ref[k] = jnp.float32(0.0)
            gsum_ref[k] = jnp.float32(0.0)

    # ---- pairs fully inside this strip -----------------------------------
    for k, (dy, dx) in enumerate(OFFSETS):
        lo = max(0, -dx)                 # valid base-column window [lo, hi)
        hi = w - max(0, dx)
        ya = y_ref[:, dy:th, lo + dx:hi + dx]     # value at (h+dy, w+dx)
        yb = y_ref[:, 0:th - dy, lo:hi]           # value at (h,    w)
        oa = o_ref[:, dy:th, lo + dx:hi + dx]
        ob = o_ref[:, 0:th - dy, lo:hi]
        sw, sg = _pair_sums(ya, yb, oa, ob)
        wsum_ref[k] = wsum_ref[k] + sw
        gsum_ref[k] = gsum_ref[k] + sg

    # ---- pairs straddling the previous strip boundary (2-row carry) ------
    @pl.when(i > 0)
    def _cross():
        for k, (dy, dx) in enumerate(OFFSETS):
            if dy == 0:
                continue
            lo = max(0, -dx)
            hi = w - max(0, dx)
            ya = y_ref[:, 0:dy, lo + dx:hi + dx]          # current strip top
            yb = ycar_ref[:, 2 - dy:2, lo:hi]             # prev strip bottom
            oa = o_ref[:, 0:dy, lo + dx:hi + dx]
            ob = ocar_ref[:, 2 - dy:2, lo:hi]
            sw, sg = _pair_sums(ya, yb, oa, ob)
            wsum_ref[k] = wsum_ref[k] + sw
            gsum_ref[k] = gsum_ref[k] + sg

    # ---- carry the last two rows of this strip for the next one ----------
    ycar_ref[...] = y_ref[:, th - 2:th, :]
    ocar_ref[...] = o_ref[:, th - 2:th, :]

    # ---- finalize: 24-term weighted sum, normalisations folded -----------
    @pl.when(i == pl.num_programs(0) - 1)
    def _finalize():
        total = jnp.float32(0.0)
        for k, (dy, dx) in enumerate(OFFSETS):
            hr = full_h - dy
            wr = w - abs(dx)
            # 2 * mean(w_k) * mean(|grad_k|)  with compile-time constant.
            coeff = 2.0 / (float(hr) * float(wr) * float(co)
                           * float(hr) * float(wr))
            total = total + coeff * wsum_ref[k] * gsum_ref[k]
        out_ref[0] = total


def _choose_strip_rows(h, w, c_total, target_bytes=8 * 1024 * 1024):
    """Largest multiple-of-8 divisor of H whose (3+Co, TH, W) f32 strip stays
    within ~target_bytes (keeps double-buffered blocks + temporaries well
    under VMEM on v5e/v6e (128 MiB) and v7x (64 MiB))."""
    if h % 8 != 0:
        return h                          # single full-height strip fallback
    max_rows = max(8, target_bytes // (4 * c_total * w))
    best = 8
    for th in range(8, h + 1, 8):
        if h % th == 0 and th <= max_rows:
            best = th
    return best


def smooth_loss_pallas(inp, out, *, strip_rows=None):
    """SmoothLoss.forward(input, output) -> scalar f32."""
    _, _, h, w = inp.shape
    co = out.shape[1]

    # Faithful colour mix (wrapper-side layout plumbing, single launch overall)
    y3 = _rgb2ycbcr_torch_faithful(inp)[0]            # (3, H, W) f32
    o3 = out[0].astype(jnp.float32)                   # (Co, H, W) f32

    th = strip_rows if strip_rows is not None else _choose_strip_rows(h, w, 3 + co)
    assert h % th == 0 and (th % 8 == 0 or th == h), "strip rows must tile H"
    n_strips = h // th

    kernel = functools.partial(_smooth_kernel, full_h=h)
    loss = pl.pallas_call(
        kernel,
        out_shape=jax.ShapeDtypeStruct((1,), jnp.float32),
        grid_spec=pltpu.PrefetchScalarGridSpec(
            num_scalar_prefetch=0,
            grid=(n_strips,),
            in_specs=[pl.BlockSpec((3, th, w), lambda i: (0, i, 0)),
                      pl.BlockSpec((co, th, w), lambda i: (0, i, 0))],
            out_specs=pl.BlockSpec(memory_space=pltpu.MemorySpace.SMEM),
            scratch_shapes=[pltpu.VMEM((3, 2, w), jnp.float32),    # Y carry
                            pltpu.VMEM((co, 2, w), jnp.float32),   # O carry
                            pltpu.SMEM((len(OFFSETS),), jnp.float32),  # sum w
                            pltpu.SMEM((len(OFFSETS),), jnp.float32)]),  # sum g
        compiler_params=pltpu.CompilerParams(
            dimension_semantics=("arbitrary",),       # sequential accumulation
            vmem_limit_bytes=48 * 1024 * 1024),
    )(y3, o3)
    return loss[0]


# ---------------------------------------------------------------------------
# Pure-JAX reference: literal transcription of the torch forward (24 terms)
# ---------------------------------------------------------------------------
def smooth_loss_ref(inp, out):
    y = _rgb2ycbcr_torch_faithful(inp)
    o = out.astype(jnp.float32)

    def wexp(a, b):
        return jnp.exp(jnp.sum((a - b) ** 2, axis=1, keepdims=True) * SIGMA_COLOR)

    pairs = [
        (y[:, :, 1:, :], y[:, :, :-1, :], o[:, :, 1:, :], o[:, :, :-1, :]),
        (y[:, :, :-1, :], y[:, :, 1:, :], o[:, :, :-1, :], o[:, :, 1:, :]),
        (y[:, :, :, 1:], y[:, :, :, :-1], o[:, :, :, 1:], o[:, :, :, :-1]),
        (y[:, :, :, :-1], y[:, :, :, 1:], o[:, :, :, :-1], o[:, :, :, 1:]),
        (y[:, :, :-1, :-1], y[:, :, 1:, 1:], o[:, :, :-1, :-1], o[:, :, 1:, 1:]),
        (y[:, :, 1:, 1:], y[:, :, :-1, :-1], o[:, :, 1:, 1:], o[:, :, :-1, :-1]),
        (y[:, :, 1:, :-1], y[:, :, :-1, 1:], o[:, :, 1:, :-1], o[:, :, :-1, 1:]),
        (y[:, :, :-1, 1:], y[:, :, 1:, :-1], o[:, :, :-1, 1:], o[:, :, 1:, :-1]),
        (y[:, :, 2:, :], y[:, :, :-2, :], o[:, :, 2:, :], o[:, :, :-2, :]),
        (y[:, :, :-2, :], y[:, :, 2:, :], o[:, :, :-2, :], o[:, :, 2:, :]),
        (y[:, :, :, 2:], y[:, :, :, :-2], o[:, :, :, 2:], o[:, :, :, :-2]),
        (y[:, :, :, :-2], y[:, :, :, 2:], o[:, :, :, :-2], o[:, :, :, 2:]),
        (y[:, :, :-2, :-1], y[:, :, 2:, 1:], o[:, :, :-2, :-1], o[:, :, 2:, 1:]),
        (y[:, :, 2:, 1:], y[:, :, :-2, :-1], o[:, :, 2:, 1:], o[:, :, :-2, :-1]),
        (y[:, :, 2:, :-1], y[:, :, :-2, 1:], o[:, :, 2:, :-1], o[:, :, :-2, 1:]),
        (y[:, :, :-2, 1:], y[:, :, 2:, :-1], o[:, :, :-2, 1:], o[:, :, 2:, :-1]),
        (y[:, :, :-1, :-2], y[:, :, 1:, 2:], o[:, :, :-1, :-2], o[:, :, 1:, 2:]),
        (y[:, :, 1:, 2:], y[:, :, :-1, :-2], o[:, :, 1:, 2:], o[:, :, :-1, :-2]),
        (y[:, :, 1:, :-2], y[:, :, :-1, 2:], o[:, :, 1:, :-2], o[:, :, :-1, 2:]),
        (y[:, :, :-1, 2:], y[:, :, 1:, :-2], o[:, :, :-1, 2:], o[:, :, 1:, :-2]),
        (y[:, :, :-2, :-2], y[:, :, 2:, 2:], o[:, :, :-2, :-2], o[:, :, 2:, 2:]),
        (y[:, :, 2:, 2:], y[:, :, :-2, :-2], o[:, :, 2:, 2:], o[:, :, :-2, :-2]),
        (y[:, :, 2:, :-2], y[:, :, :-2, 2:], o[:, :, 2:, :-2], o[:, :, :-2, 2:]),
        (y[:, :, :-2, 2:], y[:, :, 2:, :-2], o[:, :, :-2, 2:], o[:, :, 2:, :-2]),
    ]
    total = jnp.float32(0.0)
    for ya, yb, oa, ob in pairs:
        total = total + jnp.mean(wexp(ya, yb)) * jnp.mean(jnp.abs(oa - ob))
    return total


if __name__ == "__main__":
    key = jax.random.PRNGKey(0)
    k1, k2 = jax.random.split(key)
    H, W, CO = 16, 24, 3
    x = jax.random.uniform(k1, (1, 3, H, W), dtype=jnp.float32)      # RGB input
    net_out = jax.random.uniform(k2, (1, CO, H, W), dtype=jnp.float32)

    ref = jax.block_until_ready(smooth_loss_ref(x, net_out))

    run = jax.jit(smooth_loss_pallas, static_argnames=("strip_rows",))
    # Multi-strip path (exercises the cross-strip 2-row carry).
    loss_tiled = jax.block_until_ready(run(x, net_out, strip_rows=8))
    # Default strip selection (single strip at this size).
    loss_auto = jax.block_until_ready(run(x, net_out))

    np.testing.assert_allclose(np.asarray(loss_tiled), np.asarray(ref),
                               rtol=2e-3, atol=1e-5)
    np.testing.assert_allclose(np.asarray(loss_auto), np.asarray(ref),
                               rtol=2e-3, atol=1e-5)
    print("KERNEL_OK")
</pallas_src>

<mosaic_0001>
module attributes {stable_mosaic.version = 11 : i64} {
  func.func @_smooth_kernel(%arg0: i32, %arg1: memref<3x8x24xf32, #tpu.memory_space<vmem>>, %arg2: memref<3x8x24xf32, #tpu.memory_space<vmem>>, %arg3: memref<1xf32, #tpu.memory_space<smem>>, %arg4: memref<3x2x24xf32, #tpu.memory_space<vmem>>, %arg5: memref<3x2x24xf32, #tpu.memory_space<vmem>>, %arg6: memref<12xf32, #tpu.memory_space<smem>>, %arg7: memref<12xf32, #tpu.memory_space<smem>>) attributes {dimension_semantics = [#tpu.dimension_semantics<arbitrary>], iteration_bounds = array<i64: 2>, scalar_prefetch = 0 : i64, scratch_operands = 4 : i64, tpu.core_type = #tpu.core_type<tc>, window_params = [{transform_indices = @transform_0, window_bounds = array<i64: 3, 8, 24>}, {transform_indices = @transform_1, window_bounds = array<i64: 3, 8, 24>}, {transform_indices = @transform_2, window_bounds = array<i64: 1>}]} {
    %c0_i32 = arith.constant 0 : i32
    %0 = arith.cmpi eq, %arg0, %c0_i32 : i32
    %1 = arith.extui %0 : i1 to i32
    %c0_i32_0 = arith.constant 0 : i32
    %2 = arith.cmpi ne, %1, %c0_i32_0 : i32
    scf.if %2 {
      %cst_255 = arith.constant 0.000000e+00 : f32
      %c0_256 = arith.constant 0 : index
      %337 = memref.load %arg6[%c0_256] : memref<12xf32, #tpu.memory_space<smem>>
      memref.store %cst_255, %arg6[%c0_256] : memref<12xf32, #tpu.memory_space<smem>>
      %cst_257 = arith.constant 0.000000e+00 : f32
      %c0_258 = arith.constant 0 : index
      %338 = memref.load %arg7[%c0_258] : memref<12xf32, #tpu.memory_space<smem>>
      memref.store %cst_257, %arg7[%c0_258] : memref<12xf32, #tpu.memory_space<smem>>
      %cst_259 = arith.constant 0.000000e+00 : f32
      %c1_260 = arith.constant 1 : index
      %339 = memref.load %arg6[%c1_260] : memref<12xf32, #tpu.memory_space<smem>>
      memref.store %cst_259, %arg6[%c1_260] : memref<12xf32, #tpu.memory_space<smem>>
      %cst_261 = arith.constant 0.000000e+00 : f32
      %c1_262 = arith.constant 1 : index
      %340 = memref.load %arg7[%c1_262] : memref<12xf32, #tpu.memory_space<smem>>
      memref.store %cst_261, %arg7[%c1_262] : memref<12xf32, #tpu.memory_space<smem>>
      %cst_263 = arith.constant 0.000000e+00 : f32
      %c2_264 = arith.constant 2 : index
      %341 = memref.load %arg6[%c2_264] : memref<12xf32, #tpu.memory_space<smem>>
      memref.store %cst_263, %arg6[%c2_264] : memref<12xf32, #tpu.memory_space<smem>>
      %cst_265 = arith.constant 0.000000e+00 : f32
      %c2_266 = arith.constant 2 : index
      %342 = memref.load %arg7[%c2_266] : memref<12xf32, #tpu.memory_space<smem>>
      memref.store %cst_265, %arg7[%c2_266] : memref<12xf32, #tpu.memory_space<smem>>
      %cst_267 = arith.constant 0.000000e+00 : f32
      %c3_268 = arith.constant 3 : index
      %343 = memref.load %arg6[%c3_268] : memref<12xf32, #tpu.memory_space<smem>>
      memref.store %cst_267, %arg6[%c3_268] : memref<12xf32, #tpu.memory_space<smem>>
      %cst_269 = arith.constant 0.000000e+00 : f32
      %c3_270 = arith.constant 3 : index
      %344 = memref.load %arg7[%c3_270] : memref<12xf32, #tpu.memory_space<smem>>
      memref.store %cst_269, %arg7[%c3_270] : memref<12xf32, #tpu.memory_space<smem>>
      %cst_271 = arith.constant 0.000000e+00 : f32
      %c4_272 = arith.constant 4 : index
      %345 = memref.load %arg6[%c4_272] : memref<12xf32, #tpu.memory_space<smem>>
      memref.store %cst_271, %arg6[%c4_272] : memref<12xf32, #tpu.memory_space<smem>>
      %cst_273 = arith.constant 0.000000e+00 : f32
      %c4_274 = arith.constant 4 : index
      %346 = memref.load %arg7[%c4_274] : memref<12xf32, #tpu.memory_space<smem>>
      memref.store %cst_273, %arg7[%c4_274] : memref<12xf32, #tpu.memory_space<smem>>
      %cst_275 = arith.constant 0.000000e+00 : f32
      %c5_276 = arith.constant 5 : index
      %347 = memref.load %arg6[%c5_276] : memref<12xf32, #tpu.memory_space<smem>>
      memref.store %cst_275, %arg6[%c5_276] : memref<12xf32, #tpu.memory_space<smem>>
      %cst_277 = arith.constant 0.000000e+00 : f32
      %c5_278 = arith.constant 5 : index
      %348 = memref.load %arg7[%c5_278] : memref<12xf32, #tpu.memory_space<smem>>
      memref.store %cst_277, %arg7[%c5_278] : memref<12xf32, #tpu.memory_space<smem>>
      %cst_279 = arith.constant 0.000000e+00 : f32
      %c6_280 = arith.constant 6 : index
      %349 = memref.load %arg6[%c6_280] : memref<12xf32, #tpu.memory_space<smem>>
      memref.store %cst_279, %arg6[%c6_280] : memref<12xf32, #tpu.memory_space<smem>>
      %cst_281 = arith.constant 0.000000e+00 : f32
      %c6_282 = arith.constant 6 : index
      %350 = memref.load %arg7[%c6_282] : memref<12xf32, #tpu.memory_space<smem>>
      memref.store %cst_281, %arg7[%c6_282] : memref<12xf32, #tpu.memory_space<smem>>
      %cst_283 = arith.constant 0.000000e+00 : f32
      %c7_284 = arith.constant 7 : index
      %351 = memref.load %arg6[%c7_284] : memref<12xf32, #tpu.memory_space<smem>>
      memref.store %cst_283, %arg6[%c7_284] : memref<12xf32, #tpu.memory_space<smem>>
      %cst_285 = arith.constant 0.000000e+00 : f32
      %c7_286 = arith.constant 7 : index
      %352 = memref.load %arg7[%c7_286] : memref<12xf32, #tpu.memory_space<smem>>
      memref.store %cst_285, %arg7[%c7_286] : memref<12xf32, #tpu.memory_space<smem>>
      %cst_287 = arith.constant 0.000000e+00 : f32
      %c8_288 = arith.constant 8 : index
      %353 = memref.load %arg6[%c8_288] : memref<12xf32, #tpu.memory_space<smem>>
      memref.store %cst_287, %arg6[%c8_288] : memref<12xf32, #tpu.memory_space<smem>>
      %cst_289 = arith.constant 0.000000e+00 : f32
      %c8_290 = arith.constant 8 : index
      %354 = memref.load %arg7[%c8_290] : memref<12xf32, #tpu.memory_space<smem>>
      memref.store %cst_289, %arg7[%c8_290] : memref<12xf32, #tpu.memory_space<smem>>
      %cst_291 = arith.constant 0.000000e+00 : f32
      %c9_292 = arith.constant 9 : index
      %355 = memref.load %arg6[%c9_292] : memref<12xf32, #tpu.memory_space<smem>>
      memref.store %cst_291, %arg6[%c9_292] : memref<12xf32, #tpu.memory_space<smem>>
      %cst_293 = arith.constant 0.000000e+00 : f32
      %c9_294 = arith.constant 9 : index
      %356 = memref.load %arg7[%c9_294] : memref<12xf32, #tpu.memory_space<smem>>
      memref.store %cst_293, %arg7[%c9_294] : memref<12xf32, #tpu.memory_space<smem>>
      %cst_295 = arith.constant 0.000000e+00 : f32
      %c10_296 = arith.constant 10 : index
      %357 = memref.load %arg6[%c10_296] : memref<12xf32, #tpu.memory_space<smem>>
      memref.store %cst_295, %arg6[%c10_296] : memref<12xf32, #tpu.memory_space<smem>>
      %cst_297 = arith.constant 0.000000e+00 : f32
      %c10_298 = arith.constant 10 : index
      %358 = memref.load %arg7[%c10_298] : memref<12xf32, #tpu.memory_space<smem>>
      memref.store %cst_297, %arg7[%c10_298] : memref<12xf32, #tpu.memory_space<smem>>
      %cst_299 = arith.constant 0.000000e+00 : f32
      %c11_300 = arith.constant 11 : index
      %359 = memref.load %arg6[%c11_300] : memref<12xf32, #tpu.memory_space<smem>>
      memref.store %cst_299, %arg6[%c11_300] : memref<12xf32, #tpu.memory_space<smem>>
      %cst_301 = arith.constant 0.000000e+00 : f32
      %c11_302 = arith.constant 11 : index
      %360 = memref.load %arg7[%c11_302] : memref<12xf32, #tpu.memory_space<smem>>
      memref.store %cst_301, %arg7[%c11_302] : memref<12xf32, #tpu.memory_space<smem>>
    } else {
    }
    %c0 = arith.constant 0 : index
    %c1 = arith.constant 1 : index
    %c0_1 = arith.constant 0 : index
    %3 = vector.load %arg1[%c0, %c1, %c0_1] : memref<3x8x24xf32, #tpu.memory_space<vmem>>, vector<3x7x24xf32>
    %c0_2 = arith.constant 0 : index
    %c0_3 = arith.constant 0 : index
    %c0_4 = arith.constant 0 : index
    %4 = vector.load %arg1[%c0_2, %c0_3, %c0_4] : memref<3x8x24xf32, #tpu.memory_space<vmem>>, vector<3x7x24xf32>
    %c0_5 = arith.constant 0 : index
    %c1_6 = arith.constant 1 : index
    %c0_7 = arith.constant 0 : index
    %5 = vector.load %arg2[%c0_5, %c1_6, %c0_7] : memref<3x8x24xf32, #tpu.memory_space<vmem>>, vector<3x7x24xf32>
    %c0_8 = arith.constant 0 : index
    %c0_9 = arith.constant 0 : index
    %c0_10 = arith.constant 0 : index
    %6 = vector.load %arg2[%c0_8, %c0_9, %c0_10] : memref<3x8x24xf32, #tpu.memory_space<vmem>>, vector<3x7x24xf32>
    %7 = arith.subf %3, %4 : vector<3x7x24xf32>
    %8 = arith.mulf %7, %7 : vector<3x7x24xf32>
    %cst = arith.constant dense<0.000000e+00> : vector<7x24xf32>
    %9 = vector.multi_reduction <add>, %8, %cst [0] : vector<3x7x24xf32> to vector<7x24xf32>
    %cst_11 = arith.constant -5.000000e-03 : f32
    %10 = vector.broadcast %cst_11 : f32 to vector<7x24xf32>
    %11 = arith.mulf %9, %10 : vector<7x24xf32>
    %12 = math.exp %11 : vector<7x24xf32>
    %13 = vector.shape_cast %12 : vector<7x24xf32> to vector<1x7x24xf32>
    %cst_12 = arith.constant dense<0.000000e+00> : vector<1xf32>
    %14 = vector.multi_reduction <add>, %13, %cst_12 [1, 2] : vector<1x7x24xf32> to vector<1xf32>
    %15 = vector.shape_cast %14 : vector<1xf32> to vector<1x1x1xf32>
    %16 = vector.extract %15[0, 0, 0] : f32 from vector<1x1x1xf32>
    %17 = arith.subf %5, %6 : vector<3x7x24xf32>
    %18 = math.absf %17 : vector<3x7x24xf32>
    %cst_13 = arith.constant dense<0.000000e+00> : vector<7x24xf32>
    %19 = vector.multi_reduction <add>, %18, %cst_13 [0] : vector<3x7x24xf32> to vector<7x24xf32>
    %20 = vector.shape_cast %19 : vector<7x24xf32> to vector<1x7x24xf32>
    %cst_14 = arith.constant dense<0.000000e+00> : vector<1xf32>
    %21 = vector.multi_reduction <add>, %20, %cst_14 [1, 2] : vector<1x7x24xf32> to vector<1xf32>
    %22 = vector.shape_cast %21 : vector<1xf32> to vector<1x1x1xf32>
    %23 = vector.extract %22[0, 0, 0] : f32 from vector<1x1x1xf32>
    %c0_15 = arith.constant 0 : index
    %24 = memref.load %arg6[%c0_15] : memref<12xf32, #tpu.memory_space<smem>>
    %25 = arith.addf %24, %16 : f32
    %c0_16 = arith.constant 0 : index
    %26 = memref.load %arg6[%c0_16] : memref<12xf32, #tpu.memory_space<smem>>
    memref.store %25, %arg6[%c0_16] : memref<12xf32, #tpu.memory_space<smem>>
    %c0_17 = arith.constant 0 : index
    %27 = memref.load %arg7[%c0_17] : memref<12xf32, #tpu.memory_space<smem>>
    %28 = arith.addf %27, %23 : f32
    %c0_18 = arith.constant 0 : index
    %29 = memref.load %arg7[%c0_18] : memref<12xf32, #tpu.memory_space<smem>>
    memref.store %28, %arg7[%c0_18] : memref<12xf32, #tpu.memory_space<smem>>
    %c0_19 = arith.constant 0 : index
    %c0_20 = arith.constant 0 : index
    %c1_21 = arith.constant 1 : index
    %30 = vector.load %arg1[%c0_19, %c0_20, %c1_21] : memref<3x8x24xf32, #tpu.memory_space<vmem>>, vector<3x8x23xf32>
    %c0_22 = arith.constant 0 : index
    %c0_23 = arith.constant 0 : index
    %c0_24 = arith.constant 0 : index
    %31 = vector.load %arg1[%c0_22, %c0_23, %c0_24] : memref<3x8x24xf32, #tpu.memory_space<vmem>>, vector<3x8x23xf32>
    %c0_25 = arith.constant 0 : index
    %c0_26 = arith.constant 0 : index
    %c1_27 = arith.constant 1 : index
    %32 = vector.load %arg2[%c0_25, %c0_26, %c1_27] : memref<3x8x24xf32, #tpu.memory_space<vmem>>, vector<3x8x23xf32>
    %c0_28 = arith.constant 0 : index
    %c0_29 = arith.constant 0 : index
    %c0_30 = arith.constant 0 : index
    %33 = vector.load %arg2[%c0_28, %c0_29, %c0_30] : memref<3x8x24xf32, #tpu.memory_space<vmem>>, vector<3x8x23xf32>
    %34 = arith.subf %30, %31 : vector<3x8x23xf32>
    %35 = arith.mulf %34, %34 : vector<3x8x23xf32>
    %cst_31 = arith.constant dense<0.000000e+00> : vector<8x23xf32>
    %36 = vector.multi_reduction <add>, %35, %cst_31 [0] : vector<3x8x23xf32> to vector<8x23xf32>
    %cst_32 = arith.constant -5.000000e-03 : f32
    %37 = vector.broadcast %cst_32 : f32 to vector<8x23xf32>
    %38 = arith.mulf %36, %37 : vector<8x23xf32>
    %39 = math.exp %38 : vector<8x23xf32>
    %40 = vector.shape_cast %39 : vector<8x23xf32> to vector<1x8x23xf32>
    %cst_33 = arith.constant dense<0.000000e+00> : vector<1xf32>
    %41 = vector.multi_reduction <add>, %40, %cst_33 [1, 2] : vector<1x8x23xf32> to vector<1xf32>
    %42 = vector.shape_cast %41 : vector<1xf32> to vector<1x1x1xf32>
    %43 = vector.extract %42[0, 0, 0] : f32 from vector<1x1x1xf32>
    %44 = arith.subf %32, %33 : vector<3x8x23xf32>
    %45 = math.absf %44 : vector<3x8x23xf32>
    %cst_34 = arith.constant dense<0.000000e+00> : vector<8x23xf32>
    %46 = vector.multi_reduction <add>, %45, %cst_34 [0] : vector<3x8x23xf32> to vector<8x23xf32>
    %47 = vector.shape_cast %46 : vector<8x23xf32> to vector<1x8x23xf32>
    %cst_35 = arith.constant dense<0.000000e+00> : vector<1xf32>
    %48 = vector.multi_reduction <add>, %47, %cst_35 [1, 2] : vector<1x8x23xf32> to vector<1xf32>
    %49 = vector.shape_cast %48 : vector<1xf32> to vector<1x1x1xf32>
    %50 = vector.extract %49[0, 0, 0] : f32 from vector<1x1x1xf32>
    %c1_36 = arith.constant 1 : index
    %51 = memref.load %arg6[%c1_36] : memref<12xf32, #tpu.memory_space<smem>>
    %52 = arith.addf %51, %43 : f32
    %c1_37 = arith.constant 1 : index
    %53 = memref.load %arg6[%c1_37] : memref<12xf32, #tpu.memory_space<smem>>
    memref.store %52, %arg6[%c1_37] : memref<12xf32, #tpu.memory_space<smem>>
    %c1_38 = arith.constant 1 : index
    %54 = memref.load %arg7[%c1_38] : memref<12xf32, #tpu.memory_space<smem>>
    %55 = arith.addf %54, %50 : f32
    %c1_39 = arith.constant 1 : index
    %56 = memref.load %arg7[%c1_39] : memref<12xf32, #tpu.memory_space<smem>>
    memref.store %55, %arg7[%c1_39] : memref<12xf32, #tpu.memory_space<smem>>
    %c0_40 = arith.constant 0 : index
    %c1_41 = arith.constant 1 : index
    %c1_42 = arith.constant 1 : index
    %57 = vector.load %arg1[%c0_40, %c1_41, %c1_42] : memref<3x8x24xf32, #tpu.memory_space<vmem>>, vector<3x7x23xf32>
    %c0_43 = arith.constant 0 : index
    %c0_44 = arith.constant 0 : index
    %c0_45 = arith.constant 0 : index
    %58 = vector.load %arg1[%c0_43, %c0_44, %c0_45] : memref<3x8x24xf32, #tpu.memory_space<vmem>>, vector<3x7x23xf32>
    %c0_46 = arith.constant 0 : index
    %c1_47 = arith.constant 1 : index
    %c1_48 = arith.constant 1 : index
    %59 = vector.load %arg2[%c0_46, %c1_47, %c1_48] : memref<3x8x24xf32, #tpu.memory_space<vmem>>, vector<3x7x23xf32>
    %c0_49 = arith.constant 0 : index
    %c0_50 = arith.constant 0 : index
    %c0_51 = arith.constant 0 : index
    %60 = vector.load %arg2[%c0_49, %c0_50, %c0_51] : memref<3x8x24xf32, #tpu.memory_space<vmem>>, vector<3x7x23xf32>
    %61 = arith.subf %57, %58 : vector<3x7x23xf32>
    %62 = arith.mulf %61, %61 : vector<3x7x23xf32>
    %cst_52 = arith.constant dense<0.000000e+00> : vector<7x23xf32>
    %63 = vector.multi_reduction <add>, %62, %cst_52 [0] : vector<3x7x23xf32> to vector<7x23xf32>
    %cst_53 = arith.constant -5.000000e-03 : f32
    %64 = vector.broadcast %cst_53 : f32 to vector<7x23xf32>
    %65 = arith.mulf %63, %64 : vector<7x23xf32>
    %66 = math.exp %65 : vector<7x23xf32>
    %67 = vector.shape_cast %66 : vector<7x23xf32> to vector<1x7x23xf32>
    %cst_54 = arith.constant dense<0.000000e+00> : vector<1xf32>
    %68 = vector.multi_reduction <add>, %67, %cst_54 [1, 2] : vector<1x7x23xf32> to vector<1xf32>
    %69 = vector.shape_cast %68 : vector<1xf32> to vector<1x1x1xf32>
    %70 = vector.extract %69[0, 0, 0] : f32 from vector<1x1x1xf32>
    %71 = arith.subf %59, %60 : vector<3x7x23xf32>
    %72 = math.absf %71 : vector<3x7x23xf32>
    %cst_55 = arith.constant dense<0.000000e+00> : vector<7x23xf32>
    %73 = vector.multi_reduction <add>, %72, %cst_55 [0] : vector<3x7x23xf32> to vector<7x23xf32>
    %74 = vector.shape_cast %73 : vector<7x23xf32> to vector<1x7x23xf32>
    %cst_56 = arith.constant dense<0.000000e+00> : vector<1xf32>
    %75 = vector.multi_reduction <add>, %74, %cst_56 [1, 2] : vector<1x7x23xf32> to vector<1xf32>
    %76 = vector.shape_cast %75 : vector<1xf32> to vector<1x1x1xf32>
    %77 = vector.extract %76[0, 0, 0] : f32 from vector<1x1x1xf32>
    %c2 = arith.constant 2 : index
    %78 = memref.load %arg6[%c2] : memref<12xf32, #tpu.memory_space<smem>>
    %79 = arith.addf %78, %70 : f32
    %c2_57 = arith.constant 2 : index
    %80 = memref.load %arg6[%c2_57] : memref<12xf32, #tpu.memory_space<smem>>
    memref.store %79, %arg6[%c2_57] : memref<12xf32, #tpu.memory_space<smem>>
    %c2_58 = arith.constant 2 : index
    %81 = memref.load %arg7[%c2_58] : memref<12xf32, #tpu.memory_space<smem>>
    %82 = arith.addf %81, %77 : f32
    %c2_59 = arith.constant 2 : index
    %83 = memref.load %arg7[%c2_59] : memref<12xf32, #tpu.memory_space<smem>>
    memref.store %82, %arg7[%c2_59] : memref<12xf32, #tpu.memory_space<smem>>
    %c0_60 = arith.constant 0 : index
    %c1_61 = arith.constant 1 : index
    %c0_62 = arith.constant 0 : index
    %84 = vector.load %arg1[%c0_60, %c1_61, %c0_62] : memref<3x8x24xf32, #tpu.memory_space<vmem>>, vector<3x7x23xf32>
    %c0_63 = arith.constant 0 : index
    %c0_64 = arith.constant 0 : index
    %c1_65 = arith.constant 1 : index
    %85 = vector.load %arg1[%c0_63, %c0_64, %c1_65] : memref<3x8x24xf32, #tpu.memory_space<vmem>>, vector<3x7x23xf32>
    %c0_66 = arith.constant 0 : index
    %c1_67 = arith.constant 1 : index
    %c0_68 = arith.constant 0 : index
    %86 = vector.load %arg2[%c0_66, %c1_67, %c0_68] : memref<3x8x24xf32, #tpu.memory_space<vmem>>, vector<3x7x23xf32>
    %c0_69 = arith.constant 0 : index
    %c0_70 = arith.constant 0 : index
    %c1_71 = arith.constant 1 : index
    %87 = vector.load %arg2[%c0_69, %c0_70, %c1_71] : memref<3x8x24xf32, #tpu.memory_space<vmem>>, vector<3x7x23xf32>
    %88 = arith.subf %84, %85 : vector<3x7x23xf32>
    %89 = arith.mulf %88, %88 : vector<3x7x23xf32>
    %cst_72 = arith.constant dense<0.000000e+00> : vector<7x23xf32>
    %90 = vector.multi_reduction <add>, %89, %cst_72 [0] : vector<3x7x23xf32> to vector<7x23xf32>
    %cst_73 = arith.constant -5.000000e-03 : f32
    %91 = vector.broadcast %cst_73 : f32 to vector<7x23xf32>
    %92 = arith.mulf %90, %91 : vector<7x23xf32>
    %93 = math.exp %92 : vector<7x23xf32>
    %94 = vector.shape_cast %93 : vector<7x23xf32> to vector<1x7x23xf32>
    %cst_74 = arith.constant dense<0.000000e+00> : vector<1xf32>
    %95 = vector.multi_reduction <add>, %94, %cst_74 [1, 2] : vector<1x7x23xf32> to vector<1xf32>
    %96 = vector.shape_cast %95 : vector<1xf32> to vector<1x1x1xf32>
    %97 = vector.extract %96[0, 0, 0] : f32 from vector<1x1x1xf32>
    %98 = arith.subf %86, %87 : vector<3x7x23xf32>
    %99 = math.absf %98 : vector<3x7x23xf32>
    %cst_75 = arith.constant dense<0.000000e+00> : vector<7x23xf32>
    %100 = vector.multi_reduction <add>, %99, %cst_75 [0] : vector<3x7x23xf32> to vector<7x23xf32>
    %101 = vector.shape_cast %100 : vector<7x23xf32> to vector<1x7x23xf32>
    %cst_76 = arith.constant dense<0.000000e+00> : vector<1xf32>
    %102 = vector.multi_reduction <add>, %101, %cst_76 [1, 2] : vector<1x7x23xf32> to vector<1xf32>
    %103 = vector.shape_cast %102 : vector<1xf32> to vector<1x1x1xf32>
    %104 = vector.extract %103[0, 0, 0] : f32 from vector<1x1x1xf32>
    %c3 = arith.constant 3 : index
    %105 = memref.load %arg6[%c3] : memref<12xf32, #tpu.memory_space<smem>>
    %106 = arith.addf %105, %97 : f32
    %c3_77 = arith.constant 3 : index
    %107 = memref.load %arg6[%c3_77] : memref<12xf32, #tpu.memory_space<smem>>
    memref.store %106, %arg6[%c3_77] : memref<12xf32, #tpu.memory_space<smem>>
    %c3_78 = arith.constant 3 : index
    %108 = memref.load %arg7[%c3_78] : memref<12xf32, #tpu.memory_space<smem>>
    %109 = arith.addf %108, %104 : f32
    %c3_79 = arith.constant 3 : index
    %110 = memref.load %arg7[%c3_79] : memref<12xf32, #tpu.memory_space<smem>>
    memref.store %109, %arg7[%c3_79] : memref<12xf32, #tpu.memory_space<smem>>
    %c0_80 = arith.constant 0 : index
    %c2_81 = arith.constant 2 : index
    %c0_82 = arith.constant 0 : index
    %111 = vector.load %arg1[%c0_80, %c2_81, %c0_82] : memref<3x8x24xf32, #tpu.memory_space<vmem>>, vector<3x6x24xf32>
    %c0_83 = arith.constant 0 : index
    %c0_84 = arith.constant 0 : index
    %c0_85 = arith.constant 0 : index
    %112 = vector.load %arg1[%c0_83, %c0_84, %c0_85] : memref<3x8x24xf32, #tpu.memory_space<vmem>>, vector<3x6x24xf32>
    %c0_86 = arith.constant 0 : index
    %c2_87 = arith.constant 2 : index
    %c0_88 = arith.constant 0 : index
    %113 = vector.load %arg2[%c0_86, %c2_87, %c0_88] : memref<3x8x24xf32, #tpu.memory_space<vmem>>, vector<3x6x24xf32>
    %c0_89 = arith.constant 0 : index
    %c0_90 = arith.constant 0 : index
    %c0_91 = arith.constant 0 : index
    %114 = vector.load %arg2[%c0_89, %c0_90, %c0_91] : memref<3x8x24xf32, #tpu.memory_space<vmem>>, vector<3x6x24xf32>
    %115 = arith.subf %111, %112 : vector<3x6x24xf32>
    %116 = arith.mulf %115, %115 : vector<3x6x24xf32>
    %cst_92 = arith.constant dense<0.000000e+00> : vector<6x24xf32>
    %117 = vector.multi_reduction <add>, %116, %cst_92 [0] : vector<3x6x24xf32> to vector<6x24xf32>
    %cst_93 = arith.constant -5.000000e-03 : f32
    %118 = vector.broadcast %cst_93 : f32 to vector<6x24xf32>
    %119 = arith.mulf %117, %118 : vector<6x24xf32>
    %120 = math.exp %119 : vector<6x24xf32>
    %121 = vector.shape_cast %120 : vector<6x24xf32> to vector<1x6x24xf32>
    %cst_94 = arith.constant dense<0.000000e+00> : vector<1xf32>
    %122 = vector.multi_reduction <add>, %121, %cst_94 [1, 2] : vector<1x6x24xf32> to vector<1xf32>
    %123 = vector.shape_cast %122 : vector<1xf32> to vector<1x1x1xf32>
    %124 = vector.extract %123[0, 0, 0] : f32 from vector<1x1x1xf32>
    %125 = arith.subf %113, %114 : vector<3x6x24xf32>
    %126 = math.absf %125 : vector<3x6x24xf32>
    %cst_95 = arith.constant dense<0.000000e+00> : vector<6x24xf32>
    %127 = vector.multi_reduction <add>, %126, %cst_95 [0] : vector<3x6x24xf32> to vector<6x24xf32>
    %128 = vector.shape_cast %127 : vector<6x24xf32> to vector<1x6x24xf32>
    %cst_96 = arith.constant dense<0.000000e+00> : vector<1xf32>
    %129 = vector.multi_reduction <add>, %128, %cst_96 [1, 2] : vector<1x6x24xf32> to vector<1xf32>
    %130 = vector.shape_cast %129 : vector<1xf32> to vector<1x1x1xf32>
    %131 = vector.extract %130[0, 0, 0] : f32 from vector<1x1x1xf32>
    %c4 = arith.constant 4 : index
    %132 = memref.load %arg6[%c4] : memref<12xf32, #tpu.memory_space<smem>>
    %133 = arith.addf %132, %124 : f32
    %c4_97 = arith.constant 4 : index
    %134 = memref.load %arg6[%c4_97] : memref<12xf32, #tpu.memory_space<smem>>
    memref.store %133, %arg6[%c4_97] : memref<12xf32, #tpu.memory_space<smem>>
    %c4_98 = arith.constant 4 : index
    %135 = memref.load %arg7[%c4_98] : memref<12xf32, #tpu.memory_space<smem>>
    %136 = arith.addf %135, %131 : f32
    %c4_99 = arith.constant 4 : index
    %137 = memref.load %arg7[%c4_99] : memref<12xf32, #tpu.memory_space<smem>>
    memref.store %136, %arg7[%c4_99] : memref<12xf32, #tpu.memory_space<smem>>
    %c0_100 = arith.constant 0 : index
    %c0_101 = arith.constant 0 : index
    %c2_102 = arith.constant 2 : index
    %138 = vector.load %arg1[%c0_100, %c0_101, %c2_102] : memref<3x8x24xf32, #tpu.memory_space<vmem>>, vector<3x8x22xf32>
    %c0_103 = arith.constant 0 : index
    %c0_104 = arith.constant 0 : index
    %c0_105 = arith.constant 0 : index
    %139 = vector.load %arg1[%c0_103, %c0_104, %c0_105] : memref<3x8x24xf32, #tpu.memory_space<vmem>>, vector<3x8x22xf32>
    %c0_106 = arith.constant 0 : index
    %c0_107 = arith.constant 0 : index
    %c2_108 = arith.constant 2 : index
    %140 = vector.load %arg2[%c0_106, %c0_107, %c2_108] : memref<3x8x24xf32, #tpu.memory_space<vmem>>, vector<3x8x22xf32>
    %c0_109 = arith.constant 0 : index
    %c0_110 = arith.constant 0 : index
    %c0_111 = arith.constant 0 : index
    %141 = vector.load %arg2[%c0_109, %c0_110, %c0_111] : memref<3x8x24xf32, #tpu.memory_space<vmem>>, vector<3x8x22xf32>
    %142 = arith.subf %138, %139 : vector<3x8x22xf32>
    %143 = arith.mulf %142, %142 : vector<3x8x22xf32>
    %cst_112 = arith.constant dense<0.000000e+00> : vector<8x22xf32>
    %144 = vector.multi_reduction <add>, %143, %cst_112 [0] : vector<3x8x22xf32> to vector<8x22xf32>
    %cst_113 = arith.constant -5.000000e-03 : f32
    %145 = vector.broadcast %cst_113 : f32 to vector<8x22xf32>
    %146 = arith.mulf %144, %145 : vector<8x22xf32>
    %147 = math.exp %146 : vector<8x22xf32>
    %148 = vector.shape_cast %147 : vector<8x22xf32> to vector<1x8x22xf32>
    %cst_114 = arith.constant dense<0.000000e+00> : vector<1xf32>
    %149 = vector.multi_reduction <add>, %148, %cst_114 [1, 2] : vector<1x8x22xf32> to vector<1xf32>
    %150 = vector.shape_cast %149 : vector<1xf32> to vector<1x1x1xf32>
    %151 = vector.extract %150[0, 0, 0] : f32 from vector<1x1x1xf32>
    %152 = arith.subf %140, %141 : vector<3x8x22xf32>
    %153 = math.absf %152 : vector<3x8x22xf32>
    %cst_115 = arith.constant dense<0.000000e+00> : vector<8x22xf32>
    %154 = vector.multi_reduction <add>, %153, %cst_115 [0] : vector<3x8x22xf32> to vector<8x22xf32>
    %155 = vector.shape_cast %154 : vector<8x22xf32> to vector<1x8x22xf32>
    %cst_116 = arith.constant dense<0.000000e+00> : vector<1xf32>
    %156 = vector.multi_reduction <add>, %155, %cst_116 [1, 2] : vector<1x8x22xf32> to vector<1xf32>
    %157 = vector.shape_cast %156 : vector<1xf32> to vector<1x1x1xf32>
    %158 = vector.extract %157[0, 0, 0] : f32 from vector<1x1x1xf32>
    %c5 = arith.constant 5 : index
    %159 = memref.load %arg6[%c5] : memref<12xf32, #tpu.memory_space<smem>>
    %160 = arith.addf %159, %151 : f32
    %c5_117 = arith.constant 5 : index
    %161 = memref.load %arg6[%c5_117] : memref<12xf32, #tpu.memory_space<smem>>
    memref.store %160, %arg6[%c5_117] : memref<12xf32, #tpu.memory_space<smem>>
    %c5_118 = arith.constant 5 : index
    %162 = memref.load %arg7[%c5_118] : memref<12xf32, #tpu.memory_space<smem>>
    %163 = arith.addf %162, %158 : f32
    %c5_119 = arith.constant 5 : index
    %164 = memref.load %arg7[%c5_119] : memref<12xf32, #tpu.memory_space<smem>>
    memref.store %163, %arg7[%c5_119] : memref<12xf32, #tpu.memory_space<smem>>
    %c0_120 = arith.constant 0 : index
    %c2_121 = arith.constant 2 : index
    %c1_122 = arith.constant 1 : index
    %165 = vector.load %arg1[%c0_120, %c2_121, %c1_122] : memref<3x8x24xf32, #tpu.memory_space<vmem>>, vector<3x6x23xf32>
    %c0_123 = arith.constant 0 : index
    %c0_124 = arith.constant 0 : index
    %c0_125 = arith.constant 0 : index
    %166 = vector.load %arg1[%c0_123, %c0_124, %c0_125] : memref<3x8x24xf32, #tpu.memory_space<vmem>>, vector<3x6x23xf32>
    %c0_126 = arith.constant 0 : index
    %c2_127 = arith.constant 2 : index
    %c1_128 = arith.constant 1 : index
    %167 = vector.load %arg2[%c0_126, %c2_127, %c1_128] : memref<3x8x24xf32, #tpu.memory_space<vmem>>, vector<3x6x23xf32>
    %c0_129 = arith.constant 0 : index
    %c0_130 = arith.constant 0 : index
    %c0_131 = arith.constant 0 : index
    %168 = vector.load %arg2[%c0_129, %c0_130, %c0_131] : memref<3x8x24xf32, #tpu.memory_space<vmem>>, vector<3x6x23xf32>
    %169 = arith.subf %165, %166 : vector<3x6x23xf32>
    %170 = arith.mulf %169, %169 : vector<3x6x23xf32>
    %cst_132 = arith.constant dense<0.000000e+00> : vector<6x23xf32>
    %171 = vector.multi_reduction <add>, %170, %cst_132 [0] : vector<3x6x23xf32> to vector<6x23xf32>
    %cst_133 = arith.constant -5.000000e-03 : f32
    %172 = vector.broadcast %cst_133 : f32 to vector<6x23xf32>
    %173 = arith.mulf %171, %172 : vector<6x23xf32>
    %174 = math.exp %173 : vector<6x23xf32>
    %175 = vector.shape_cast %174 : vector<6x23xf32> to vector<1x6x23xf32>
    %cst_134 = arith.constant dense<0.000000e+00> : vector<1xf32>
    %176 = vector.multi_reduction <add>, %175, %cst_134 [1, 2] : vector<1x6x23xf32> to vector<1xf32>
    %177 = vector.shape_cast %176 : vector<1xf32> to vector<1x1x1xf32>
    %178 = vector.extract %177[0, 0, 0] : f32 from vector<1x1x1xf32>
    %179 = arith.subf %167, %168 : vector<3x6x23xf32>
    %180 = math.absf %179 : vector<3x6x23xf32>
    %cst_135 = arith.constant dense<0.000000e+00> : vector<6x23xf32>
    %181 = vector.multi_reduction <add>, %180, %cst_135 [0] : vector<3x6x23xf32> to vector<6x23xf32>
    %182 = vector.shape_cast %181 : vector<6x23xf32> to vector<1x6x23xf32>
    %cst_136 = arith.constant dense<0.000000e+00> : vector<1xf32>
    %183 = vector.multi_reduction <add>, %182, %cst_136 [1, 2] : vector<1x6x23xf32> to vector<1xf32>
    %184 = vector.shape_cast %183 : vector<1xf32> to vector<1x1x1xf32>
    %185 = vector.extract %184[0, 0, 0] : f32 from vector<1x1x1xf32>
    %c6 = arith.constant 6 : index
    %186 = memref.load %arg6[%c6] : memref<12xf32, #tpu.memory_space<smem>>
    %187 = arith.addf %186, %178 : f32
    %c6_137 = arith.constant 6 : index
    %188 = memref.load %arg6[%c6_137] : memref<12xf32, #tpu.memory_space<smem>>
    memref.store %187, %arg6[%c6_137] : memref<12xf32, #tpu.memory_space<smem>>
    %c6_138 = arith.constant 6 : index
    %189 = memref.load %arg7[%c6_138] : memref<12xf32, #tpu.memory_space<smem>>
    %190 = arith.addf %189, %185 : f32
    %c6_139 = arith.constant 6 : index
    %191 = memref.load %arg7[%c6_139] : memref<12xf32, #tpu.memory_space<smem>>
    memref.store %190, %arg7[%c6_139] : memref<12xf32, #tpu.memory_space<smem>>
    %c0_140 = arith.constant 0 : index
    %c2_141 = arith.constant 2 : index
    %c0_142 = arith.constant 0 : index
    %192 = vector.load %arg1[%c0_140, %c2_141, %c0_142] : memref<3x8x24xf32, #tpu.memory_space<vmem>>, vector<3x6x23xf32>
    %c0_143 = arith.constant 0 : index
    %c0_144 = arith.constant 0 : index
    %c1_145 = arith.constant 1 : index
    %193 = vector.load %arg1[%c0_143, %c0_144, %c1_145] : memref<3x8x24xf32, #tpu.memory_space<vmem>>, vector<3x6x23xf32>
    %c0_146 = arith.constant 0 : index
    %c2_147 = arith.constant 2 : index
    %c0_148 = arith.constant 0 : index
    %194 = vector.load %arg2[%c0_146, %c2_147, %c0_148] : memref<3x8x24xf32, #tpu.memory_space<vmem>>, vector<3x6x23xf32>
    %c0_149 = arith.constant 0 : index
    %c0_150 = arith.constant 0 : index
    %c1_151 = arith.constant 1 : index
    %195 = vector.load %arg2[%c0_149, %c0_150, %c1_151] : memref<3x8x24xf32, #tpu.memory_space<vmem>>, vector<3x6x23xf32>
    %196 = arith.subf %192, %193 : vector<3x6x23xf32>
    %197 = arith.mulf %196, %196 : vector<3x6x23xf32>
    %cst_152 = arith.constant dense<0.000000e+00> : vector<6x23xf32>
    %198 = vector.multi_reduction <add>, %197, %cst_152 [0] : vector<3x6x23xf32> to vector<6x23xf32>
    %cst_153 = arith.constant -5.000000e-03 : f32
    %199 = vector.broadcast %cst_153 : f32 to vector<6x23xf32>
    %200 = arith.mulf %198, %199 : vector<6x23xf32>
    %201 = math.exp %200 : vector<6x23xf32>
    %202 = vector.shape_cast %201 : vector<6x23xf32> to vector<1x6x23xf32>
    %cst_154 = arith.constant dense<0.000000e+00> : vector<1xf32>
    %203 = vector.multi_reduction <add>, %202, %cst_154 [1, 2] : vector<1x6x23xf32> to vector<1xf32>
    %204 = vector.shape_cast %203 : vector<1xf32> to vector<1x1x1xf32>
    %205 = vector.extract %204[0, 0, 0] : f32 from vector<1x1x1xf32>
    %206 = arith.subf %194, %195 : vector<3x6x23xf32>
    %207 = math.absf %206 : vector<3x6x23xf32>
    %cst_155 = arith.constant dense<0.000000e+00> : vector<6x23xf32>
    %208 = vector.multi_reduction <add>, %207, %cst_155 [0] : vector<3x6x23xf32> to vector<6x23xf32>
    %209 = vector.shape_cast %208 : vector<6x23xf32> to vector<1x6x23xf32>
    %cst_156 = arith.constant dense<0.000000e+00> : vector<1xf32>
    %210 = vector.multi_reduction <add>, %209, %cst_156 [1, 2] : vector<1x6x23xf32> to vector<1xf32>
    %211 = vector.shape_cast %210 : vector<1xf32> to vector<1x1x1xf32>
    %212 = vector.extract %211[0, 0, 0] : f32 from vector<1x1x1xf32>
    %c7 = arith.constant 7 : index
    %213 = memref.load %arg6[%c7] : memref<12xf32, #tpu.memory_space<smem>>
    %214 = arith.addf %213, %205 : f32
    %c7_157 = arith.constant 7 : index
    %215 = memref.load %arg6[%c7_157] : memref<12xf32, #tpu.memory_space<smem>>
    memref.store %214, %arg6[%c7_157] : memref<12xf32, #tpu.memory_space<smem>>
    %c7_158 = arith.constant 7 : index
    %216 = memref.load %arg7[%c7_158] : memref<12xf32, #tpu.memory_space<smem>>
    %217 = arith.addf %216, %212 : f32
    %c7_159 = arith.constant 7 : index
    %218 = memref.load %arg7[%c7_159] : memref<12xf32, #tpu.memory_space<smem>>
    memref.store %217, %arg7[%c7_159] : memref<12xf32, #tpu.memory_space<smem>>
    %c0_160 = arith.constant 0 : index
    %c1_161 = arith.constant 1 : index
    %c2_162 = arith.constant 2 : index
    %219 = vector.load %arg1[%c0_160, %c1_161, %c2_162] : memref<3x8x24xf32, #tpu.memory_space<vmem>>, vector<3x7x22xf32>
    %c0_163 = arith.constant 0 : index
    %c0_164 = arith.constant 0 : index
    %c0_165 = arith.constant 0 : index
    %220 = vector.load %arg1[%c0_163, %c0_164, %c0_165] : memref<3x8x24xf32, #tpu.memory_space<vmem>>, vector<3x7x22xf32>
    %c0_166 = arith.constant 0 : index
    %c1_167 = arith.constant 1 : index
    %c2_168 = arith.constant 2 : index
    %221 = vector.load %arg2[%c0_166, %c1_167, %c2_168] : memref<3x8x24xf32, #tpu.memory_space<vmem>>, vector<3x7x22xf32>
    %c0_169 = arith.constant 0 : index
    %c0_170 = arith.constant 0 : index
    %c0_171 = arith.constant 0 : index
    %222 = vector.load %arg2[%c0_169, %c0_170, %c0_171] : memref<3x8x24xf32, #tpu.memory_space<vmem>>, vector<3x7x22xf32>
    %223 = arith.subf %219, %220 : vector<3x7x22xf32>
    %224 = arith.mulf %223, %223 : vector<3x7x22xf32>
    %cst_172 = arith.constant dense<0.000000e+00> : vector<7x22xf32>
    %225 = vector.multi_reduction <add>, %224, %cst_172 [0] : vector<3x7x22xf32> to vector<7x22xf32>
    %cst_173 = arith.constant -5.000000e-03 : f32
    %226 = vector.broadcast %cst_173 : f32 to vector<7x22xf32>
    %227 = arith.mulf %225, %226 : vector<7x22xf32>
    %228 = math.exp %227 : vector<7x22xf32>
    %229 = vector.shape_cast %228 : vector<7x22xf32> to vector<1x7x22xf32>
    %cst_174 = arith.constant dense<0.000000e+00> : vector<1xf32>
    %230 = vector.multi_reduction <add>, %229, %cst_174 [1, 2] : vector<1x7x22xf32> to vector<1xf32>
    %231 = vector.shape_cast %230 : vector<1xf32> to vector<1x1x1xf32>
    %232 = vector.extract %231[0, 0, 0] : f32 from vector<1x1x1xf32>
    %233 = arith.subf %221, %222 : vector<3x7x22xf32>
    %234 = math.absf %233 : vector<3x7x22xf32>
    %cst_175 = arith.constant dense<0.000000e+00> : vector<7x22xf32>
    %235 = vector.multi_reduction <add>, %234, %cst_175 [0] : vector<3x7x22xf32> to vector<7x22xf32>
    %236 = vector.shape_cast %235 : vector<7x22xf32> to vector<1x7x22xf32>
    %cst_176 = arith.constant dense<0.000000e+00> : vector<1xf32>
    %237 = vector.multi_reduction <add>, %236, %cst_176 [1, 2] : vector<1x7x22xf32> to vector<1xf32>
    %238 = vector.shape_cast %237 : vector<1xf32> to vector<1x1x1xf32>
    %239 = vector.extract %238[0, 0, 0] : f32 from vector<1x1x1xf32>
    %c8 = arith.constant 8 : index
    %240 = memref.load %arg6[%c8] : memref<12xf32, #tpu.memory_space<smem>>
    %241 = arith.addf %240, %232 : f32
    %c8_177 = arith.constant 8 : index
    %242 = memref.load %arg6[%c8_177] : memref<12xf32, #tpu.memory_space<smem>>
    memref.store %241, %arg6[%c8_177] : memref<12xf32, #tpu.memory_space<smem>>
    %c8_178 = arith.constant 8 : index
    %243 = memref.load %arg7[%c8_178] : memref<12xf32, #tpu.memory_space<smem>>
    %244 = arith.addf %243, %239 : f32
    %c8_179 = arith.constant 8 : index
    %245 = memref.load %arg7[%c8_179] : memref<12xf32, #tpu.memory_space<smem>>
    memref.store %244, %arg7[%c8_179] : memref<12xf32, #tpu.memory_space<smem>>
    %c0_180 = arith.constant 0 : index
    %c1_181 = arith.constant 1 : index
    %c0_182 = arith.constant 0 : index
    %246 = vector.load %arg1[%c0_180, %c1_181, %c0_182] : memref<3x8x24xf32, #tpu.memory_space<vmem>>, vector<3x7x22xf32>
    %c0_183 = arith.constant 0 : index
    %c0_184 = arith.constant 0 : index
    %c2_185 = arith.constant 2 : index
    %247 = vector.load %arg1[%c0_183, %c0_184, %c2_185] : memref<3x8x24xf32, #tpu.memory_space<vmem>>, vector<3x7x22xf32>
    %c0_186 = arith.constant 0 : index
    %c1_187 = arith.constant 1 : index
    %c0_188 = arith.constant 0 : index
    %248 = vector.load %arg2[%c0_186, %c1_187, %c0_188] : memref<3x8x24xf32, #tpu.memory_space<vmem>>, vector<3x7x22xf32>
    %c0_189 = arith.constant 0 : index
    %c0_190 = arith.constant 0 : index
    %c2_191 = arith.constant 2 : index
    %249 = vector.load %arg2[%c0_189, %c0_190, %c2_191] : memref<3x8x24xf32, #tpu.memory_space<vmem>>, vector<3x7x22xf32>
    %250 = arith.subf %246, %247 : vector<3x7x22xf32>
    %251 = arith.mulf %250, %250 : vector<3x7x22xf32>
    %cst_192 = arith.constant dense<0.000000e+00> : vector<7x22xf32>
    %252 = vector.multi_reduction <add>, %251, %cst_192 [0] : vector<3x7x22xf32> to vector<7x22xf32>
    %cst_193 = arith.constant -5.000000e-03 : f32
    %253 = vector.broadcast %cst_193 : f32 to vector<7x22xf32>
    %254 = arith.mulf %252, %253 : vector<7x22xf32>
    %255 = math.exp %254 : vector<7x22xf32>
    %256 = vector.shape_cast %255 : vector<7x22xf32> to vector<1x7x22xf32>
    %cst_194 = arith.constant dense<0.000000e+00> : vector<1xf32>
    %257 = vector.multi_reduction <add>, %256, %cst_194 [1, 2] : vector<1x7x22xf32> to vector<1xf32>
    %258 = vector.shape_cast %257 : vector<1xf32> to vector<1x1x1xf32>
    %259 = vector.extract %258[0, 0, 0] : f32 from vector<1x1x1xf32>
    %260 = arith.subf %248, %249 : vector<3x7x22xf32>
    %261 = math.absf %260 : vector<3x7x22xf32>
    %cst_195 = arith.constant dense<0.000000e+00> : vector<7x22xf32>
    %262 = vector.multi_reduction <add>, %261, %cst_195 [0] : vector<3x7x22xf32> to vector<7x22xf32>
    %263 = vector.shape_cast %262 : vector<7x22xf32> to vector<1x7x22xf32>
    %cst_196 = arith.constant dense<0.000000e+00> : vector<1xf32>
    %264 = vector.multi_reduction <add>, %263, %cst_196 [1, 2] : vector<1x7x22xf32> to vector<1xf32>
    %265 = vector.shape_cast %264 : vector<1xf32> to vector<1x1x1xf32>
    %266 = vector.extract %265[0, 0, 0] : f32 from vector<1x1x1xf32>
    %c9 = arith.constant 9 : index
    %267 = memref.load %arg6[%c9] : memref<12xf32, #tpu.memory_space<smem>>
    %268 = arith.addf %267, %259 : f32
    %c9_197 = arith.constant 9 : index
    %269 = memref.load %arg6[%c9_197] : memref<12xf32, #tpu.memory_space<smem>>
    memref.store %268, %arg6[%c9_197] : memref<12xf32, #tpu.memory_space<smem>>
    %c9_198 = arith.constant 9 : index
    %270 = memref.load %arg7[%c9_198] : memref<12xf32, #tpu.memory_space<smem>>
    %271 = arith.addf %270, %266 : f32
    %c9_199 = arith.constant 9 : index
    %272 = memref.load %arg7[%c9_199] : memref<12xf32, #tpu.memory_space<smem>>
    memref.store %271, %arg7[%c9_199] : memref<12xf32, #tpu.memory_space<smem>>
    %c0_200 = arith.constant 0 : index
    %c2_201 = arith.constant 2 : index
    %c2_202 = arith.constant 2 : index
    %273 = vector.load %arg1[%c0_200, %c2_201, %c2_202] : memref<3x8x24xf32, #tpu.memory_space<vmem>>, vector<3x6x22xf32>
    %c0_203 = arith.constant 0 : index
    %c0_204 = arith.constant 0 : index
    %c0_205 = arith.constant 0 : index
    %274 = vector.load %arg1[%c0_203, %c0_204, %c0_205] : memref<3x8x24xf32, #tpu.memory_space<vmem>>, vector<3x6x22xf32>
    %c0_206 = arith.constant 0 : index
    %c2_207 = arith.constant 2 : index
    %c2_208 = arith.constant 2 : index
    %275 = vector.load %arg2[%c0_206, %c2_207, %c2_208] : memref<3x8x24xf32, #tpu.memory_space<vmem>>, vector<3x6x22xf32>
    %c0_209 = arith.constant 0 : index
    %c0_210 = arith.constant 0 : index
    %c0_211 = arith.constant 0 : index
    %276 = vector.load %arg2[%c0_209, %c0_210, %c0_211] : memref<3x8x24xf32, #tpu.memory_space<vmem>>, vector<3x6x22xf32>
    %277 = arith.subf %273, %274 : vector<3x6x22xf32>
    %278 = arith.mulf %277, %277 : vector<3x6x22xf32>
    %cst_212 = arith.constant dense<0.000000e+00> : vector<6x22xf32>
    %279 = vector.multi_reduction <add>, %278, %cst_212 [0] : vector<3x6x22xf32> to vector<6x22xf32>
    %cst_213 = arith.constant -5.000000e-03 : f32
    %280 = vector.broadcast %cst_213 : f32 to vector<6x22xf32>
    %281 = arith.mulf %279, %280 : vector<6x22xf32>
    %282 = math.exp %281 : vector<6x22xf32>
    %283 = vector.shape_cast %282 : vector<6x22xf32> to vector<1x6x22xf32>
    %cst_214 = arith.constant dense<0.000000e+00> : vector<1xf32>
    %284 = vector.multi_reduction <add>, %283, %cst_214 [1, 2] : vector<1x6x22xf32> to vector<1xf32>
    %285 = vector.shape_cast %284 : vector<1xf32> to vector<1x1x1xf32>
    %286 = vector.extract %285[0, 0, 0] : f32 from vector<1x1x1xf32>
    %287 = arith.subf %275, %276 : vector<3x6x22xf32>
    %288 = math.absf %287 : vector<3x6x22xf32>
    %cst_215 = arith.constant dense<0.000000e+00> : vector<6x22xf32>
    %289 = vector.multi_reduction <add>, %288, %cst_215 [0] : vector<3x6x22xf32> to vector<6x22xf32>
    %290 = vector.shape_cast %289 : vector<6x22xf32> to vector<1x6x22xf32>
    %cst_216 = arith.constant dense<0.000000e+00> : vector<1xf32>
    %291 = vector.multi_reduction <add>, %290, %cst_216 [1, 2] : vector<1x6x22xf32> to vector<1xf32>
    %292 = vector.shape_cast %291 : vector<1xf32> to vector<1x1x1xf32>
    %293 = vector.extract %292[0, 0, 0] : f32 from vector<1x1x1xf32>
    %c10 = arith.constant 10 : index
    %294 = memref.load %arg6[%c10] : memref<12xf32, #tpu.memory_space<smem>>
    %295 = arith.addf %294, %286 : f32
    %c10_217 = arith.constant 10 : index
    %296 = memref.load %arg6[%c10_217] : memref<12xf32, #tpu.memory_space<smem>>
    memref.store %295, %arg6[%c10_217] : memref<12xf32, #tpu.memory_space<smem>>
    %c10_218 = arith.constant 10 : index
    %297 = memref.load %arg7[%c10_218] : memref<12xf32, #tpu.memory_space<smem>>
    %298 = arith.addf %297, %293 : f32
    %c10_219 = arith.constant 10 : index
    %299 = memref.load %arg7[%c10_219] : memref<12xf32, #tpu.memory_space<smem>>
    memref.store %298, %arg7[%c10_219] : memref<12xf32, #tpu.memory_space<smem>>
    %c0_220 = arith.constant 0 : index
    %c2_221 = arith.constant 2 : index
    %c0_222 = arith.constant 0 : index
    %300 = vector.load %arg1[%c0_220, %c2_221, %c0_222] : memref<3x8x24xf32, #tpu.memory_space<vmem>>, vector<3x6x22xf32>
    %c0_223 = arith.constant 0 : index
    %c0_224 = arith.constant 0 : index
    %c2_225 = arith.constant 2 : index
    %301 = vector.load %arg1[%c0_223, %c0_224, %c2_225] : memref<3x8x24xf32, #tpu.memory_space<vmem>>, vector<3x6x22xf32>
    %c0_226 = arith.constant 0 : index
    %c2_227 = arith.constant 2 : index
    %c0_228 = arith.constant 0 : index
    %302 = vector.load %arg2[%c0_226, %c2_227, %c0_228] : memref<3x8x24xf32, #tpu.memory_space<vmem>>, vector<3x6x22xf32>
    %c0_229 = arith.constant 0 : index
    %c0_230 = arith.constant 0 : index
    %c2_231 = arith.constant 2 : index
    %303 = vector.load %arg2[%c0_229, %c0_230, %c2_231] : memref<3x8x24xf32, #tpu.memory_space<vmem>>, vector<3x6x22xf32>
    %304 = arith.subf %300, %301 : vector<3x6x22xf32>
    %305 = arith.mulf %304, %304 : vector<3x6x22xf32>
    %cst_232 = arith.constant dense<0.000000e+00> : vector<6x22xf32>
    %306 = vector.multi_reduction <add>, %305, %cst_232 [0] : vector<3x6x22xf32> to vector<6x22xf32>
    %cst_233 = arith.constant -5.000000e-03 : f32
    %307 = vector.broadcast %cst_233 : f32 to vector<6x22xf32>
    %308 = arith.mulf %306, %307 : vector<6x22xf32>
    %309 = math.exp %308 : vector<6x22xf32>
    %310 = vector.shape_cast %309 : vector<6x22xf32> to vector<1x6x22xf32>
    %cst_234 = arith.constant dense<0.000000e+00> : vector<1xf32>
    %311 = vector.multi_reduction <add>, %310, %cst_234 [1, 2] : vector<1x6x22xf32> to vector<1xf32>
    %312 = vector.shape_cast %311 : vector<1xf32> to vector<1x1x1xf32>
    %313 = vector.extract %312[0, 0, 0] : f32 from vector<1x1x1xf32>
    %314 = arith.subf %302, %303 : vector<3x6x22xf32>
    %315 = math.absf %314 : vector<3x6x22xf32>
    %cst_235 = arith.constant dense<0.000000e+00> : vector<6x22xf32>
    %316 = vector.multi_reduction <add>, %315, %cst_235 [0] : vector<3x6x22xf32> to vector<6x22xf32>
    %317 = vector.shape_cast %316 : vector<6x22xf32> to vector<1x6x22xf32>
    %cst_236 = arith.constant dense<0.000000e+00> : vector<1xf32>
    %318 = vector.multi_reduction <add>, %317, %cst_236 [1, 2] : vector<1x6x22xf32> to vector<1xf32>
    %319 = vector.shape_cast %318 : vector<1xf32> to vector<1x1x1xf32>
    %320 = vector.extract %319[0, 0, 0] : f32 from vector<1x1x1xf32>
    %c11 = arith.constant 11 : index
    %321 = memref.load %arg6[%c11] : memref<12xf32, #tpu.memory_space<smem>>
    %322 = arith.addf %321, %313 : f32
    %c11_237 = arith.constant 11 : index
    %323 = memref.load %arg6[%c11_237] : memref<12xf32, #tpu.memory_space<smem>>
    memref.store %322, %arg6[%c11_237] : memref<12xf32, #tpu.memory_space<smem>>
    %c11_238 = arith.constant 11 : index
    %324 = memref.load %arg7[%c11_238] : memref<12xf32, #tpu.memory_space<smem>>
    %325 = arith.addf %324, %320 : f32
    %c11_239 = arith.constant 11 : index
    %326 = memref.load %arg7[%c11_239] : memref<12xf32, #tpu.memory_space<smem>>
    memref.store %325, %arg7[%c11_239] : memref<12xf32, #tpu.memory_space<smem>>
    %c0_i32_240 = arith.constant 0 : i32
    %327 = arith.cmpi sgt, %arg0, %c0_i32_240 : i32
    %328 = arith.extui %327 : i1 to i32
    %c0_i32_241 = arith.constant 0 : i32
    %329 = arith.cmpi ne, %328, %c0_i32_241 : i32
    scf.if %329 {
      %c0_255 = arith.constant 0 : index
      %c0_256 = arith.constant 0 : index
      %c0_257 = arith.constant 0 : index
      %337 = vector.load %arg1[%c0_255, %c0_256, %c0_257] : memref<3x8x24xf32, #tpu.memory_space<vmem>>, vector<3x1x24xf32>
      %c0_258 = arith.constant 0 : index
      %c1_259 = arith.constant 1 : index
      %c0_260 = arith.constant 0 : index
      %338 = vector.load %arg4[%c0_258, %c1_259, %c0_260] : memref<3x2x24xf32, #tpu.memory_space<vmem>>, vector<3x1x24xf32>
      %c0_261 = arith.constant 0 : index
      %c0_262 = arith.constant 0 : index
      %c0_263 = arith.constant 0 : index
      %339 = vector.load %arg2[%c0_261, %c0_262, %c0_263] : memref<3x8x24xf32, #tpu.memory_space<vmem>>, vector<3x1x24xf32>
      %c0_264 = arith.constant 0 : index
      %c1_265 = arith.constant 1 : index
      %c0_266 = arith.constant 0 : index
      %340 = vector.load %arg5[%c0_264, %c1_265, %c0_266] : memref<3x2x24xf32, #tpu.memory_space<vmem>>, vector<3x1x24xf32>
      %341 = arith.subf %337, %338 : vector<3x1x24xf32>
      %342 = arith.mulf %341, %341 : vector<3x1x24xf32>
      %cst_267 = arith.constant dense<0.000000e+00> : vector<1x24xf32>
      %343 = vector.multi_reduction <add>, %342, %cst_267 [0] : vector<3x1x24xf32> to vector<1x24xf32>
      %cst_268 = arith.constant -5.000000e-03 : f32
      %344 = vector.broadcast %cst_268 : f32 to vector<1x24xf32>
      %345 = arith.mulf %343, %344 : vector<1x24xf32>
      %346 = math.exp %345 : vector<1x24xf32>
      %347 = vector.shape_cast %346 : vector<1x24xf32> to vector<1x1x24xf32>
      %cst_269 = arith.constant dense<0.000000e+00> : vector<1xf32>
      %348 = vector.multi_reduction <add>, %347, %cst_269 [1, 2] : vector<1x1x24xf32> to vector<1xf32>
      %349 = vector.shape_cast %348 : vector<1xf32> to vector<1x1x1xf32>
      %350 = vector.extract %349[0, 0, 0] : f32 from vector<1x1x1xf32>
      %351 = arith.subf %339, %340 : vector<3x1x24xf32>
      %352 = math.absf %351 : vector<3x1x24xf32>
      %cst_270 = arith.constant dense<0.000000e+00> : vector<1x24xf32>
      %353 = vector.multi_reduction <add>, %352, %cst_270 [0] : vector<3x1x24xf32> to vector<1x24xf32>
      %354 = vector.shape_cast %353 : vector<1x24xf32> to vector<1x1x24xf32>
      %cst_271 = arith.constant dense<0.000000e+00> : vector<1xf32>
      %355 = vector.multi_reduction <add>, %354, %cst_271 [1, 2] : vector<1x1x24xf32> to vector<1xf32>
      %356 = vector.shape_cast %355 : vector<1xf32> to vector<1x1x1xf32>
      %357 = vector.extract %356[0, 0, 0] : f32 from vector<1x1x1xf32>
      %c0_272 = arith.constant 0 : index
      %358 = memref.load %arg6[%c0_272] : memref<12xf32, #tpu.memory_space<smem>>
      %359 = arith.addf %358, %350 : f32
      %c0_273 = arith.constant 0 : index
      %360 = memref.load %arg6[%c0_273] : memref<12xf32, #tpu.memory_space<smem>>
      memref.store %359, %arg6[%c0_273] : memref<12xf32, #tpu.memory_space<smem>>
      %c0_274 = arith.constant 0 : index
      %361 = memref.load %arg7[%c0_274] : memref<12xf32, #tpu.memory_space<smem>>
      %362 = arith.addf %361, %357 : f32
      %c0_275 = arith.constant 0 : index
      %363 = memref.load %arg7[%c0_275] : memref<12xf32, #tpu.memory_space<smem>>
      memref.store %362, %arg7[%c0_275] : memref<12xf32, #tpu.memory_space<smem>>
      %c0_276 = arith.constant 0 : index
      %c0_277 = arith.constant 0 : index
      %c1_278 = arith.constant 1 : index
      %364 = vector.load %arg1[%c0_276, %c0_277, %c1_278] : memref<3x8x24xf32, #tpu.memory_space<vmem>>, vector<3x1x23xf32>
      %c0_279 = arith.constant 0 : index
      %c1_280 = arith.constant 1 : index
      %c0_281 = arith.constant 0 : index
      %365 = vector.load %arg4[%c0_279, %c1_280, %c0_281] : memref<3x2x24xf32, #tpu.memory_space<vmem>>, vector<3x1x23xf32>
      %c0_282 = arith.constant 0 : index
      %c0_283 = arith.constant 0 : index
      %c1_284 = arith.constant 1 : index
      %366 = vector.load %arg2[%c0_282, %c0_283, %c1_284] : memref<3x8x24xf32, #tpu.memory_space<vmem>>, vector<3x1x23xf32>
      %c0_285 = arith.constant 0 : index
      %c1_286 = arith.constant 1 : index
      %c0_287 = arith.constant 0 : index
      %367 = vector.load %arg5[%c0_285, %c1_286, %c0_287] : memref<3x2x24xf32, #tpu.memory_space<vmem>>, vector<3x1x23xf32>
      %368 = arith.subf %364, %365 : vector<3x1x23xf32>
      %369 = arith.mulf %368, %368 : vector<3x1x23xf32>
      %cst_288 = arith.constant dense<0.000000e+00> : vector<1x23xf32>
      %370 = vector.multi_reduction <add>, %369, %cst_288 [0] : vector<3x1x23xf32> to vector<1x23xf32>
      %cst_289 = arith.constant -5.000000e-03 : f32
      %371 = vector.broadcast %cst_289 : f32 to vector<1x23xf32>
      %372 = arith.mulf %370, %371 : vector<1x23xf32>
      %373 = math.exp %372 : vector<1x23xf32>
      %374 = vector.shape_cast %373 : vector<1x23xf32> to vector<1x1x23xf32>
      %cst_290 = arith.constant dense<0.000000e+00> : vector<1xf32>
      %375 = vector.multi_reduction <add>, %374, %cst_290 [1, 2] : vector<1x1x23xf32> to vector<1xf32>
      %376 = vector.shape_cast %375 : vector<1xf32> to vector<1x1x1xf32>
      %377 = vector.extract %376[0, 0, 0] : f32 from vector<1x1x1xf32>
      %378 = arith.subf %366, %367 : vector<3x1x23xf32>
      %379 = math.absf %378 : vector<3x1x23xf32>
      %cst_291 = arith.constant dense<0.000000e+00> : vector<1x23xf32>
      %380 = vector.multi_reduction <add>, %379, %cst_291 [0] : vector<3x1x23xf32> to vector<1x23xf32>
      %381 = vector.shape_cast %380 : vector<1x23xf32> to vector<1x1x23xf32>
      %cst_292 = arith.constant dense<0.000000e+00> : vector<1xf32>
      %382 = vector.multi_reduction <add>, %381, %cst_292 [1, 2] : vector<1x1x23xf32> to vector<1xf32>
      %383 = vector.shape_cast %382 : vector<1xf32> to vector<1x1x1xf32>
      %384 = vector.extract %383[0, 0, 0] : f32 from vector<1x1x1xf32>
      %c2_293 = arith.constant 2 : index
      %385 = memref.load %arg6[%c2_293] : memref<12xf32, #tpu.memory_space<smem>>
      %386 = arith.addf %385, %377 : f32
      %c2_294 = arith.constant 2 : index
      %387 = memref.load %arg6[%c2_294] : memref<12xf32, #tpu.memory_space<smem>>
      memref.store %386, %arg6[%c2_294] : memref<12xf32, #tpu.memory_space<smem>>
      %c2_295 = arith.constant 2 : index
      %388 = memref.load %arg7[%c2_295] : memref<12xf32, #tpu.memory_space<smem>>
      %389 = arith.addf %388, %384 : f32
      %c2_296 = arith.constant 2 : index
      %390 = memref.load %arg7[%c2_296] : memref<12xf32, #tpu.memory_space<smem>>
      memref.store %389, %arg7[%c2_296] : memref<12xf32, #tpu.memory_space<smem>>
      %c0_297 = arith.constant 0 : index
      %c0_298 = arith.constant 0 : index
      %c0_299 = arith.constant 0 : index
      %391 = vector.load %arg1[%c0_297, %c0_298, %c0_299] : memref<3x8x24xf32, #tpu.memory_space<vmem>>, vector<3x1x23xf32>
      %c0_300 = arith.constant 0 : index
      %c1_301 = arith.constant 1 : index
      %c1_302 = arith.constant 1 : index
      %392 = vector.load %arg4[%c0_300, %c1_301, %c1_302] : memref<3x2x24xf32, #tpu.memory_space<vmem>>, vector<3x1x23xf32>
      %c0_303 = arith.constant 0 : index
      %c0_304 = arith.constant 0 : index
      %c0_305 = arith.constant 0 : index
      %393 = vector.load %arg2[%c0_303, %c0_304, %c0_305] : memref<3x8x24xf32, #tpu.memory_space<vmem>>, vector<3x1x23xf32>
      %c0_306 = arith.constant 0 : index
      %c1_307 = arith.constant 1 : index
      %c1_308 = arith.constant 1 : index
      %394 = vector.load %arg5[%c0_306, %c1_307, %c1_308] : memref<3x2x24xf32, #tpu.memory_space<vmem>>, vector<3x1x23xf32>
      %395 = arith.subf %391, %392 : vector<3x1x23xf32>
      %396 = arith.mulf %395, %395 : vector<3x1x23xf32>
      %cst_309 = arith.constant dense<0.000000e+00> : vector<1x23xf32>
      %397 = vector.multi_reduction <add>, %396, %cst_309 [0] : vector<3x1x23xf32> to vector<1x23xf32>
      %cst_310 = arith.constant -5.000000e-03 : f32
      %398 = vector.broadcast %cst_310 : f32 to vector<1x23xf32>
      %399 = arith.mulf %397, %398 : vector<1x23xf32>
      %400 = math.exp %399 : vector<1x23xf32>
      %401 = vector.shape_cast %400 : vector<1x23xf32> to vector<1x1x23xf32>
      %cst_311 = arith.constant dense<0.000000e+00> : vector<1xf32>
      %402 = vector.multi_reduction <add>, %401, %cst_311 [1, 2] : vector<1x1x23xf32> to vector<1xf32>
      %403 = vector.shape_cast %402 : vector<1xf32> to vector<1x1x1xf32>
      %404 = vector.extract %403[0, 0, 0] : f32 from vector<1x1x1xf32>
      %405 = arith.subf %393, %394 : vector<3x1x23xf32>
      %406 = math.absf %405 : vector<3x1x23xf32>
      %cst_312 = arith.constant dense<0.000000e+00> : vector<1x23xf32>
      %407 = vector.multi_reduction <add>, %406, %cst_312 [0] : vector<3x1x23xf32> to vector<1x23xf32>
      %408 = vector.shape_cast %407 : vector<1x23xf32> to vector<1x1x23xf32>
      %cst_313 = arith.constant dense<0.000000e+00> : vector<1xf32>
      %409 = vector.multi_reduction <add>, %408, %cst_313 [1, 2] : vector<1x1x23xf32> to vector<1xf32>
      %410 = vector.shape_cast %409 : vector<1xf32> to vector<1x1x1xf32>
      %411 = vector.extract %410[0, 0, 0] : f32 from vector<1x1x1xf32>
      %c3_314 = arith.constant 3 : index
      %412 = memref.load %arg6[%c3_314] : memref<12xf32, #tpu.memory_space<smem>>
      %413 = arith.addf %412, %404 : f32
      %c3_315 = arith.constant 3 : index
      %414 = memref.load %arg6[%c3_315] : memref<12xf32, #tpu.memory_space<smem>>
      memref.store %413, %arg6[%c3_315] : memref<12xf32, #tpu.memory_space<smem>>
      %c3_316 = arith.constant 3 : index
      %415 = memref.load %arg7[%c3_316] : memref<12xf32, #tpu.memory_space<smem>>
      %416 = arith.addf %415, %411 : f32
      %c3_317 = arith.constant 3 : index
      %417 = memref.load %arg7[%c3_317] : memref<12xf32, #tpu.memory_space<smem>>
      memref.store %416, %arg7[%c3_317] : memref<12xf32, #tpu.memory_space<smem>>
      %c0_318 = arith.constant 0 : index
      %c0_319 = arith.constant 0 : index
      %c0_320 = arith.constant 0 : index
      %418 = vector.load %arg1[%c0_318, %c0_319, %c0_320] : memref<3x8x24xf32, #tpu.memory_space<vmem>>, vector<3x2x24xf32>
      %c0_321 = arith.constant 0 : index
      %c0_322 = arith.constant 0 : index
      %c0_323 = arith.constant 0 : index
      %419 = vector.load %arg4[%c0_321, %c0_322, %c0_323] : memref<3x2x24xf32, #tpu.memory_space<vmem>>, vector<3x2x24xf32>
      %c0_324 = arith.constant 0 : index
      %c0_325 = arith.constant 0 : index
      %c0_326 = arith.constant 0 : index
      %420 = vector.load %arg2[%c0_324, %c0_325, %c0_326] : memref<3x8x24xf32, #tpu.memory_space<vmem>>, vector<3x2x24xf32>
      %c0_327 = arith.constant 0 : index
      %c0_328 = arith.constant 0 : index
      %c0_329 = arith.constant 0 : index
      %421 = vector.load %arg5[%c0_327, %c0_328, %c0_329] : memref<3x2x24xf32, #tpu.memory_space<vmem>>, vector<3x2x24xf32>
      %422 = arith.subf %418, %419 : vector<3x2x24xf32>
      %423 = arith.mulf %422, %422 : vector<3x2x24xf32>
      %cst_330 = arith.constant dense<0.000000e+00> : vector<2x24xf32>
      %424 = vector.multi_reduction <add>, %423, %cst_330 [0] : vector<3x2x24xf32> to vector<2x24xf32>
      %cst_331 = arith.constant -5.000000e-03 : f32
      %425 = vector.broadcast %cst_331 : f32 to vector<2x24xf32>
      %426 = arith.mulf %424, %425 : vector<2x24xf32>
      %427 = math.exp %426 : vector<2x24xf32>
      %428 = vector.shape_cast %427 : vector<2x24xf32> to vector<1x2x24xf32>
      %cst_332 = arith.constant dense<0.000000e+00> : vector<1xf32>
      %429 = vector.multi_reduction <add>, %428, %cst_332 [1, 2] : vector<1x2x24xf32> to vector<1xf32>
      %430 = vector.shape_cast %429 : vector<1xf32> to vector<1x1x1xf32>
      %431 = vector.extract %430[0, 0, 0] : f32 from vector<1x1x1xf32>
      %432 = arith.subf %420, %421 : vector<3x2x24xf32>
      %433 = math.absf %432 : vector<3x2x24xf32>
      %cst_333 = arith.constant dense<0.000000e+00> : vector<2x24xf32>
      %434 = vector.multi_reduction <add>, %433, %cst_333 [0] : vector<3x2x24xf32> to vector<2x24xf32>
      %435 = vector.shape_cast %434 : vector<2x24xf32> to vector<1x2x24xf32>
      %cst_334 = arith.constant dense<0.000000e+00> : vector<1xf32>
      %436 = vector.multi_reduction <add>, %435, %cst_334 [1, 2] : vector<1x2x24xf32> to vector<1xf32>
      %437 = vector.shape_cast %436 : vector<1xf32> to vector<1x1x1xf32>
      %438 = vector.extract %437[0, 0, 0] : f32 from vector<1x1x1xf32>
      %c4_335 = arith.constant 4 : index
      %439 = memref.load %arg6[%c4_335] : memref<12xf32, #tpu.memory_space<smem>>
      %440 = arith.addf %439, %431 : f32
      %c4_336 = arith.constant 4 : index
      %441 = memref.load %arg6[%c4_336] : memref<12xf32, #tpu.memory_space<smem>>
      memref.store %440, %arg6[%c4_336] : memref<12xf32, #tpu.memory_space<smem>>
      %c4_337 = arith.constant 4 : index
      %442 = memref.load %arg7[%c4_337] : memref<12xf32, #tpu.memory_space<smem>>
      %443 = arith.addf %442, %438 : f32
      %c4_338 = arith.constant 4 : index
      %444 = memref.load %arg7[%c4_338] : memref<12xf32, #tpu.memory_space<smem>>
      memref.store %443, %arg7[%c4_338] : memref<12xf32, #tpu.memory_space<smem>>
      %c0_339 = arith.constant 0 : index
      %c0_340 = arith.constant 0 : index
      %c1_341 = arith.constant 1 : index
      %445 = vector.load %arg1[%c0_339, %c0_340, %c1_341] : memref<3x8x24xf32, #tpu.memory_space<vmem>>, vector<3x2x23xf32>
      %c0_342 = arith.constant 0 : index
      %c0_343 = arith.constant 0 : index
      %c0_344 = arith.constant 0 : index
      %446 = vector.load %arg4[%c0_342, %c0_343, %c0_344] : memref<3x2x24xf32, #tpu.memory_space<vmem>>, vector<3x2x23xf32>
      %c0_345 = arith.constant 0 : index
      %c0_346 = arith.constant 0 : index
      %c1_347 = arith.constant 1 : index
      %447 = vector.load %arg2[%c0_345, %c0_346, %c1_347] : memref<3x8x24xf32, #tpu.memory_space<vmem>>, vector<3x2x23xf32>
      %c0_348 = arith.constant 0 : index
      %c0_349 = arith.constant 0 : index
      %c0_350 = arith.constant 0 : index
      %448 = vector.load %arg5[%c0_348, %c0_349, %c0_350] : memref<3x2x24xf32, #tpu.memory_space<vmem>>, vector<3x2x23xf32>
      %449 = arith.subf %445, %446 : vector<3x2x23xf32>
      %450 = arith.mulf %449, %449 : vector<3x2x23xf32>
      %cst_351 = arith.constant dense<0.000000e+00> : vector<2x23xf32>
      %451 = vector.multi_reduction <add>, %450, %cst_351 [0] : vector<3x2x23xf32> to vector<2x23xf32>
      %cst_352 = arith.constant -5.000000e-03 : f32
      %452 = vector.broadcast %cst_352 : f32 to vector<2x23xf32>
      %453 = arith.mulf %451, %452 : vector<2x23xf32>
      %454 = math.exp %453 : vector<2x23xf32>
      %455 = vector.shape_cast %454 : vector<2x23xf32> to vector<1x2x23xf32>
      %cst_353 = arith.constant dense<0.000000e+00> : vector<1xf32>
      %456 = vector.multi_reduction <add>, %455, %cst_353 [1, 2] : vector<1x2x23xf32> to vector<1xf32>
      %457 = vector.shape_cast %456 : vector<1xf32> to vector<1x1x1xf32>
      %458 = vector.extract %457[0, 0, 0] : f32 from vector<1x1x1xf32>
      %459 = arith.subf %447, %448 : vector<3x2x23xf32>
      %460 = math.absf %459 : vector<3x2x23xf32>
      %cst_354 = arith.constant dense<0.000000e+00> : vector<2x23xf32>
      %461 = vector.multi_reduction <add>, %460, %cst_354 [0] : vector<3x2x23xf32> to vector<2x23xf32>
      %462 = vector.shape_cast %461 : vector<2x23xf32> to vector<1x2x23xf32>
      %cst_355 = arith.constant dense<0.000000e+00> : vector<1xf32>
      %463 = vector.multi_reduction <add>, %462, %cst_355 [1, 2] : vector<1x2x23xf32> to vector<1xf32>
      %464 = vector.shape_cast %463 : vector<1xf32> to vector<1x1x1xf32>
      %465 = vector.extract %464[0, 0, 0] : f32 from vector<1x1x1xf32>
      %c6_356 = arith.constant 6 : index
      %466 = memref.load %arg6[%c6_356] : memref<12xf32, #tpu.memory_space<smem>>
      %467 = arith.addf %466, %458 : f32
      %c6_357 = arith.constant 6 : index
      %468 = memref.load %arg6[%c6_357] : memref<12xf32, #tpu.memory_space<smem>>
      memref.store %467, %arg6[%c6_357] : memref<12xf32, #tpu.memory_space<smem>>
      %c6_358 = arith.constant 6 : index
      %469 = memref.load %arg7[%c6_358] : memref<12xf32, #tpu.memory_space<smem>>
      %470 = arith.addf %469, %465 : f32
      %c6_359 = arith.constant 6 : index
      %471 = memref.load %arg7[%c6_359] : memref<12xf32, #tpu.memory_space<smem>>
      memref.store %470, %arg7[%c6_359] : memref<12xf32, #tpu.memory_space<smem>>
      %c0_360 = arith.constant 0 : index
      %c0_361 = arith.constant 0 : index
      %c0_362 = arith.constant 0 : index
      %472 = vector.load %arg1[%c0_360, %c0_361, %c0_362] : memref<3x8x24xf32, #tpu.memory_space<vmem>>, vector<3x2x23xf32>
      %c0_363 = arith.constant 0 : index
      %c0_364 = arith.constant 0 : index
      %c1_365 = arith.constant 1 : index
      %473 = vector.load %arg4[%c0_363, %c0_364, %c1_365] : memref<3x2x24xf32, #tpu.memory_space<vmem>>, vector<3x2x23xf32>
      %c0_366 = arith.constant 0 : index
      %c0_367 = arith.constant 0 : index
      %c0_368 = arith.constant 0 : index
      %474 = vector.load %arg2[%c0_366, %c0_367, %c0_368] : memref<3x8x24xf32, #tpu.memory_space<vmem>>, vector<3x2x23xf32>
      %c0_369 = arith.constant 0 : index
      %c0_370 = arith.constant 0 : index
      %c1_371 = arith.constant 1 : index
      %475 = vector.load %arg5[%c0_369, %c0_370, %c1_371] : memref<3x2x24xf32, #tpu.memory_space<vmem>>, vector<3x2x23xf32>
      %476 = arith.subf %472, %473 : vector<3x2x23xf32>
      %477 = arith.mulf %476, %476 : vector<3x2x23xf32>
      %cst_372 = arith.constant dense<0.000000e+00> : vector<2x23xf32>
      %478 = vector.multi_reduction <add>, %477, %cst_372 [0] : vector<3x2x23xf32> to vector<2x23xf32>
      %cst_373 = arith.constant -5.000000e-03 : f32
      %479 = vector.broadcast %cst_373 : f32 to vector<2x23xf32>
      %480 = arith.mulf %478, %479 : vector<2x23xf32>
      %481 = math.exp %480 : vector<2x23xf32>
      %482 = vector.shape_cast %481 : vector<2x23xf32> to vector<1x2x23xf32>
      %cst_374 = arith.constant dense<0.000000e+00> : vector<1xf32>
      %483 = vector.multi_reduction <add>, %482, %cst_374 [1, 2] : vector<1x2x23xf32> to vector<1xf32>
      %484 = vector.shape_cast %483 : vector<1xf32> to vector<1x1x1xf32>
      %485 = vector.extract %484[0, 0, 0] : f32 from vector<1x1x1xf32>
      %486 = arith.subf %474, %475 : vector<3x2x23xf32>
      %487 = math.absf %486 : vector<3x2x23xf32>
      %cst_375 = arith.constant dense<0.000000e+00> : vector<2x23xf32>
      %488 = vector.multi_reduction <add>, %487, %cst_375 [0] : vector<3x2x23xf32> to vector<2x23xf32>
      %489 = vector.shape_cast %488 : vector<2x23xf32> to vector<1x2x23xf32>
      %cst_376 = arith.constant dense<0.000000e+00> : vector<1xf32>
      %490 = vector.multi_reduction <add>, %489, %cst_376 [1, 2] : vector<1x2x23xf32> to vector<1xf32>
      %491 = vector.shape_cast %490 : vector<1xf32> to vector<1x1x1xf32>
      %492 = vector.extract %491[0, 0, 0] : f32 from vector<1x1x1xf32>
      %c7_377 = arith.constant 7 : index
      %493 = memref.load %arg6[%c7_377] : memref<12xf32, #tpu.memory_space<smem>>
      %494 = arith.addf %493, %485 : f32
      %c7_378 = arith.constant 7 : index
      %495 = memref.load %arg6[%c7_378] : memref<12xf32, #tpu.memory_space<smem>>
      memref.store %494, %arg6[%c7_378] : memref<12xf32, #tpu.memory_space<smem>>
      %c7_379 = arith.constant 7 : index
      %496 = memref.load %arg7[%c7_379] : memref<12xf32, #tpu.memory_space<smem>>
      %497 = arith.addf %496, %492 : f32
      %c7_380 = arith.constant 7 : index
      %498 = memref.load %arg7[%c7_380] : memref<12xf32, #tpu.memory_space<smem>>
      memref.store %497, %arg7[%c7_380] : memref<12xf32, #tpu.memory_space<smem>>
      %c0_381 = arith.constant 0 : index
      %c0_382 = arith.constant 0 : index
      %c2_383 = arith.constant 2 : index
      %499 = vector.load %arg1[%c0_381, %c0_382, %c2_383] : memref<3x8x24xf32, #tpu.memory_space<vmem>>, vector<3x1x22xf32>
      %c0_384 = arith.constant 0 : index
      %c1_385 = arith.constant 1 : index
      %c0_386 = arith.constant 0 : index
      %500 = vector.load %arg4[%c0_384, %c1_385, %c0_386] : memref<3x2x24xf32, #tpu.memory_space<vmem>>, vector<3x1x22xf32>
      %c0_387 = arith.constant 0 : index
      %c0_388 = arith.constant 0 : index
      %c2_389 = arith.constant 2 : index
      %501 = vector.load %arg2[%c0_387, %c0_388, %c2_389] : memref<3x8x24xf32, #tpu.memory_space<vmem>>, vector<3x1x22xf32>
      %c0_390 = arith.constant 0 : index
      %c1_391 = arith.constant 1 : index
      %c0_392 = arith.constant 0 : index
      %502 = vector.load %arg5[%c0_390, %c1_391, %c0_392] : memref<3x2x24xf32, #tpu.memory_space<vmem>>, vector<3x1x22xf32>
      %503 = arith.subf %499, %500 : vector<3x1x22xf32>
      %504 = arith.mulf %503, %503 : vector<3x1x22xf32>
      %cst_393 = arith.constant dense<0.000000e+00> : vector<1x22xf32>
      %505 = vector.multi_reduction <add>, %504, %cst_393 [0] : vector<3x1x22xf32> to vector<1x22xf32>
      %cst_394 = arith.constant -5.000000e-03 : f32
      %506 = vector.broadcast %cst_394 : f32 to vector<1x22xf32>
      %507 = arith.mulf %505, %506 : vector<1x22xf32>
      %508 = math.exp %507 : vector<1x22xf32>
      %509 = vector.shape_cast %508 : vector<1x22xf32> to vector<1x1x22xf32>
      %cst_395 = arith.constant dense<0.000000e+00> : vector<1xf32>
      %510 = vector.multi_reduction <add>, %509, %cst_395 [1, 2] : vector<1x1x22xf32> to vector<1xf32>
      %511 = vector.shape_cast %510 : vector<1xf32> to vector<1x1x1xf32>
      %512 = vector.extract %511[0, 0, 0] : f32 from vector<1x1x1xf32>
      %513 = arith.subf %501, %502 : vector<3x1x22xf32>
      %514 = math.absf %513 : vector<3x1x22xf32>
      %cst_396 = arith.constant dense<0.000000e+00> : vector<1x22xf32>
      %515 = vector.multi_reduction <add>, %514, %cst_396 [0] : vector<3x1x22xf32> to vector<1x22xf32>
      %516 = vector.shape_cast %515 : vector<1x22xf32> to vector<1x1x22xf32>
      %cst_397 = arith.constant dense<0.000000e+00> : vector<1xf32>
      %517 = vector.multi_reduction <add>, %516, %cst_397 [1, 2] : vector<1x1x22xf32> to vector<1xf32>
      %518 = vector.shape_cast %517 : vector<1xf32> to vector<1x1x1xf32>
      %519 = vector.extract %518[0, 0, 0] : f32 from vector<1x1x1xf32>
      %c8_398 = arith.constant 8 : index
      %520 = memref.load %arg6[%c8_398] : memref<12xf32, #tpu.memory_space<smem>>
      %521 = arith.addf %520, %512 : f32
      %c8_399 = arith.constant 8 : index
      %522 = memref.load %arg6[%c8_399] : memref<12xf32, #tpu.memory_space<smem>>
      memref.store %521, %arg6[%c8_399] : memref<12xf32, #tpu.memory_space<smem>>
      %c8_400 = arith.constant 8 : index
      %523 = memref.load %arg7[%c8_400] : memref<12xf32, #tpu.memory_space<smem>>
      %524 = arith.addf %523, %519 : f32
      %c8_401 = arith.constant 8 : index
      %525 = memref.load %arg7[%c8_401] : memref<12xf32, #tpu.memory_space<smem>>
      memref.store %524, %arg7[%c8_401] : memref<12xf32, #tpu.memory_space<smem>>
      %c0_402 = arith.constant 0 : index
      %c0_403 = arith.constant 0 : index
      %c0_404 = arith.constant 0 : index
      %526 = vector.load %arg1[%c0_402, %c0_403, %c0_404] : memref<3x8x24xf32, #tpu.memory_space<vmem>>, vector<3x1x22xf32>
      %c0_405 = arith.constant 0 : index
      %c1_406 = arith.constant 1 : index
      %c2_407 = arith.constant 2 : index
      %527 = vector.load %arg4[%c0_405, %c1_406, %c2_407] : memref<3x2x24xf32, #tpu.memory_space<vmem>>, vector<3x1x22xf32>
      %c0_408 = arith.constant 0 : index
      %c0_409 = arith.constant 0 : index
      %c0_410 = arith.constant 0 : index
      %528 = vector.load %arg2[%c0_408, %c0_409, %c0_410] : memref<3x8x24xf32, #tpu.memory_space<vmem>>, vector<3x1x22xf32>
      %c0_411 = arith.constant 0 : index
      %c1_412 = arith.constant 1 : index
      %c2_413 = arith.constant 2 : index
      %529 = vector.load %arg5[%c0_411, %c1_412, %c2_413] : memref<3x2x24xf32, #tpu.memory_space<vmem>>, vector<3x1x22xf32>
      %530 = arith.subf %526, %527 : vector<3x1x22xf32>
      %531 = arith.mulf %530, %530 : vector<3x1x22xf32>
      %cst_414 = arith.constant dense<0.000000e+00> : vector<1x22xf32>
      %532 = vector.multi_reduction <add>, %531, %cst_414 [0] : vector<3x1x22xf32> to vector<1x22xf32>
      %cst_415 = arith.constant -5.000000e-03 : f32
      %533 = vector.broadcast %cst_415 : f32 to vector<1x22xf32>
      %534 = arith.mulf %532, %533 : vector<1x22xf32>
      %535 = math.exp %534 : vector<1x22xf32>
      %536 = vector.shape_cast %535 : vector<1x22xf32> to vector<1x1x22xf32>
      %cst_416 = arith.constant dense<0.000000e+00> : vector<1xf32>
      %537 = vector.multi_reduction <add>, %536, %cst_416 [1, 2] : vector<1x1x22xf32> to vector<1xf32>
      %538 = vector.shape_cast %537 : vector<1xf32> to vector<1x1x1xf32>
      %539 = vector.extract %538[0, 0, 0] : f32 from vector<1x1x1xf32>
      %540 = arith.subf %528, %529 : vector<3x1x22xf32>
      %541 = math.absf %540 : vector<3x1x22xf32>
      %cst_417 = arith.constant dense<0.000000e+00> : vector<1x22xf32>
      %542 = vector.multi_reduction <add>, %541, %cst_417 [0] : vector<3x1x22xf32> to vector<1x22xf32>
      %543 = vector.shape_cast %542 : vector<1x22xf32> to vector<1x1x22xf32>
      %cst_418 = arith.constant dense<0.000000e+00> : vector<1xf32>
      %544 = vector.multi_reduction <add>, %543, %cst_418 [1, 2] : vector<1x1x22xf32> to vector<1xf32>
      %545 = vector.shape_cast %544 : vector<1xf32> to vector<1x1x1xf32>
      %546 = vector.extract %545[0, 0, 0] : f32 from vector<1x1x1xf32>
      %c9_419 = arith.constant 9 : index
      %547 = memref.load %arg6[%c9_419] : memref<12xf32, #tpu.memory_space<smem>>
      %548 = arith.addf %547, %539 : f32
      %c9_420 = arith.constant 9 : index
      %549 = memref.load %arg6[%c9_420] : memref<12xf32, #tpu.memory_space<smem>>
      memref.store %548, %arg6[%c9_420] : memref<12xf32, #tpu.memory_space<smem>>
      %c9_421 = arith.constant 9 : index
      %550 = memref.load %arg7[%c9_421] : memref<12xf32, #tpu.memory_space<smem>>
      %551 = arith.addf %550, %546 : f32
      %c9_422 = arith.constant 9 : index
      %552 = memref.load %arg7[%c9_422] : memref<12xf32, #tpu.memory_space<smem>>
      memref.store %551, %arg7[%c9_422] : memref<12xf32, #tpu.memory_space<smem>>
      %c0_423 = arith.constant 0 : index
      %c0_424 = arith.constant 0 : index
      %c2_425 = arith.constant 2 : index
      %553 = vector.load %arg1[%c0_423, %c0_424, %c2_425] : memref<3x8x24xf32, #tpu.memory_space<vmem>>, vector<3x2x22xf32>
      %c0_426 = arith.constant 0 : index
      %c0_427 = arith.constant 0 : index
      %c0_428 = arith.constant 0 : index
      %554 = vector.load %arg4[%c0_426, %c0_427, %c0_428] : memref<3x2x24xf32, #tpu.memory_space<vmem>>, vector<3x2x22xf32>
      %c0_429 = arith.constant 0 : index
      %c0_430 = arith.constant 0 : index
      %c2_431 = arith.constant 2 : index
      %555 = vector.load %arg2[%c0_429, %c0_430, %c2_431] : memref<3x8x24xf32, #tpu.memory_space<vmem>>, vector<3x2x22xf32>
      %c0_432 = arith.constant 0 : index
      %c0_433 = arith.constant 0 : index
      %c0_434 = arith.constant 0 : index
      %556 = vector.load %arg5[%c0_432, %c0_433, %c0_434] : memref<3x2x24xf32, #tpu.memory_space<vmem>>, vector<3x2x22xf32>
      %557 = arith.subf %553, %554 : vector<3x2x22xf32>
      %558 = arith.mulf %557, %557 : vector<3x2x22xf32>
      %cst_435 = arith.constant dense<0.000000e+00> : vector<2x22xf32>
      %559 = vector.multi_reduction <add>, %558, %cst_435 [0] : vector<3x2x22xf32> to vector<2x22xf32>
      %cst_436 = arith.constant -5.000000e-03 : f32
      %560 = vector.broadcast %cst_436 : f32 to vector<2x22xf32>
      %561 = arith.mulf %559, %560 : vector<2x22xf32>
      %562 = math.exp %561 : vector<2x22xf32>
      %563 = vector.shape_cast %562 : vector<2x22xf32> to vector<1x2x22xf32>
      %cst_437 = arith.constant dense<0.000000e+00> : vector<1xf32>
      %564 = vector.multi_reduction <add>, %563, %cst_437 [1, 2] : vector<1x2x22xf32> to vector<1xf32>
      %565 = vector.shape_cast %564 : vector<1xf32> to vector<1x1x1xf32>
      %566 = vector.extract %565[0, 0, 0] : f32 from vector<1x1x1xf32>
      %567 = arith.subf %555, %556 : vector<3x2x22xf32>
      %568 = math.absf %567 : vector<3x2x22xf32>
      %cst_438 = arith.constant dense<0.000000e+00> : vector<2x22xf32>
      %569 = vector.multi_reduction <add>, %568, %cst_438 [0] : vector<3x2x22xf32> to vector<2x22xf32>
      %570 = vector.shape_cast %569 : vector<2x22xf32> to vector<1x2x22xf32>
      %cst_439 = arith.constant dense<0.000000e+00> : vector<1xf32>
      %571 = vector.multi_reduction <add>, %570, %cst_439 [1, 2] : vector<1x2x22xf32> to vector<1xf32>
      %572 = vector.shape_cast %571 : vector<1xf32> to vector<1x1x1xf32>
      %573 = vector.extract %572[0, 0, 0] : f32 from vector<1x1x1xf32>
      %c10_440 = arith.constant 10 : index
      %574 = memref.load %arg6[%c10_440] : memref<12xf32, #tpu.memory_space<smem>>
      %575 = arith.addf %574, %566 : f32
      %c10_441 = arith.constant 10 : index
      %576 = memref.load %arg6[%c10_441] : memref<12xf32, #tpu.memory_space<smem>>
      memref.store %575, %arg6[%c10_441] : memref<12xf32, #tpu.memory_space<smem>>
      %c10_442 = arith.constant 10 : index
      %577 = memref.load %arg7[%c10_442] : memref<12xf32, #tpu.memory_space<smem>>
      %578 = arith.addf %577, %573 : f32
      %c10_443 = arith.constant 10 : index
      %579 = memref.load %arg7[%c10_443] : memref<12xf32, #tpu.memory_space<smem>>
      memref.store %578, %arg7[%c10_443] : memref<12xf32, #tpu.memory_space<smem>>
      %c0_444 = arith.constant 0 : index
      %c0_445 = arith.constant 0 : index
      %c0_446 = arith.constant 0 : index
      %580 = vector.load %arg1[%c0_444, %c0_445, %c0_446] : memref<3x8x24xf32, #tpu.memory_space<vmem>>, vector<3x2x22xf32>
      %c0_447 = arith.constant 0 : index
      %c0_448 = arith.constant 0 : index
      %c2_449 = arith.constant 2 : index
      %581 = vector.load %arg4[%c0_447, %c0_448, %c2_449] : memref<3x2x24xf32, #tpu.memory_space<vmem>>, vector<3x2x22xf32>
      %c0_450 = arith.constant 0 : index
      %c0_451 = arith.constant 0 : index
      %c0_452 = arith.constant 0 : index
      %582 = vector.load %arg2[%c0_450, %c0_451, %c0_452] : memref<3x8x24xf32, #tpu.memory_space<vmem>>, vector<3x2x22xf32>
      %c0_453 = arith.constant 0 : index
      %c0_454 = arith.constant 0 : index
      %c2_455 = arith.constant 2 : index
      %583 = vector.load %arg5[%c0_453, %c0_454, %c2_455] : memref<3x2x24xf32, #tpu.memory_space<vmem>>, vector<3x2x22xf32>
      %584 = arith.subf %580, %581 : vector<3x2x22xf32>
      %585 = arith.mulf %584, %584 : vector<3x2x22xf32>
      %cst_456 = arith.constant dense<0.000000e+00> : vector<2x22xf32>
      %586 = vector.multi_reduction <add>, %585, %cst_456 [0] : vector<3x2x22xf32> to vector<2x22xf32>
      %cst_457 = arith.constant -5.000000e-03 : f32
      %587 = vector.broadcast %cst_457 : f32 to vector<2x22xf32>
      %588 = arith.mulf %586, %587 : vector<2x22xf32>
      %589 = math.exp %588 : vector<2x22xf32>
      %590 = vector.shape_cast %589 : vector<2x22xf32> to vector<1x2x22xf32>
      %cst_458 = arith.constant dense<0.000000e+00> : vector<1xf32>
      %591 = vector.multi_reduction <add>, %590, %cst_458 [1, 2] : vector<1x2x22xf32> to vector<1xf32>
      %592 = vector.shape_cast %591 : vector<1xf32> to vector<1x1x1xf32>
      %593 = vector.extract %592[0, 0, 0] : f32 from vector<1x1x1xf32>
      %594 = arith.subf %582, %583 : vector<3x2x22xf32>
      %595 = math.absf %594 : vector<3x2x22xf32>
      %cst_459 = arith.constant dense<0.000000e+00> : vector<2x22xf32>
      %596 = vector.multi_reduction <add>, %595, %cst_459 [0] : vector<3x2x22xf32> to vector<2x22xf32>
      %597 = vector.shape_cast %596 : vector<2x22xf32> to vector<1x2x22xf32>
      %cst_460 = arith.constant dense<0.000000e+00> : vector<1xf32>
      %598 = vector.multi_reduction <add>, %597, %cst_460 [1, 2] : vector<1x2x22xf32> to vector<1xf32>
      %599 = vector.shape_cast %598 : vector<1xf32> to vector<1x1x1xf32>
      %600 = vector.extract %599[0, 0, 0] : f32 from vector<1x1x1xf32>
      %c11_461 = arith.constant 11 : index
      %601 = memref.load %arg6[%c11_461] : memref<12xf32, #tpu.memory_space<smem>>
      %602 = arith.addf %601, %593 : f32
      %c11_462 = arith.constant 11 : index
      %603 = memref.load %arg6[%c11_462] : memref<12xf32, #tpu.memory_space<smem>>
      memref.store %602, %arg6[%c11_462] : memref<12xf32, #tpu.memory_space<smem>>
      %c11_463 = arith.constant 11 : index
      %604 = memref.load %arg7[%c11_463] : memref<12xf32, #tpu.memory_space<smem>>
      %605 = arith.addf %604, %600 : f32
      %c11_464 = arith.constant 11 : index
      %606 = memref.load %arg7[%c11_464] : memref<12xf32, #tpu.memory_space<smem>>
      memref.store %605, %arg7[%c11_464] : memref<12xf32, #tpu.memory_space<smem>>
    } else {
    }
    %c0_242 = arith.constant 0 : index
    %c6_243 = arith.constant 6 : index
    %c0_244 = arith.constant 0 : index
    %330 = vector.load %arg1[%c0_242, %c6_243, %c0_244] : memref<3x8x24xf32, #tpu.memory_space<vmem>>, vector<3x2x24xf32>
    %c0_245 = arith.constant 0 : index
    %c0_246 = arith.constant 0 : index
    %c0_247 = arith.constant 0 : index
    %331 = vector.load %arg4[%c0_245, %c0_246, %c0_247] : memref<3x2x24xf32, #tpu.memory_space<vmem>>, vector<3x2x24xf32>
    tpu.vector_store %arg4[%c0_245, %c0_246, %c0_247], %330 {strides = array<i32>} : memref<3x2x24xf32, #tpu.memory_space<vmem>>, vector<3x2x24xf32>,
    %c0_248 = arith.constant 0 : index
    %c6_249 = arith.constant 6 : index
    %c0_250 = arith.constant 0 : index
    %332 = vector.load %arg2[%c0_248, %c6_249, %c0_250] : memref<3x8x24xf32, #tpu.memory_space<vmem>>, vector<3x2x24xf32>
    %c0_251 = arith.constant 0 : index
    %c0_252 = arith.constant 0 : index
    %c0_253 = arith.constant 0 : index
    %333 = vector.load %arg5[%c0_251, %c0_252, %c0_253] : memref<3x2x24xf32, #tpu.memory_space<vmem>>, vector<3x2x24xf32>
    tpu.vector_store %arg5[%c0_251, %c0_252, %c0_253], %332 {strides = array<i32>} : memref<3x2x24xf32, #tpu.memory_space<vmem>>, vector<3x2x24xf32>,
    %c1_i32 = arith.constant 1 : i32
    %334 = arith.cmpi eq, %arg0, %c1_i32 : i32
    %335 = arith.extui %334 : i1 to i32
    %c0_i32_254 = arith.constant 0 : i32
    %336 = arith.cmpi ne, %335, %c0_i32_254 : i32
    scf.if %336 {
      %c0_255 = arith.constant 0 : index
      %337 = memref.load %arg6[%c0_255] : memref<12xf32, #tpu.memory_space<smem>>
      %cst_256 = arith.constant 5.14403291E-6 : f32
      %338 = arith.mulf %cst_256, %337 : f32
      %c0_257 = arith.constant 0 : index
      %339 = memref.load %arg7[%c0_257] : memref<12xf32, #tpu.memory_space<smem>>
      %340 = arith.mulf %338, %339 : f32
      %cst_258 = arith.constant 0.000000e+00 : f32
      %341 = arith.addf %cst_258, %340 : f32
      %c1_259 = arith.constant 1 : index
      %342 = memref.load %arg6[%c1_259] : memref<12xf32, #tpu.memory_space<smem>>
      %cst_260 = arith.constant 4.922810e-06 : f32
      %343 = arith.mulf %cst_260, %342 : f32
      %c1_261 = arith.constant 1 : index
      %344 = memref.load %arg7[%c1_261] : memref<12xf32, #tpu.memory_space<smem>>
      %345 = arith.mulf %343, %344 : f32
      %346 = arith.addf %341, %345 : f32
      %c2_262 = arith.constant 2 : index
      %347 = memref.load %arg6[%c2_262] : memref<12xf32, #tpu.memory_space<smem>>
      %cst_263 = arith.constant 5.601064E-6 : f32
      %348 = arith.mulf %cst_263, %347 : f32
      %c2_264 = arith.constant 2 : index
      %349 = memref.load %arg7[%c2_264] : memref<12xf32, #tpu.memory_space<smem>>
      %350 = arith.mulf %348, %349 : f32
      %351 = arith.addf %346, %350 : f32
      %c3_265 = arith.constant 3 : index
      %352 = memref.load %arg6[%c3_265] : memref<12xf32, #tpu.memory_space<smem>>
      %cst_266 = arith.constant 5.601064E-6 : f32
      %353 = arith.mulf %cst_266, %352 : f32
      %c3_267 = arith.constant 3 : index
      %354 = memref.load %arg7[%c3_267] : memref<12xf32, #tpu.memory_space<smem>>
      %355 = arith.mulf %353, %354 : f32
      %356 = arith.addf %351, %355 : f32
      %c4_268 = arith.constant 4 : index
      %357 = memref.load %arg6[%c4_268] : memref<12xf32, #tpu.memory_space<smem>>
      %cst_269 = arith.constant 5.905140e-06 : f32
      %358 = arith.mulf %cst_269, %357 : f32
      %c4_270 = arith.constant 4 : index
      %359 = memref.load %arg7[%c4_270] : memref<12xf32, #tpu.memory_space<smem>>
      %360 = arith.mulf %358, %359 : f32
      %361 = arith.addf %356, %360 : f32
      %c5_271 = arith.constant 5 : index
      %362 = memref.load %arg6[%c5_271] : memref<12xf32, #tpu.memory_space<smem>>
      %cst_272 = arith.constant 5.38050972E-6 : f32
      %363 = arith.mulf %cst_272, %362 : f32
      %c5_273 = arith.constant 5 : index
      %364 = memref.load %arg7[%c5_273] : memref<12xf32, #tpu.memory_space<smem>>
      %365 = arith.mulf %363, %364 : f32
      %366 = arith.addf %361, %365 : f32
      %c6_274 = arith.constant 6 : index
      %367 = memref.load %arg6[%c6_274] : memref<12xf32, #tpu.memory_space<smem>>
      %cst_275 = arith.constant 6.4297933E-6 : f32
      %368 = arith.mulf %cst_275, %367 : f32
      %c6_276 = arith.constant 6 : index
      %369 = memref.load %arg7[%c6_276] : memref<12xf32, #tpu.memory_space<smem>>
      %370 = arith.mulf %368, %369 : f32
      %371 = arith.addf %366, %370 : f32
      %c7_277 = arith.constant 7 : index
      %372 = memref.load %arg6[%c7_277] : memref<12xf32, #tpu.memory_space<smem>>
      %cst_278 = arith.constant 6.4297933E-6 : f32
      %373 = arith.mulf %cst_278, %372 : f32
      %c7_279 = arith.constant 7 : index
      %374 = memref.load %arg7[%c7_279] : memref<12xf32, #tpu.memory_space<smem>>
      %375 = arith.mulf %373, %374 : f32
      %376 = arith.addf %371, %375 : f32
      %c8_280 = arith.constant 8 : index
      %377 = memref.load %arg6[%c8_280] : memref<12xf32, #tpu.memory_space<smem>>
      %cst_281 = arith.constant 6.1218243E-6 : f32
      %378 = arith.mulf %cst_281, %377 : f32
      %c8_282 = arith.constant 8 : index
      %379 = memref.load %arg7[%c8_282] : memref<12xf32, #tpu.memory_space<smem>>
      %380 = arith.mulf %378, %379 : f32
      %381 = arith.addf %376, %380 : f32
      %c9_283 = arith.constant 9 : index
      %382 = memref.load %arg6[%c9_283] : memref<12xf32, #tpu.memory_space<smem>>
      %cst_284 = arith.constant 6.1218243E-6 : f32
      %383 = arith.mulf %cst_284, %382 : f32
      %c9_285 = arith.constant 9 : index
      %384 = memref.load %arg7[%c9_285] : memref<12xf32, #tpu.memory_space<smem>>
      %385 = arith.mulf %383, %384 : f32
      %386 = arith.addf %381, %385 : f32
      %c10_286 = arith.constant 10 : index
      %387 = memref.load %arg6[%c10_286] : memref<12xf32, #tpu.memory_space<smem>>
      %cst_287 = arith.constant 7.02760462E-6 : f32
      %388 = arith.mulf %cst_287, %387 : f32
      %c10_288 = arith.constant 10 : index
      %389 = memref.load %arg7[%c10_288] : memref<12xf32, #tpu.memory_space<smem>>
      %390 = arith.mulf %388, %389 : f32
      %391 = arith.addf %386, %390 : f32
      %c11_289 = arith.constant 11 : index
      %392 = memref.load %arg6[%c11_289] : memref<12xf32, #tpu.memory_space<smem>>
      %cst_290 = arith.constant 7.02760462E-6 : f32
      %393 = arith.mulf %cst_290, %392 : f32
      %c11_291 = arith.constant 11 : index
      %394 = memref.load %arg7[%c11_291] : memref<12xf32, #tpu.memory_space<smem>>
      %395 = arith.mulf %393, %394 : f32
      %396 = arith.addf %391, %395 : f32
      %c0_292 = arith.constant 0 : index
      %397 = memref.load %arg3[%c0_292] : memref<1xf32, #tpu.memory_space<smem>>
      memref.store %396, %arg3[%c0_292] : memref<1xf32, #tpu.memory_space<smem>>
    } else {
    }
    return
  }
  func.func @transform_0(%arg0: i32) -> (i32, i32, i32) {
    %c0_i32 = arith.constant 0 : i32
    %c0_i32_0 = arith.constant 0 : i32
    %c0_i32_1 = arith.constant 0 : i32
    return %c0_i32, %arg0, %c0_i32_0 : i32, i32, i32
  }
  func.func @transform_1(%arg0: i32) -> (i32, i32, i32) {
    %c0_i32 = arith.constant 0 : i32
    %c0_i32_0 = arith.constant 0 : i32
    %c0_i32_1 = arith.constant 0 : i32
    return %c0_i32, %arg0, %c0_i32_0 : i32, i32, i32
  }
  func.func @transform_2(%arg0: i32) -> i32 {
    %c0_i32 = arith.constant 0 : i32
    %c0_i32_0 = arith.constant 0 : i32
    return %c0_i32 : i32
  }
}

</mosaic_0001>

<llo_original>
// kernel: smooth_loss_pallas.1
$region0: #{smooth_loss_pallas.1}
  #allocation0 [shape = 'u32[]', space=smem, size = 0x4, offset = 0x4, fixed_abs, tag = 'smem constant byte address 0x4 - core index']
  #allocation1 [shape = 'u32[72,128]{1,0:T(1,128)}', space=vmem, size = 0x9000, scoped, tag = 'internal scratch']
  #allocation2 [shape = 'f32[3,2,24]{2,1,0:T(2,128)}', space=vmem, size = 0xc00, scoped, tag = 'scratch operand']
  #allocation3 [shape = 'f32[3,2,24]{2,1,0:T(2,128)}', space=vmem, size = 0xc00, scoped, tag = 'scratch operand']
  #allocation4 [shape = 'f32[12]{0:T(128)}', space=smem, size = 0x200, scoped, tag = 'scratch operand']
  #allocation5 [shape = 'f32[12]{0:T(128)}', space=smem, size = 0x200, scoped, tag = 'scratch operand']
  %s0 = inlined_call_operand.vmem [shape: f32[3,16,24], index: 0, kind: input, shape index: {}]
  %s1 = inlined_call_operand.vmem [shape: f32[3,16,24], index: 1, kind: input, shape index: {}]
  %s2 = inlined_call_operand.hbm [shape: f32[1], index: 2, kind: output, shape index: {}]
  %s3 = sld [smem:[#allocation0]]
  $region129: #{smooth_loss_pallas.1} parent=0
    _
  %s5 = ssub.s32 1, %s3
  %s6 = scalar_select 0, %s5, %s3
  $region1: #{smooth_loss_pallas.1} parent=0
    #allocation6 [shape = 'u8[24576]{0}', space=vmem, size = 0x6000, scoped, tag = 'input window, operand 0']
    #allocation7 [shape = 'u8[24576]{0}', space=vmem, size = 0x6000, scoped, tag = 'input window, operand 1']
    #allocation8 [shape = 'u8[512]{0}', space=smem, size = 0x200, scoped, tag = 'output window, operand 0, single buffered']
    #allocation9 [shape = 's32[2]{0}', space=sflag, size = 0x8, scoped, tag = 'scoped memory for smooth_loss_pallas.1']
    %7 = vsyncpa [#allocation9], 0
    loop: start=0, step=1, limit=4
    $region2: #{smooth_loss_pallas.1} parent=1 // loop_pre_header
      _
    $region3: #{smooth_loss_pallas.1} parent=1 // loop_header
      %s9 = sphi 0, %s13
      %p10 = scmp.ge.s32.totalorder %s9, 4
      %s19 = sphi 0, %s21
      %s22 = sphi 0, %s19
      %s23 = sphi 0, %s22
      %s39 = sphi 0, %s23
      %s45 = sphi 0, %s47
      %s48 = sphi 0, %s45
      %s49 = sphi 0, %s48
      %s65 = sphi 0, %s49
      %s69 = sphi 0, %s69
      %s71 = sphi 0, %s69
      %s72 = sphi 0, %s71
      %s86 = sphi 0, %s72
    $region4: #{smooth_loss_pallas.1} parent=1 // loop_header_branch
      %12 = sbr.rel (%p10) target = $region8
    $region5: #{smooth_loss_pallas.1} parent=1 // loop_body
      %s14 = ssub.s32 %s9, 1
      %s15 = ssub.s32 %s9, 2
      %s16 = sadd.s32 %s9, 1
      %s17 = ssub.s32 %s9, %s16
      %p18 = scmp.eq.s32.totalorder %s17, 0
      %s20 = sadd.s32 %s19, 1
      %s21 = scalar_select %p18, %s19, %s20
      %p24 = pneg %p18
      %p25 = scmp.eq.s32.totalorder %s9, 1
      %p26 = por %p24, %p25
      %p27 = scmp.ne.s32.totalorder %s19, %s22
      %p28 = scmp.eq.s32.totalorder %s9, 0
      %p29 = por %p27, %p28
      %p30 = scmp.ne.s32.totalorder %s19, %s22
      %p31 = scmp.eq.s32.totalorder %s14, 1
      %p32 = por %p30, %p31
      %p33 = scmp.ne.s32.totalorder %s22, %s23
      %p34 = scmp.eq.s32.totalorder %s14, 0
      %p35 = por %p33, %p34
      %p36 = scmp.ne.s32.totalorder %s22, %s23
      %p37 = scmp.eq.s32.totalorder %s15, 1
      %p38 = por %p36, %p37
      %p40 = scmp.ne.s32.totalorder %s23, %s39
      %p41 = scmp.eq.s32.totalorder %s15, 0
      %p42 = por %p40, %p41
      %s43 = ssub.s32 %s9, %s16
      %p44 = scmp.eq.s32.totalorder %s43, 0
      %s46 = sadd.s32 %s45, 1
      %s47 = scalar_select %p44, %s45, %s46
      %p50 = pneg %p44
      %p51 = scmp.eq.s32.totalorder %s9, 1
      %p52 = por %p50, %p51
      %p53 = scmp.ne.s32.totalorder %s45, %s48
      %p54 = scmp.eq.s32.totalorder %s9, 0
      %p55 = por %p53, %p54
      %p56 = scmp.ne.s32.totalorder %s45, %s48
      %p57 = scmp.eq.s32.totalorder %s14, 1
      %p58 = por %p56, %p57
      %p59 = scmp.ne.s32.totalorder %s48, %s49
      %p60 = scmp.eq.s32.totalorder %s14, 0
      %p61 = por %p59, %p60
      %p62 = scmp.ne.s32.totalorder %s48, %s49
      %p63 = scmp.eq.s32.totalorder %s15, 1
      %p64 = por %p62, %p63
      %p66 = scmp.ne.s32.totalorder %s49, %s65
      %p67 = scmp.eq.s32.totalorder %s15, 0
      %p68 = por %p66, %p67
      %s70 = sadd.s32 %s69, 1
      %p73 = scmp.eq.s32.totalorder %s9, 1
      %p74 = scmp.ne.s32.totalorder %s69, %s71
      %p75 = scmp.eq.s32.totalorder %s9, 0
      %p76 = por %p74, %p75
      %p77 = scmp.ne.s32.totalorder %s69, %s71
      %p78 = scmp.eq.s32.totalorder %s14, 1
      %p79 = por %p77, %p78
      %p80 = scmp.ne.s32.totalorder %s71, %s72
      %p81 = scmp.eq.s32.totalorder %s14, 0
      %p82 = por %p80, %p81
      %p83 = scmp.ne.s32.totalorder %s71, %s72
      %p84 = scmp.eq.s32.totalorder %s15, 1
      %p85 = por %p83, %p84
      %p87 = scmp.ne.s32.totalorder %s72, %s86
      %p88 = scmp.eq.s32.totalorder %s15, 0
      %p89 = por %p87, %p88
      %p90 = scmp.le.s32.totalorder 1, %s9
      %p91 = scmp.lt.s32.totalorder %s9, 3
      %p92 = pnand %p90, %p91
      %p93 = pneg %p92
      // Predicated region
      $region9: #{smooth_loss_pallas.1} parent=5 // pred_check
        _
      $region10: #{smooth_loss_pallas.1} parent=5 // pred_check_branch
        %95 = sbr.rel (%p92) target = $region12
      $region11: #{smooth_loss_pallas.1} parent=5 // pred_region
        %s96 = ssub.s32 %s9, 1
      $region12: #{smooth_loss_pallas.1} parent=5 // pred_fallthru
        _
      %p97 = scmp.lt.s32.totalorder %s9, 2
      // Predicated region
      $region13: #{smooth_loss_pallas.1} parent=5 // pred_check
        %p98 = pneg %p97
      $region14: #{smooth_loss_pallas.1} parent=5 // pred_check_branch
        %100 = sbr.rel (%p98) target = $region16
      $region15: #{smooth_loss_pallas.1} parent=5 // pred_region
        // Predicated region
        $region17: #{smooth_loss_pallas.1} parent=15 // pred_check
          %p101 = pneg %p29
        $region18: #{smooth_loss_pallas.1} parent=15 // pred_check_branch
          %103 = sbr.rel (%p101) target = $region20
        $region19: #{smooth_loss_pallas.1} parent=15 // pred_region
          %s104 = sand.u32 %s19, 1
          %s105 = sand.u32 %s19, 1
          %s106 = smul.addr %s105, 24
          %s107 = scalar_lea.vmem [#allocation6], %s106
          %s108 = smul.addr %s9, 8
          %s109 = scalar_lea.vmem %s0, %s108
          // Predicated region
          $region21: #{smooth_loss_pallas.1} parent=19 // pred_check
            _
          $region22: #{smooth_loss_pallas.1} parent=19 // pred_check_branch
            %111 = sbr.rel (0) target = $region24
          $region23: #{smooth_loss_pallas.1} parent=19 // pred_region
            // Predicated region
            $region25: #{smooth_loss_pallas.1} parent=23 // pred_check
              _
            $region26: #{smooth_loss_pallas.1} parent=23 // pred_check_branch
              %113 = sbr.rel (0) target = $region28
            $region27: #{smooth_loss_pallas.1} parent=23 // pred_region
              // Predicated region
              $region40: #{smooth_loss_pallas.1} parent=27 // pred_check
                _
              $region41: #{smooth_loss_pallas.1} parent=27 // pred_check_branch
                %133 = sbr.rel (0) target = $region43
              $region42: #{smooth_loss_pallas.1} parent=27 // pred_region
                loop: start=0, step=1, limit=1
                $region44: #{smooth_loss_pallas.1} parent=42 // loop_pre_header
                  _
                $region45: #{smooth_loss_pallas.1} parent=42 // loop_header
                  %s135 = sphi 0, %s139
                  %p136 = scmp.ge.s32.totalorder %s135, 1
                  %s140 = sphi %s109, %s109
                  %s141 = sphi %s107, %s107
                $region46: #{smooth_loss_pallas.1} parent=42 // loop_header_branch
                  %138 = sbr.rel (%p136) target = $region50
                $region47: #{smooth_loss_pallas.1} parent=42 // loop_body
                  %v142 = vld [vmem:[%s140] sm:$0xff]
                  %143 = vst [vmem:[%s141] sm:$0xff] %v142
                  %v144 = vld [vmem:[%s140 + $0x10] sm:$0xff]
                  %145 = vst [vmem:[%s141 + $0x8] sm:$0xff] %v144
                  %v146 = vld [vmem:[%s140 + $0x20] sm:$0xff]
                  %147 = vst [vmem:[%s141 + $0x10] sm:$0xff] %v146
                $region48: #{smooth_loss_pallas.1} parent=42 // loop_footer
                  %s139 = sadd.s32 1, %s135
                $region49: #{smooth_loss_pallas.1} parent=42 // loop_footer_branch
                  %134 = sbr.rel target = $region45
                $region50: #{smooth_loss_pallas.1} parent=42 // loop_exit
                  _
              $region43: #{smooth_loss_pallas.1} parent=27 // pred_fallthru
                _
              // Predicated region
              $region51: #{smooth_loss_pallas.1} parent=27 // pred_check
                _
              $region52: #{smooth_loss_pallas.1} parent=27 // pred_check_branch
                %149 = sbr.rel target = $region54
              $region53: #{smooth_loss_pallas.1} parent=27 // pred_region
                _
              $region54: #{smooth_loss_pallas.1} parent=27 // pred_fallthru
                _
            $region28: #{smooth_loss_pallas.1} parent=23 // pred_fallthru
              _
            // Predicated region
            $region29: #{smooth_loss_pallas.1} parent=23 // pred_check
              _
            $region30: #{smooth_loss_pallas.1} parent=23 // pred_check_branch
              %115 = sbr.rel target = $region32
            $region31: #{smooth_loss_pallas.1} parent=23 // pred_region
              %s117 = ssub.s32 256, 1
              loop: start=0, step=1, limit=1
              $region33: #{smooth_loss_pallas.1} parent=31 // loop_pre_header
                _
              $region34: #{smooth_loss_pallas.1} parent=31 // loop_header
                %s119 = sphi 0, %s123
                %p120 = scmp.ge.s32.totalorder %s119, 1
                %s124 = sphi %s109, %s109
                %s125 = sphi %s107, %s107
              $region35: #{smooth_loss_pallas.1} parent=31 // loop_header_branch
                %122 = sbr.rel (%p120) target = $region39
              $region36: #{smooth_loss_pallas.1} parent=31 // loop_body
                %v126 = vld [vmem:[%s124] sm:%s117]
                %127 = vst [vmem:[%s125] sm:%s117] %v126
                %v128 = vld [vmem:[%s124 + $0x10] sm:%s117]
                %129 = vst [vmem:[%s125 + $0x8] sm:%s117] %v128
                %v130 = vld [vmem:[%s124 + $0x20] sm:%s117]
                %131 = vst [vmem:[%s125 + $0x10] sm:%s117] %v130
              $region37: #{smooth_loss_pallas.1} parent=31 // loop_footer
                %s123 = sadd.s32 1, %s119
              $region38: #{smooth_loss_pallas.1} parent=31 // loop_footer_branch
                %118 = sbr.rel target = $region34
              $region39: #{smooth_loss_pallas.1} parent=31 // loop_exit
                _
            $region32: #{smooth_loss_pallas.1} parent=23 // pred_fallthru
              _
          $region24: #{smooth_loss_pallas.1} parent=19 // pred_fallthru
            _
          %150 = vnop
        $region20: #{smooth_loss_pallas.1} parent=15 // pred_fallthru
          _
        // Predicated region
        $region55: #{smooth_loss_pallas.1} parent=15 // pred_check
          %p151 = pneg %p55
        $region56: #{smooth_loss_pallas.1} parent=15 // pred_check_branch
          %153 = sbr.rel (%p151) target = $region58
        $region57: #{smooth_loss_pallas.1} parent=15 // pred_region
          %s154 = sand.u32 %s45, 1
          %s155 = sand.u32 %s45, 1
          %s156 = smul.addr %s155, 24
          %s157 = scalar_lea.vmem [#allocation7], %s156
          %s158 = smul.addr %s9, 8
          %s159 = scalar_lea.vmem %s1, %s158
          // Predicated region
          $region59: #{smooth_loss_pallas.1} parent=57 // pred_check
            _
          $region60: #{smooth_loss_pallas.1} parent=57 // pred_check_branch
            %161 = sbr.rel (0) target = $region62
          $region61: #{smooth_loss_pallas.1} parent=57 // pred_region
            // Predicated region
            $region63: #{smooth_loss_pallas.1} parent=61 // pred_check
              _
            $region64: #{smooth_loss_pallas.1} parent=61 // pred_check_branch
              %163 = sbr.rel (0) target = $region66
            $region65: #{smooth_loss_pallas.1} parent=61 // pred_region
              // Predicated region
              $region78: #{smooth_loss_pallas.1} parent=65 // pred_check
                _
              $region79: #{smooth_loss_pallas.1} parent=65 // pred_check_branch
                %183 = sbr.rel (0) target = $region81
              $region80: #{smooth_loss_pallas.1} parent=65 // pred_region
                loop: start=0, step=1, limit=1
                $region82: #{smooth_loss_pallas.1} parent=80 // loop_pre_header
                  _
                $region83: #{smooth_loss_pallas.1} parent=80 // loop_header
                  %s185 = sphi 0, %s189
                  %p186 = scmp.ge.s32.totalorder %s185, 1
                  %s190 = sphi %s159, %s159
                  %s191 = sphi %s157, %s157
                $region84: #{smooth_loss_pallas.1} parent=80 // loop_header_branch
                  %188 = sbr.rel (%p186) target = $region88
                $region85: #{smooth_loss_pallas.1} parent=80 // loop_body
                  %v192 = vld [vmem:[%s190] sm:$0xff]
                  %193 = vst [vmem:[%s191] sm:$0xff] %v192
                  %v194 = vld [vmem:[%s190 + $0x10] sm:$0xff]
                  %195 = vst [vmem:[%s191 + $0x8] sm:$0xff] %v194
                  %v196 = vld [vmem:[%s190 + $0x20] sm:$0xff]
                  %197 = vst [vmem:[%s191 + $0x10] sm:$0xff] %v196
                $region86: #{smooth_loss_pallas.1} parent=80 // loop_footer
                  %s189 = sadd.s32 1, %s185
                $region87: #{smooth_loss_pallas.1} parent=80 // loop_footer_branch
                  %184 = sbr.rel target = $region83
                $region88: #{smooth_loss_pallas.1} parent=80 // loop_exit
                  _
              $region81: #{smooth_loss_pallas.1} parent=65 // pred_fallthru
                _
              // Predicated region
              $region89: #{smooth_loss_pallas.1} parent=65 // pred_check
                _
              $region90: #{smooth_loss_pallas.1} parent=65 // pred_check_branch
                %199 = sbr.rel target = $region92
              $region91: #{smooth_loss_pallas.1} parent=65 // pred_region
                _
              $region92: #{smooth_loss_pallas.1} parent=65 // pred_fallthru
                _
            $region66: #{smooth_loss_pallas.1} parent=61 // pred_fallthru
              _
            // Predicated region
            $region67: #{smooth_loss_pallas.1} parent=61 // pred_check
              _
            $region68: #{smooth_loss_pallas.1} parent=61 // pred_check_branch
              %165 = sbr.rel target = $region70
            $region69: #{smooth_loss_pallas.1} parent=61 // pred_region
              %s167 = ssub.s32 256, 1
              loop: start=0, step=1, limit=1
              $region71: #{smooth_loss_pallas.1} parent=69 // loop_pre_header
                _
              $region72: #{smooth_loss_pallas.1} parent=69 // loop_header
                %s169 = sphi 0, %s173
                %p170 = scmp.ge.s32.totalorder %s169, 1
                %s174 = sphi %s159, %s159
                %s175 = sphi %s157, %s157
              $region73: #{smooth_loss_pallas.1} parent=69 // loop_header_branch
                %172 = sbr.rel (%p170) target = $region77
              $region74: #{smooth_loss_pallas.1} parent=69 // loop_body
                %v176 = vld [vmem:[%s174] sm:%s167]
                %177 = vst [vmem:[%s175] sm:%s167] %v176
                %v178 = vld [vmem:[%s174 + $0x10] sm:%s167]
                %179 = vst [vmem:[%s175 + $0x8] sm:%s167] %v178
                %v180 = vld [vmem:[%s174 + $0x20] sm:%s167]
                %181 = vst [vmem:[%s175 + $0x10] sm:%s167] %v180
              $region75: #{smooth_loss_pallas.1} parent=69 // loop_footer
                %s173 = sadd.s32 1, %s169
              $region76: #{smooth_loss_pallas.1} parent=69 // loop_footer_branch
                %168 = sbr.rel target = $region72
              $region77: #{smooth_loss_pallas.1} parent=69 // loop_exit
                _
            $region70: #{smooth_loss_pallas.1} parent=61 // pred_fallthru
              _
          $region62: #{smooth_loss_pallas.1} parent=57 // pred_fallthru
            _
          %200 = vnop
        $region58: #{smooth_loss_pallas.1} parent=15 // pred_fallthru
          _
      $region16: #{smooth_loss_pallas.1} parent=5 // pred_fallthru
        _
      %p201 = scmp.le.s32.totalorder 1, %s9
      %p202 = scmp.lt.s32.totalorder %s9, 3
      %p203 = pnand %p201, %p202
      %p204 = pneg %p203
      // Predicated region
      $region93: #{smooth_loss_pallas.1} parent=5 // pred_check
        _
      $region94: #{smooth_loss_pallas.1} parent=5 // pred_check_branch
        %206 = sbr.rel (%p203) target = $region96
      $region95: #{smooth_loss_pallas.1} parent=5 // pred_region
        %s207 = ssub.s32 %s9, 1
        %s208 = sand.u32 %s22, 1
        %s209 = sand.u32 %s22, 1
        %s210 = smul.addr %s209, 24
        %s211 = scalar_lea.vmem [#allocation6], %s210
        // Predicated region
        $region97: #{smooth_loss_pallas.1} parent=95 // pred_check
          %p212 = pneg %p35
        $region98: #{smooth_loss_pallas.1} parent=95 // pred_check_branch
          %214 = sbr.rel (%p212) target = $region100
        $region99: #{smooth_loss_pallas.1} parent=95 // pred_region
          _
        $region100: #{smooth_loss_pallas.1} parent=95 // pred_fallthru
          _
        %s215 = sand.u32 %s48, 1
        %s216 = sand.u32 %s48, 1
        %s217 = smul.addr %s216, 24
        %s218 = scalar_lea.vmem [#allocation7], %s217
        // Predicated region
        $region101: #{smooth_loss_pallas.1} parent=95 // pred_check
          %p219 = pneg %p61
        $region102: #{smooth_loss_pallas.1} parent=95 // pred_check_branch
          %221 = sbr.rel (%p219) target = $region104
        $region103: #{smooth_loss_pallas.1} parent=95 // pred_region
          _
        $region104: #{smooth_loss_pallas.1} parent=95 // pred_fallthru
          _
        %s222 = sand.u32 %s22, 1
        %s223 = sand.u32 %s22, 1
        %s224 = smul.addr %s223, 24
        %s225 = scalar_lea.vmem [#allocation6], %s224
        %p226 = pneg %p35
        %p227 = pneg %p32
        %s228 = sand.u32 %s48, 1
        %s229 = sand.u32 %s48, 1
        %s230 = smul.addr %s229, 24
        %s231 = scalar_lea.vmem [#allocation7], %s230
        %p232 = pneg %p61
        %p233 = pneg %p58
        %p234 = pneg %p82
        %p235 = pneg %p79
        %p236 = scmp.eq.s32.totalorder %s14, 0
        // Predicated region
        $region105: #{smooth_loss_pallas.1} parent=95 // pred_check
          %p237 = pneg %p236
        $region106: #{smooth_loss_pallas.1} parent=95 // pred_check_branch
          %239 = sbr.rel (%p237) target = $region108
        $region107: #{smooth_loss_pallas.1} parent=95 // pred_region
          %s240 = scalar_lea.smem [#allocation4], 0
          %241 = sst [smem:[%s240]] 0.0
          %s242 = scalar_lea.smem [#allocation5], 0
          %243 = sst [smem:[%s242]] 0.0
          %s244 = scalar_lea.smem [#allocation4], 1
          %245 = sst [smem:[%s244]] 0.0
          %s246 = scalar_lea.smem [#allocation5], 1
          %247 = sst [smem:[%s246]] 0.0
          %s248 = scalar_lea.smem [#allocation4], 2
          %249 = sst [smem:[%s248]] 0.0
          %s250 = scalar_lea.smem [#allocation5], 2
          %251 = sst [smem:[%s250]] 0.0
          %s252 = scalar_lea.smem [#allocation4], 3
          %253 = sst [smem:[%s252]] 0.0
          %s254 = scalar_lea.smem [#allocation5], 3
          %255 = sst [smem:[%s254]] 0.0
          %s256 = scalar_lea.smem [#allocation4], 4
          %257 = sst [smem:[%s256]] 0.0
          %s258 = scalar_lea.smem [#allocation5], 4
          %259 = sst [smem:[%s258]] 0.0
          %s260 = scalar_lea.smem [#allocation4], 5
          %261 = sst [smem:[%s260]] 0.0
          %s262 = scalar_lea.smem [#allocation5], 5
          %263 = sst [smem:[%s262]] 0.0
          %s264 = scalar_lea.smem [#allocation4], 6
          %265 = sst [smem:[%s264]] 0.0
          %s266 = scalar_lea.smem [#allocation5], 6
          %267 = sst [smem:[%s266]] 0.0
          %s268 = scalar_lea.smem [#allocation4], 7
          %269 = sst [smem:[%s268]] 0.0
          %s270 = scalar_lea.smem [#allocation5], 7
          %271 = sst [smem:[%s270]] 0.0
          %s272 = scalar_lea.smem [#allocation4], 8
          %273 = sst [smem:[%s272]] 0.0
          %s274 = scalar_lea.smem [#allocation5], 8
          %275 = sst [smem:[%s274]] 0.0
          %s276 = scalar_lea.smem [#allocation4], 9
          %277 = sst [smem:[%s276]] 0.0
          %s278 = scalar_lea.smem [#allocation5], 9
          %279 = sst [smem:[%s278]] 0.0
          %s280 = scalar_lea.smem [#allocation4], 10
          %281 = sst [smem:[%s280]] 0.0
          %s282 = scalar_lea.smem [#allocation5], 10
          %283 = sst [smem:[%s282]] 0.0
          %s284 = scalar_lea.smem [#allocation4], 11
          %285 = sst [smem:[%s284]] 0.0
          %s286 = scalar_lea.smem [#allocation5], 11
          %287 = sst [smem:[%s286]] 0.0
        $region108: #{smooth_loss_pallas.1} parent=95 // pred_fallthru
          _
        %v288 = vld [vmem:[%s211 + $0x1] sm:$0x7f]
        %v289 = vld [vmem:[%s211 + $0x9] sm:$0x7f]
        %v290 = vld [vmem:[%s211 + $0x11] sm:$0x7f]
        %v291 = vld [vmem:[%s211] sm:$0x7f]
        %v292 = vld [vmem:[%s211 + $0x8] sm:$0x7f]
        %v293 = vld [vmem:[%s211 + $0x10] sm:$0x7f]
        %v294 = vld [vmem:[%s218 + $0x1] sm:$0x7f]
        %v295 = vld [vmem:[%s218 + $0x9] sm:$0x7f]
        %v296 = vld [vmem:[%s218 + $0x11] sm:$0x7f]
        %v297 = vld [vmem:[%s218] sm:$0x7f]
        %v298 = vld [vmem:[%s218 + $0x8] sm:$0x7f]
        %v299 = vld [vmem:[%s218 + $0x10] sm:$0x7f]
        %v300 = vsub.f32 %v288, %v291
        %v301 = vsub.f32 %v289, %v292
        %v302 = vsub.f32 %v290, %v293
        %v303 = vmul.f32 %v300, %v300
        %v304 = vmul.f32 %v301, %v301
        %v305 = vmul.f32 %v302, %v302
        %vm306 = vcmask 194560
        %v307 = vsel %vm306, %v303, 0.0
        %v308 = vsel %vm306, %v304, 0.0
        %v309 = vadd.f32 %v307, %v308
        %v310 = vsel %vm306, %v305, 0.0
        %v311 = vadd.f32 %v309, %v310
        %v312 = vmul.f32 %v311, -0.005
        %v313 = vmul.f32 %v312, 1.442695
        %v314 = vpow.pop %v313
        %v315 = vsel %vm306, %v314, 0.0
        %316 = vadd.xlane.f32.xlu0 %v315
        %v317 = vpop.xlane.xlu0 %316
        %v318 = vrot.slane %v317, 4
        %v319 = vadd.f32 %v317, %v318
        %v320 = vrot.slane %v319, 2
        %v321 = vadd.f32 %v319, %v320
        %v322 = vrot.slane %v321, 1
        %v323 = vadd.f32 %v321, %v322
        %s324 = vtos %v323
        %v325 = vsub.f32 %v294, %v297
        %v326 = vsub.f32 %v295, %v298
        %v327 = vsub.f32 %v296, %v299
        %v328 = vand.u32 2147483647, %v325
        %v329 = vand.u32 2147483647, %v326
        %v330 = vand.u32 2147483647, %v327
        %v331 = vsel %vm306, %v328, 0.0
        %v332 = vsel %vm306, %v329, 0.0
        %v333 = vadd.f32 %v331, %v332
        %v334 = vsel %vm306, %v330, 0.0
        %v335 = vadd.f32 %v333, %v334
        %v336 = vsel %vm306, %v335, 0.0
        %337 = vadd.xlane.f32.xlu0 %v336
        %v338 = vpop.xlane.xlu0 %337
        %v339 = vrot.slane %v338, 4
        %v340 = vadd.f32 %v338, %v339
        %v341 = vrot.slane %v340, 2
        %v342 = vadd.f32 %v340, %v341
        %v343 = vrot.slane %v342, 1
        %v344 = vadd.f32 %v342, %v343
        %s345 = vtos %v344
        %s346 = sld [smem:[#allocation4]]
        %s347 = sadd.f32 %s346, %s324
        %s348 = scalar_lea.smem [#allocation4], 0
        %349 = sst [smem:[%s348]] %s347
        %s350 = sld [smem:[#allocation5]]
        %s351 = sadd.f32 %s350, %s345
        %s352 = scalar_lea.smem [#allocation5], 0
        %353 = sst [smem:[%s352]] %s351
        %v354 = vld [vmem:[%s211] sm:$0xff]
        %v355 = vld [vmem:[%s211 + $0x8] sm:$0xff]
        %v356 = vld [vmem:[%s211 + $0x10] sm:$0xff]
        %v357 = vld [vmem:[%s218] sm:$0xff]
        %v358 = vld [vmem:[%s218 + $0x8] sm:$0xff]
        %v359 = vld [vmem:[%s218 + $0x10] sm:$0xff]
        %363 = vrot.lane.b32.xlu0 %v354, 1
        %v364 = vpop.permute.xlu0 %363
        %365 = vrot.lane.b32.xlu0 %v355, 1
        %v366 = vpop.permute.xlu0 %365
        %367 = vrot.lane.b32.xlu0 %v356, 1
        %v368 = vpop.permute.xlu0 %367
        %v372 = vsub.f32 %v354, %v364
        %v373 = vsub.f32 %v355, %v366
        %v374 = vsub.f32 %v356, %v368
        %v375 = vmul.f32 %v372, %v372
        %v376 = vmul.f32 %v373, %v373
        %v377 = vmul.f32 %v374, %v374
        %vm378 = vcmask 195592
        %v379 = vsel %vm378, %v375, 0.0
        %v380 = vsel %vm378, %v376, 0.0
        %v381 = vadd.f32 %v379, %v380
        %v382 = vsel %vm378, %v377, 0.0
        %v383 = vadd.f32 %v381, %v382
        %v384 = vmul.f32 %v383, -0.005
        %v385 = vmul.f32 %v384, 1.442695
        %v386 = vpow.pop %v385
        %388 = vrot.lane.b32.xlu0 %v386, 127
        %v389 = vpop.permute.xlu0 %388
        %vm391 = vcmask 187392
        %v392 = vsel %vm391, %v389, 0.0
        %393 = vadd.xlane.f32.xlu0 %v392
        %v394 = vpop.xlane.xlu0 %393
        %v395 = vrot.slane %v394, 4
        %v396 = vadd.f32 %v394, %v395
        %v397 = vrot.slane %v396, 2
        %v398 = vadd.f32 %v396, %v397
        %v399 = vrot.slane %v398, 1
        %v400 = vadd.f32 %v398, %v399
        %s401 = vtos %v400
        %405 = vrot.lane.b32.xlu0 %v357, 1
        %v406 = vpop.permute.xlu0 %405
        %407 = vrot.lane.b32.xlu0 %v358, 1
        %v408 = vpop.permute.xlu0 %407
        %409 = vrot.lane.b32.xlu0 %v359, 1
        %v410 = vpop.permute.xlu0 %409
        %v414 = vsub.f32 %v357, %v406
        %v415 = vsub.f32 %v358, %v408
        %v416 = vsub.f32 %v359, %v410
        %v417 = vand.u32 2147483647, %v414
        %v418 = vand.u32 2147483647, %v415
        %v419 = vand.u32 2147483647, %v416
        %v420 = vsel %vm378, %v417, 0.0
        %v421 = vsel %vm378, %v418, 0.0
        %v422 = vadd.f32 %v420, %v421
        %v423 = vsel %vm378, %v419, 0.0
        %v424 = vadd.f32 %v422, %v423
        %426 = vrot.lane.b32.xlu0 %v424, 127
        %v427 = vpop.permute.xlu0 %426
        %v429 = vsel %vm391, %v427, 0.0
        %430 = vadd.xlane.f32.xlu0 %v429
        %v431 = vpop.xlane.xlu0 %430
        %v432 = vrot.slane %v431, 4
        %v433 = vadd.f32 %v431, %v432
        %v434 = vrot.slane %v433, 2
        %v435 = vadd.f32 %v433, %v434
        %v436 = vrot.slane %v435, 1
        %v437 = vadd.f32 %v435, %v436
        %s438 = vtos %v437
        %s439 = sld [smem:[#allocation4 + $0x1]]
        %s440 = sadd.f32 %s439, %s401
        %s441 = scalar_lea.smem [#allocation4], 1
        %442 = sst [smem:[%s441]] %s440
        %s443 = sld [smem:[#allocation5 + $0x1]]
        %s444 = sadd.f32 %s443, %s438
        %s445 = scalar_lea.smem [#allocation5], 1
        %446 = sst [smem:[%s445]] %s444
        %v447 = vld [vmem:[%s211 + $0x1] sm:$0x7f]
        %v448 = vld [vmem:[%s211 + $0x9] sm:$0x7f]
        %v449 = vld [vmem:[%s211 + $0x11] sm:$0x7f]
        %v450 = vld [vmem:[%s211] sm:$0x7f]
        %v451 = vld [vmem:[%s211 + $0x8] sm:$0x7f]
        %v452 = vld [vmem:[%s211 + $0x10] sm:$0x7f]
        %v453 = vld [vmem:[%s218 + $0x1] sm:$0x7f]
        %v454 = vld [vmem:[%s218 + $0x9] sm:$0x7f]
        %v455 = vld [vmem:[%s218 + $0x11] sm:$0x7f]
        %v456 = vld [vmem:[%s218] sm:$0x7f]
        %v457 = vld [vmem:[%s218 + $0x8] sm:$0x7f]
        %v458 = vld [vmem:[%s218 + $0x10] sm:$0x7f]
        %462 = vrot.lane.b32.xlu0 %v450, 1
        %v463 = vpop.permute.xlu0 %462
        %464 = vrot.lane.b32.xlu0 %v451, 1
        %v465 = vpop.permute.xlu0 %464
        %466 = vrot.lane.b32.xlu0 %v452, 1
        %v467 = vpop.permute.xlu0 %466
        %v471 = vsub.f32 %v447, %v463
        %v472 = vsub.f32 %v448, %v465
        %v473 = vsub.f32 %v449, %v467
        %v474 = vmul.f32 %v471, %v471
        %v475 = vmul.f32 %v472, %v472
        %v476 = vmul.f32 %v473, %v473
        %vm477 = vcmask 194568
        %v478 = vsel %vm477, %v474, 0.0
        %v479 = vsel %vm477, %v475, 0.0
        %v480 = vadd.f32 %v478, %v479
        %v481 = vsel %vm477, %v476, 0.0
        %v482 = vadd.f32 %v480, %v481
        %v483 = vmul.f32 %v482, -0.005
        %v484 = vmul.f32 %v483, 1.442695
        %v485 = vpow.pop %v484
        %487 = vrot.lane.b32.xlu0 %v485, 127
        %v488 = vpop.permute.xlu0 %487
        %vm490 = vcmask 186368
        %v491 = vsel %vm490, %v488, 0.0
        %492 = vadd.xlane.f32.xlu0 %v491
        %v493 = vpop.xlane.xlu0 %492
        %v494 = vrot.slane %v493, 4
        %v495 = vadd.f32 %v493, %v494
        %v496 = vrot.slane %v495, 2
        %v497 = vadd.f32 %v495, %v496
        %v498 = vrot.slane %v497, 1
        %v499 = vadd.f32 %v497, %v498
        %s500 = vtos %v499
        %504 = vrot.lane.b32.xlu0 %v456, 1
        %v505 = vpop.permute.xlu0 %504
        %506 = vrot.lane.b32.xlu0 %v457, 1
        %v507 = vpop.permute.xlu0 %506
        %508 = vrot.lane.b32.xlu0 %v458, 1
        %v509 = vpop.permute.xlu0 %508
        %v513 = vsub.f32 %v453, %v505
        %v514 = vsub.f32 %v454, %v507
        %v515 = vsub.f32 %v455, %v509
        %v516 = vand.u32 2147483647, %v513
        %v517 = vand.u32 2147483647, %v514
        %v518 = vand.u32 2147483647, %v515
        %v519 = vsel %vm477, %v516, 0.0
        %v520 = vsel %vm477, %v517, 0.0
        %v521 = vadd.f32 %v519, %v520
        %v522 = vsel %vm477, %v518, 0.0
        %v523 = vadd.f32 %v521, %v522
        %525 = vrot.lane.b32.xlu0 %v523, 127
        %v526 = vpop.permute.xlu0 %525
        %v528 = vsel %vm490, %v526, 0.0
        %529 = vadd.xlane.f32.xlu0 %v528
        %v530 = vpop.xlane.xlu0 %529
        %v531 = vrot.slane %v530, 4
        %v532 = vadd.f32 %v530, %v531
        %v533 = vrot.slane %v532, 2
        %v534 = vadd.f32 %v532, %v533
        %v535 = vrot.slane %v534, 1
        %v536 = vadd.f32 %v534, %v535
        %s537 = vtos %v536
        %s538 = sld [smem:[#allocation4 + $0x2]]
        %s539 = sadd.f32 %s538, %s500
        %s540 = scalar_lea.smem [#allocation4], 2
        %541 = sst [smem:[%s540]] %s539
        %s542 = sld [smem:[#allocation5 + $0x2]]
        %s543 = sadd.f32 %s542, %s537
        %s544 = scalar_lea.smem [#allocation5], 2
        %545 = sst [smem:[%s544]] %s543
        %v546 = vld [vmem:[%s211 + $0x1] sm:$0x7f]
        %v547 = vld [vmem:[%s211 + $0x9] sm:$0x7f]
        %v548 = vld [vmem:[%s211 + $0x11] sm:$0x7f]
        %v549 = vld [vmem:[%s211] sm:$0x7f]
        %v550 = vld [vmem:[%s211 + $0x8] sm:$0x7f]
        %v551 = vld [vmem:[%s211 + $0x10] sm:$0x7f]
        %v552 = vld [vmem:[%s218 + $0x1] sm:$0x7f]
        %v553 = vld [vmem:[%s218 + $0x9] sm:$0x7f]
        %v554 = vld [vmem:[%s218 + $0x11] sm:$0x7f]
        %v555 = vld [vmem:[%s218] sm:$0x7f]
        %v556 = vld [vmem:[%s218 + $0x8] sm:$0x7f]
        %v557 = vld [vmem:[%s218 + $0x10] sm:$0x7f]
        %561 = vrot.lane.b32.xlu0 %v549, 127
        %v562 = vpop.permute.xlu0 %561
        %563 = vrot.lane.b32.xlu0 %v550, 127
        %v564 = vpop.permute.xlu0 %563
        %565 = vrot.lane.b32.xlu0 %v551, 127
        %v566 = vpop.permute.xlu0 %565
        %v570 = vsub.f32 %v546, %v562
        %v571 = vsub.f32 %v547, %v564
        %v572 = vsub.f32 %v548, %v566
        %v573 = vmul.f32 %v570, %v570
        %v574 = vmul.f32 %v571, %v571
        %v575 = vmul.f32 %v572, %v572
        %v576 = vsel %vm490, %v573, 0.0
        %v577 = vsel %vm490, %v574, 0.0
        %v578 = vadd.f32 %v576, %v577
        %v579 = vsel %vm490, %v575, 0.0
        %v580 = vadd.f32 %v578, %v579
        %v581 = vmul.f32 %v580, -0.005
        %v582 = vmul.f32 %v581, 1.442695
        %v583 = vpow.pop %v582
        %v584 = vsel %vm490, %v583, 0.0
        %585 = vadd.xlane.f32.xlu0 %v584
        %v586 = vpop.xlane.xlu0 %585
        %v587 = vrot.slane %v586, 4
        %v588 = vadd.f32 %v586, %v587
        %v589 = vrot.slane %v588, 2
        %v590 = vadd.f32 %v588, %v589
        %v591 = vrot.slane %v590, 1
        %v592 = vadd.f32 %v590, %v591
        %s593 = vtos %v592
        %597 = vrot.lane.b32.xlu0 %v555, 127
        %v598 = vpop.permute.xlu0 %597
        %599 = vrot.lane.b32.xlu0 %v556, 127
        %v600 = vpop.permute.xlu0 %599
        %601 = vrot.lane.b32.xlu0 %v557, 127
        %v602 = vpop.permute.xlu0 %601
        %v606 = vsub.f32 %v552, %v598
        %v607 = vsub.f32 %v553, %v600
        %v608 = vsub.f32 %v554, %v602
        %v609 = vand.u32 2147483647, %v606
        %v610 = vand.u32 2147483647, %v607
        %v611 = vand.u32 2147483647, %v608
        %v612 = vsel %vm490, %v609, 0.0
        %v613 = vsel %vm490, %v610, 0.0
        %v614 = vadd.f32 %v612, %v613
        %v615 = vsel %vm490, %v611, 0.0
        %v616 = vadd.f32 %v614, %v615
        %v617 = vsel %vm490, %v616, 0.0
        %618 = vadd.xlane.f32.xlu0 %v617
        %v619 = vpop.xlane.xlu0 %618
        %v620 = vrot.slane %v619, 4
        %v621 = vadd.f32 %v619, %v620
        %v622 = vrot.slane %v621, 2
        %v623 = vadd.f32 %v621, %v622
        %v624 = vrot.slane %v623, 1
        %v625 = vadd.f32 %v623, %v624
        %s626 = vtos %v625
        %s627 = sld [smem:[#allocation4 + $0x3]]
        %s628 = sadd.f32 %s627, %s593
        %s629 = scalar_lea.smem [#allocation4], 3
        %630 = sst [smem:[%s629]] %s628
        %s631 = sld [smem:[#allocation5 + $0x3]]
        %s632 = sadd.f32 %s631, %s626
        %s633 = scalar_lea.smem [#allocation5], 3
        %634 = sst [smem:[%s633]] %s632
        %v635 = vld [vmem:[%s211 + $0x2] sm:$0x3f]
        %v636 = vld [vmem:[%s211 + $0xa] sm:$0x3f]
        %v637 = vld [vmem:[%s211 + $0x12] sm:$0x3f]
        %v638 = vld [vmem:[%s211] sm:$0x3f]
        %v639 = vld [vmem:[%s211 + $0x8] sm:$0x3f]
        %v640 = vld [vmem:[%s211 + $0x10] sm:$0x3f]
        %v641 = vld [vmem:[%s218 + $0x2] sm:$0x3f]
        %v642 = vld [vmem:[%s218 + $0xa] sm:$0x3f]
        %v643 = vld [vmem:[%s218 + $0x12] sm:$0x3f]
        %v644 = vld [vmem:[%s218] sm:$0x3f]
        %v645 = vld [vmem:[%s218 + $0x8] sm:$0x3f]
        %v646 = vld [vmem:[%s218 + $0x10] sm:$0x3f]
        %v647 = vsub.f32 %v635, %v638
        %v648 = vsub.f32 %v636, %v639
        %v649 = vsub.f32 %v637, %v640
        %v650 = vmul.f32 %v647, %v647
        %v651 = vmul.f32 %v648, %v648
        %v652 = vmul.f32 %v649, %v649
        %vm653 = vcmask 193536
        %v654 = vsel %vm653, %v650, 0.0
        %v655 = vsel %vm653, %v651, 0.0
        %v656 = vadd.f32 %v654, %v655
        %v657 = vsel %vm653, %v652, 0.0
        %v658 = vadd.f32 %v656, %v657
        %v659 = vmul.f32 %v658, -0.005
        %v660 = vmul.f32 %v659, 1.442695
        %v661 = vpow.pop %v660
        %v662 = vsel %vm653, %v661, 0.0
        %663 = vadd.xlane.f32.xlu0 %v662
        %v664 = vpop.xlane.xlu0 %663
        %v665 = vrot.slane %v664, 4
        %v666 = vadd.f32 %v664, %v665
        %v667 = vrot.slane %v666, 2
        %v668 = vadd.f32 %v666, %v667
        %v669 = vrot.slane %v668, 1
        %v670 = vadd.f32 %v668, %v669
        %s671 = vtos %v670
        %v672 = vsub.f32 %v641, %v644
        %v673 = vsub.f32 %v642, %v645
        %v674 = vsub.f32 %v643, %v646
        %v675 = vand.u32 2147483647, %v672
        %v676 = vand.u32 2147483647, %v673
        %v677 = vand.u32 2147483647, %v674
        %v678 = vsel %vm653, %v675, 0.0
        %v679 = vsel %vm653, %v676, 0.0
        %v680 = vadd.f32 %v678, %v679
        %v681 = vsel %vm653, %v677, 0.0
        %v682 = vadd.f32 %v680, %v681
        %v683 = vsel %vm653, %v682, 0.0
        %684 = vadd.xlane.f32.xlu0 %v683
        %v685 = vpop.xlane.xlu0 %684
        %v686 = vrot.slane %v685, 4
        %v687 = vadd.f32 %v685, %v686
        %v688 = vrot.slane %v687, 2
        %v689 = vadd.f32 %v687, %v688
        %v690 = vrot.slane %v689, 1
        %v691 = vadd.f32 %v689, %v690
        %s692 = vtos %v691
        %s693 = sld [smem:[#allocation4 + $0x4]]
        %s694 = sadd.f32 %s693, %s671
        %s695 = scalar_lea.smem [#allocation4], 4
        %696 = sst [smem:[%s695]] %s694
        %s697 = sld [smem:[#allocation5 + $0x4]]
        %s698 = sadd.f32 %s697, %s692
        %s699 = scalar_lea.smem [#allocation5], 4
        %700 = sst [smem:[%s699]] %s698
        %v701 = vld [vmem:[%s211] sm:$0xff]
        %v702 = vld [vmem:[%s211 + $0x8] sm:$0xff]
        %v703 = vld [vmem:[%s211 + $0x10] sm:$0xff]
        %v704 = vld [vmem:[%s218] sm:$0xff]
        %v705 = vld [vmem:[%s218 + $0x8] sm:$0xff]
        %v706 = vld [vmem:[%s218 + $0x10] sm:$0xff]
        %710 = vrot.lane.b32.xlu0 %v701, 2
        %v711 = vpop.permute.xlu0 %710
        %712 = vrot.lane.b32.xlu0 %v702, 2
        %v713 = vpop.permute.xlu0 %712
        %714 = vrot.lane.b32.xlu0 %v703, 2
        %v715 = vpop.permute.xlu0 %714
        %v719 = vsub.f32 %v701, %v711
        %v720 = vsub.f32 %v702, %v713
        %v721 = vsub.f32 %v703, %v715
        %v722 = vmul.f32 %v719, %v719
        %v723 = vmul.f32 %v720, %v720
        %v724 = vmul.f32 %v721, %v721
        %vm725 = vcmask 195600
        %v726 = vsel %vm725, %v722, 0.0
        %v727 = vsel %vm725, %v723, 0.0
        %v728 = vadd.f32 %v726, %v727
        %v729 = vsel %vm725, %v724, 0.0
        %v730 = vadd.f32 %v728, %v729
        %v731 = vmul.f32 %v730, -0.005
        %v732 = vmul.f32 %v731, 1.442695
        %v733 = vpow.pop %v732
        %735 = vrot.lane.b32.xlu0 %v733, 126
        %v736 = vpop.permute.xlu0 %735
        %vm738 = vcmask 179200
        %v739 = vsel %vm738, %v736, 0.0
        %740 = vadd.xlane.f32.xlu0 %v739
        %v741 = vpop.xlane.xlu0 %740
        %v742 = vrot.slane %v741, 4
        %v743 = vadd.f32 %v741, %v742
        %v744 = vrot.slane %v743, 2
        %v745 = vadd.f32 %v743, %v744
        %v746 = vrot.slane %v745, 1
        %v747 = vadd.f32 %v745, %v746
        %s748 = vtos %v747
        %752 = vrot.lane.b32.xlu0 %v704, 2
        %v753 = vpop.permute.xlu0 %752
        %754 = vrot.lane.b32.xlu0 %v705, 2
        %v755 = vpop.permute.xlu0 %754
        %756 = vrot.lane.b32.xlu0 %v706, 2
        %v757 = vpop.permute.xlu0 %756
        %v761 = vsub.f32 %v704, %v753
        %v762 = vsub.f32 %v705, %v755
        %v763 = vsub.f32 %v706, %v757
        %v764 = vand.u32 2147483647, %v761
        %v765 = vand.u32 2147483647, %v762
        %v766 = vand.u32 2147483647, %v763
        %v767 = vsel %vm725, %v764, 0.0
        %v768 = vsel %vm725, %v765, 0.0
        %v769 = vadd.f32 %v767, %v768
        %v770 = vsel %vm725, %v766, 0.0
        %v771 = vadd.f32 %v769, %v770
        %773 = vrot.lane.b32.xlu0 %v771, 126
        %v774 = vpop.permute.xlu0 %773
        %v776 = vsel %vm738, %v774, 0.0
        %777 = vadd.xlane.f32.xlu0 %v776
        %v778 = vpop.xlane.xlu0 %777
        %v779 = vrot.slane %v778, 4
        %v780 = vadd.f32 %v778, %v779
        %v781 = vrot.slane %v780, 2
        %v782 = vadd.f32 %v780, %v781
        %v783 = vrot.slane %v782, 1
        %v784 = vadd.f32 %v782, %v783
        %s785 = vtos %v784
        %s786 = sld [smem:[#allocation4 + $0x5]]
        %s787 = sadd.f32 %s786, %s748
        %s788 = scalar_lea.smem [#allocation4], 5
        %789 = sst [smem:[%s788]] %s787
        %s790 = sld [smem:[#allocation5 + $0x5]]
        %s791 = sadd.f32 %s790, %s785
        %s792 = scalar_lea.smem [#allocation5], 5
        %793 = sst [smem:[%s792]] %s791
        %v794 = vld [vmem:[%s211 + $0x2] sm:$0x3f]
        %v795 = vld [vmem:[%s211 + $0xa] sm:$0x3f]
        %v796 = vld [vmem:[%s211 + $0x12] sm:$0x3f]
        %v797 = vld [vmem:[%s211] sm:$0x3f]
        %v798 = vld [vmem:[%s211 + $0x8] sm:$0x3f]
        %v799 = vld [vmem:[%s211 + $0x10] sm:$0x3f]
        %v800 = vld [vmem:[%s218 + $0x2] sm:$0x3f]
        %v801 = vld [vmem:[%s218 + $0xa] sm:$0x3f]
        %v802 = vld [vmem:[%s218 + $0x12] sm:$0x3f]
        %v803 = vld [vmem:[%s218] sm:$0x3f]
        %v804 = vld [vmem:[%s218 + $0x8] sm:$0x3f]
        %v805 = vld [vmem:[%s218 + $0x10] sm:$0x3f]
        %809 = vrot.lane.b32.xlu0 %v797, 1
        %v810 = vpop.permute.xlu0 %809
        %811 = vrot.lane.b32.xlu0 %v798, 1
        %v812 = vpop.permute.xlu0 %811
        %813 = vrot.lane.b32.xlu0 %v799, 1
        %v814 = vpop.permute.xlu0 %813
        %v818 = vsub.f32 %v794, %v810
        %v819 = vsub.f32 %v795, %v812
        %v820 = vsub.f32 %v796, %v814
        %v821 = vmul.f32 %v818, %v818
        %v822 = vmul.f32 %v819, %v819
        %v823 = vmul.f32 %v820, %v820
        %vm824 = vcmask 193544
        %v825 = vsel %vm824, %v821, 0.0
        %v826 = vsel %vm824, %v822, 0.0
        %v827 = vadd.f32 %v825, %v826
        %v828 = vsel %vm824, %v823, 0.0
        %v829 = vadd.f32 %v827, %v828
        %v830 = vmul.f32 %v829, -0.005
        %v831 = vmul.f32 %v830, 1.442695
        %v832 = vpow.pop %v831
        %834 = vrot.lane.b32.xlu0 %v832, 127
        %v835 = vpop.permute.xlu0 %834
        %vm837 = vcmask 185344
        %v838 = vsel %vm837, %v835, 0.0
        %839 = vadd.xlane.f32.xlu0 %v838
        %v840 = vpop.xlane.xlu0 %839
        %v841 = vrot.slane %v840, 4
        %v842 = vadd.f32 %v840, %v841
        %v843 = vrot.slane %v842, 2
        %v844 = vadd.f32 %v842, %v843
        %v845 = vrot.slane %v844, 1
        %v846 = vadd.f32 %v844, %v845
        %s847 = vtos %v846
        %851 = vrot.lane.b32.xlu0 %v803, 1
        %v852 = vpop.permute.xlu0 %851
        %853 = vrot.lane.b32.xlu0 %v804, 1
        %v854 = vpop.permute.xlu0 %853
        %855 = vrot.lane.b32.xlu0 %v805, 1
        %v856 = vpop.permute.xlu0 %855
        %v860 = vsub.f32 %v800, %v852
        %v861 = vsub.f32 %v801, %v854
        %v862 = vsub.f32 %v802, %v856
        %v863 = vand.u32 2147483647, %v860
        %v864 = vand.u32 2147483647, %v861
        %v865 = vand.u32 2147483647, %v862
        %v866 = vsel %vm824, %v863, 0.0
        %v867 = vsel %vm824, %v864, 0.0
        %v868 = vadd.f32 %v866, %v867
        %v869 = vsel %vm824, %v865, 0.0
        %v870 = vadd.f32 %v868, %v869
        %872 = vrot.lane.b32.xlu0 %v870, 127
        %v873 = vpop.permute.xlu0 %872
        %v875 = vsel %vm837, %v873, 0.0
        %876 = vadd.xlane.f32.xlu0 %v875
        %v877 = vpop.xlane.xlu0 %876
        %v878 = vrot.slane %v877, 4
        %v879 = vadd.f32 %v877, %v878
        %v880 = vrot.slane %v879, 2
        %v881 = vadd.f32 %v879, %v880
        %v882 = vrot.slane %v881, 1
        %v883 = vadd.f32 %v881, %v882
        %s884 = vtos %v883
        %s885 = sld [smem:[#allocation4 + $0x6]]
        %s886 = sadd.f32 %s885, %s847
        %s887 = scalar_lea.smem [#allocation4], 6
        %888 = sst [smem:[%s887]] %s886
        %s889 = sld [smem:[#allocation5 + $0x6]]
        %s890 = sadd.f32 %s889, %s884
        %s891 = scalar_lea.smem [#allocation5], 6
        %892 = sst [smem:[%s891]] %s890
        %v893 = vld [vmem:[%s211 + $0x2] sm:$0x3f]
        %v894 = vld [vmem:[%s211 + $0xa] sm:$0x3f]
        %v895 = vld [vmem:[%s211 + $0x12] sm:$0x3f]
        %v896 = vld [vmem:[%s211] sm:$0x3f]
        %v897 = vld [vmem:[%s211 + $0x8] sm:$0x3f]
        %v898 = vld [vmem:[%s211 + $0x10] sm:$0x3f]
        %v899 = vld [vmem:[%s218 + $0x2] sm:$0x3f]
        %v900 = vld [vmem:[%s218 + $0xa] sm:$0x3f]
        %v901 = vld [vmem:[%s218 + $0x12] sm:$0x3f]
        %v902 = vld [vmem:[%s218] sm:$0x3f]
        %v903 = vld [vmem:[%s218 + $0x8] sm:$0x3f]
        %v904 = vld [vmem:[%s218 + $0x10] sm:$0x3f]
        %908 = vrot.lane.b32.xlu0 %v896, 127
        %v909 = vpop.permute.xlu0 %908
        %910 = vrot.lane.b32.xlu0 %v897, 127
        %v911 = vpop.permute.xlu0 %910
        %912 = vrot.lane.b32.xlu0 %v898, 127
        %v913 = vpop.permute.xlu0 %912
        %v917 = vsub.f32 %v893, %v909
        %v918 = vsub.f32 %v894, %v911
        %v919 = vsub.f32 %v895, %v913
        %v920 = vmul.f32 %v917, %v917
        %v921 = vmul.f32 %v918, %v918
        %v922 = vmul.f32 %v919, %v919
        %v923 = vsel %vm837, %v920, 0.0
        %v924 = vsel %vm837, %v921, 0.0
        %v925 = vadd.f32 %v923, %v924
        %v926 = vsel %vm837, %v922, 0.0
        %v927 = vadd.f32 %v925, %v926
        %v928 = vmul.f32 %v927, -0.005
        %v929 = vmul.f32 %v928, 1.442695
        %v930 = vpow.pop %v929
        %v931 = vsel %vm837, %v930, 0.0
        %932 = vadd.xlane.f32.xlu0 %v931
        %v933 = vpop.xlane.xlu0 %932
        %v934 = vrot.slane %v933, 4
        %v935 = vadd.f32 %v933, %v934
        %v936 = vrot.slane %v935, 2
        %v937 = vadd.f32 %v935, %v936
        %v938 = vrot.slane %v937, 1
        %v939 = vadd.f32 %v937, %v938
        %s940 = vtos %v939
        %944 = vrot.lane.b32.xlu0 %v902, 127
        %v945 = vpop.permute.xlu0 %944
        %946 = vrot.lane.b32.xlu0 %v903, 127
        %v947 = vpop.permute.xlu0 %946
        %948 = vrot.lane.b32.xlu0 %v904, 127
        %v949 = vpop.permute.xlu0 %948
        %v953 = vsub.f32 %v899, %v945
        %v954 = vsub.f32 %v900, %v947
        %v955 = vsub.f32 %v901, %v949
        %v956 = vand.u32 2147483647, %v953
        %v957 = vand.u32 2147483647, %v954
        %v958 = vand.u32 2147483647, %v955
        %v959 = vsel %vm837, %v956, 0.0
        %v960 = vsel %vm837, %v957, 0.0
        %v961 = vadd.f32 %v959, %v960
        %v962 = vsel %vm837, %v958, 0.0
        %v963 = vadd.f32 %v961, %v962
        %v964 = vsel %vm837, %v963, 0.0
        %965 = vadd.xlane.f32.xlu0 %v964
        %v966 = vpop.xlane.xlu0 %965
        %v967 = vrot.slane %v966, 4
        %v968 = vadd.f32 %v966, %v967
        %v969 = vrot.slane %v968, 2
        %v970 = vadd.f32 %v968, %v969
        %v971 = vrot.slane %v970, 1
        %v972 = vadd.f32 %v970, %v971
        %s973 = vtos %v972
        %s974 = sld [smem:[#allocation4 + $0x7]]
        %s975 = sadd.f32 %s974, %s940
        %s976 = scalar_lea.smem [#allocation4], 7
        %977 = sst [smem:[%s976]] %s975
        %s978 = sld [smem:[#allocation5 + $0x7]]
        %s979 = sadd.f32 %s978, %s973
        %s980 = scalar_lea.smem [#allocation5], 7
        %981 = sst [smem:[%s980]] %s979
        %v982 = vld [vmem:[%s211 + $0x1] sm:$0x7f]
        %v983 = vld [vmem:[%s211 + $0x9] sm:$0x7f]
        %v984 = vld [vmem:[%s211 + $0x11] sm:$0x7f]
        %v985 = vld [vmem:[%s211] sm:$0x7f]
        %v986 = vld [vmem:[%s211 + $0x8] sm:$0x7f]
        %v987 = vld [vmem:[%s211 + $0x10] sm:$0x7f]
        %v988 = vld [vmem:[%s218 + $0x1] sm:$0x7f]
        %v989 = vld [vmem:[%s218 + $0x9] sm:$0x7f]
        %v990 = vld [vmem:[%s218 + $0x11] sm:$0x7f]
        %v991 = vld [vmem:[%s218] sm:$0x7f]
        %v992 = vld [vmem:[%s218 + $0x8] sm:$0x7f]
        %v993 = vld [vmem:[%s218 + $0x10] sm:$0x7f]
        %997 = vrot.lane.b32.xlu0 %v985, 2
        %v998 = vpop.permute.xlu0 %997
        %999 = vrot.lane.b32.xlu0 %v986, 2
        %v1000 = vpop.permute.xlu0 %999
        %1001 = vrot.lane.b32.xlu0 %v987, 2
        %v1002 = vpop.permute.xlu0 %1001
        %v1006 = vsub.f32 %v982, %v998
        %v1007 = vsub.f32 %v983, %v1000
        %v1008 = vsub.f32 %v984, %v1002
        %v1009 = vmul.f32 %v1006, %v1006
        %v1010 = vmul.f32 %v1007, %v1007
        %v1011 = vmul.f32 %v1008, %v1008
        %vm1012 = vcmask 194576
        %v1013 = vsel %vm1012, %v1009, 0.0
        %v1014 = vsel %vm1012, %v1010, 0.0
        %v1015 = vadd.f32 %v1013, %v1014
        %v1016 = vsel %vm1012, %v1011, 0.0
        %v1017 = vadd.f32 %v1015, %v1016
        %v1018 = vmul.f32 %v1017, -0.005
        %v1019 = vmul.f32 %v1018, 1.442695
        %v1020 = vpow.pop %v1019
        %1022 = vrot.lane.b32.xlu0 %v1020, 126
        %v1023 = vpop.permute.xlu0 %1022
        %vm1025 = vcmask 178176
        %v1026 = vsel %vm1025, %v1023, 0.0
        %1027 = vadd.xlane.f32.xlu0 %v1026
        %v1028 = vpop.xlane.xlu0 %1027
        %v1029 = vrot.slane %v1028, 4
        %v1030 = vadd.f32 %v1028, %v1029
        %v1031 = vrot.slane %v1030, 2
        %v1032 = vadd.f32 %v1030, %v1031
        %v1033 = vrot.slane %v1032, 1
        %v1034 = vadd.f32 %v1032, %v1033
        %s1035 = vtos %v1034
        %1039 = vrot.lane.b32.xlu0 %v991, 2
        %v1040 = vpop.permute.xlu0 %1039
        %1041 = vrot.lane.b32.xlu0 %v992, 2
        %v1042 = vpop.permute.xlu0 %1041
        %1043 = vrot.lane.b32.xlu0 %v993, 2
        %v1044 = vpop.permute.xlu0 %1043
        %v1048 = vsub.f32 %v988, %v1040
        %v1049 = vsub.f32 %v989, %v1042
        %v1050 = vsub.f32 %v990, %v1044
        %v1051 = vand.u32 2147483647, %v1048
        %v1052 = vand.u32 2147483647, %v1049
        %v1053 = vand.u32 2147483647, %v1050
        %v1054 = vsel %vm1012, %v1051, 0.0
        %v1055 = vsel %vm1012, %v1052, 0.0
        %v1056 = vadd.f32 %v1054, %v1055
        %v1057 = vsel %vm1012, %v1053, 0.0
        %v1058 = vadd.f32 %v1056, %v1057
        %1060 = vrot.lane.b32.xlu0 %v1058, 126
        %v1061 = vpop.permute.xlu0 %1060
        %v1063 = vsel %vm1025, %v1061, 0.0
        %1064 = vadd.xlane.f32.xlu0 %v1063
        %v1065 = vpop.xlane.xlu0 %1064
        %v1066 = vrot.slane %v1065, 4
        %v1067 = vadd.f32 %v1065, %v1066
        %v1068 = vrot.slane %v1067, 2
        %v1069 = vadd.f32 %v1067, %v1068
        %v1070 = vrot.slane %v1069, 1
        %v1071 = vadd.f32 %v1069, %v1070
        %s1072 = vtos %v1071
        %s1073 = sld [smem:[#allocation4 + $0x8]]
        %s1074 = sadd.f32 %s1073, %s1035
        %s1075 = scalar_lea.smem [#allocation4], 8
        %1076 = sst [smem:[%s1075]] %s1074
        %s1077 = sld [smem:[#allocation5 + $0x8]]
        %s1078 = sadd.f32 %s1077, %s1072
        %s1079 = scalar_lea.smem [#allocation5], 8
        %1080 = sst [smem:[%s1079]] %s1078
        %v1081 = vld [vmem:[%s211 + $0x1] sm:$0x7f]
        %v1082 = vld [vmem:[%s211 + $0x9] sm:$0x7f]
        %v1083 = vld [vmem:[%s211 + $0x11] sm:$0x7f]
        %v1084 = vld [vmem:[%s211] sm:$0x7f]
        %v1085 = vld [vmem:[%s211 + $0x8] sm:$0x7f]
        %v1086 = vld [vmem:[%s211 + $0x10] sm:$0x7f]
        %v1087 = vld [vmem:[%s218 + $0x1] sm:$0x7f]
        %v1088 = vld [vmem:[%s218 + $0x9] sm:$0x7f]
        %v1089 = vld [vmem:[%s218 + $0x11] sm:$0x7f]
        %v1090 = vld [vmem:[%s218] sm:$0x7f]
        %v1091 = vld [vmem:[%s218 + $0x8] sm:$0x7f]
        %v1092 = vld [vmem:[%s218 + $0x10] sm:$0x7f]
        %1096 = vrot.lane.b32.xlu0 %v1084, 126
        %v1097 = vpop.permute.xlu0 %1096
        %1098 = vrot.lane.b32.xlu0 %v1085, 126
        %v1099 = vpop.permute.xlu0 %1098
        %1100 = vrot.lane.b32.xlu0 %v1086, 126
        %v1101 = vpop.permute.xlu0 %1100
        %v1105 = vsub.f32 %v1081, %v1097
        %v1106 = vsub.f32 %v1082, %v1099
        %v1107 = vsub.f32 %v1083, %v1101
        %v1108 = vmul.f32 %v1105, %v1105
        %v1109 = vmul.f32 %v1106, %v1106
        %v1110 = vmul.f32 %v1107, %v1107
        %v1111 = vsel %vm1025, %v1108, 0.0
        %v1112 = vsel %vm1025, %v1109, 0.0
        %v1113 = vadd.f32 %v1111, %v1112
        %v1114 = vsel %vm1025, %v1110, 0.0
        %v1115 = vadd.f32 %v1113, %v1114
        %v1116 = vmul.f32 %v1115, -0.005
        %v1117 = vmul.f32 %v1116, 1.442695
        %v1118 = vpow.pop %v1117
        %v1119 = vsel %vm1025, %v1118, 0.0
        %1120 = vadd.xlane.f32.xlu0 %v1119
        %v1121 = vpop.xlane.xlu0 %1120
        %v1122 = vrot.slane %v1121, 4
        %v1123 = vadd.f32 %v1121, %v1122
        %v1124 = vrot.slane %v1123, 2
        %v1125 = vadd.f32 %v1123, %v1124
        %v1126 = vrot.slane %v1125, 1
        %v1127 = vadd.f32 %v1125, %v1126
        %s1128 = vtos %v1127
        %1132 = vrot.lane.b32.xlu0 %v1090, 126
        %v1133 = vpop.permute.xlu0 %1132
        %1134 = vrot.lane.b32.xlu0 %v1091, 126
        %v1135 = vpop.permute.xlu0 %1134
        %1136 = vrot.lane.b32.xlu0 %v1092, 126
        %v1137 = vpop.permute.xlu0 %1136
        %v1141 = vsub.f32 %v1087, %v1133
        %v1142 = vsub.f32 %v1088, %v1135
        %v1143 = vsub.f32 %v1089, %v1137
        %v1144 = vand.u32 2147483647, %v1141
        %v1145 = vand.u32 2147483647, %v1142
        %v1146 = vand.u32 2147483647, %v1143
        %v1147 = vsel %vm1025, %v1144, 0.0
        %v1148 = vsel %vm1025, %v1145, 0.0
        %v1149 = vadd.f32 %v1147, %v1148
        %v1150 = vsel %vm1025, %v1146, 0.0
        %v1151 = vadd.f32 %v1149, %v1150
        %v1152 = vsel %vm1025, %v1151, 0.0
        %1153 = vadd.xlane.f32.xlu0 %v1152
        %v1154 = vpop.xlane.xlu0 %1153
        %v1155 = vrot.slane %v1154, 4
        %v1156 = vadd.f32 %v1154, %v1155
        %v1157 = vrot.slane %v1156, 2
        %v1158 = vadd.f32 %v1156, %v1157
        %v1159 = vrot.slane %v1158, 1
        %v1160 = vadd.f32 %v1158, %v1159
        %s1161 = vtos %v1160
        %s1162 = sld [smem:[#allocation4 + $0x9]]
        %s1163 = sadd.f32 %s1162, %s1128
        %s1164 = scalar_lea.smem [#allocation4], 9
        %1165 = sst [smem:[%s1164]] %s1163
        %s1166 = sld [smem:[#allocation5 + $0x9]]
        %s1167 = sadd.f32 %s1166, %s1161
        %s1168 = scalar_lea.smem [#allocation5], 9
        %1169 = sst [smem:[%s1168]] %s1167
        %v1170 = vld [vmem:[%s211 + $0x2] sm:$0x3f]
        %v1171 = vld [vmem:[%s211 + $0xa] sm:$0x3f]
        %v1172 = vld [vmem:[%s211 + $0x12] sm:$0x3f]
        %v1173 = vld [vmem:[%s211] sm:$0x3f]
        %v1174 = vld [vmem:[%s211 + $0x8] sm:$0x3f]
        %v1175 = vld [vmem:[%s211 + $0x10] sm:$0x3f]
        %v1176 = vld [vmem:[%s218 + $0x2] sm:$0x3f]
        %v1177 = vld [vmem:[%s218 + $0xa] sm:$0x3f]
        %v1178 = vld [vmem:[%s218 + $0x12] sm:$0x3f]
        %v1179 = vld [vmem:[%s218] sm:$0x3f]
        %v1180 = vld [vmem:[%s218 + $0x8] sm:$0x3f]
        %v1181 = vld [vmem:[%s218 + $0x10] sm:$0x3f]
        %1185 = vrot.lane.b32.xlu0 %v1173, 2
        %v1186 = vpop.permute.xlu0 %1185
        %1187 = vrot.lane.b32.xlu0 %v1174, 2
        %v1188 = vpop.permute.xlu0 %1187
        %1189 = vrot.lane.b32.xlu0 %v1175, 2
        %v1190 = vpop.permute.xlu0 %1189
        %v1194 = vsub.f32 %v1170, %v1186
        %v1195 = vsub.f32 %v1171, %v1188
        %v1196 = vsub.f32 %v1172, %v1190
        %v1197 = vmul.f32 %v1194, %v1194
        %v1198 = vmul.f32 %v1195, %v1195
        %v1199 = vmul.f32 %v1196, %v1196
        %vm1200 = vcmask 193552
        %v1201 = vsel %vm1200, %v1197, 0.0
        %v1202 = vsel %vm1200, %v1198, 0.0
        %v1203 = vadd.f32 %v1201, %v1202
        %v1204 = vsel %vm1200, %v1199, 0.0
        %v1205 = vadd.f32 %v1203, %v1204
        %v1206 = vmul.f32 %v1205, -0.005
        %v1207 = vmul.f32 %v1206, 1.442695
        %v1208 = vpow.pop %v1207
        %1210 = vrot.lane.b32.xlu0 %v1208, 126
        %v1211 = vpop.permute.xlu0 %1210
        %vm1213 = vcmask 177152
        %v1214 = vsel %vm1213, %v1211, 0.0
        %1215 = vadd.xlane.f32.xlu0 %v1214
        %v1216 = vpop.xlane.xlu0 %1215
        %v1217 = vrot.slane %v1216, 4
        %v1218 = vadd.f32 %v1216, %v1217
        %v1219 = vrot.slane %v1218, 2
        %v1220 = vadd.f32 %v1218, %v1219
        %v1221 = vrot.slane %v1220, 1
        %v1222 = vadd.f32 %v1220, %v1221
        %s1223 = vtos %v1222
        %1227 = vrot.lane.b32.xlu0 %v1179, 2
        %v1228 = vpop.permute.xlu0 %1227
        %1229 = vrot.lane.b32.xlu0 %v1180, 2
        %v1230 = vpop.permute.xlu0 %1229
        %1231 = vrot.lane.b32.xlu0 %v1181, 2
        %v1232 = vpop.permute.xlu0 %1231
        %v1236 = vsub.f32 %v1176, %v1228
        %v1237 = vsub.f32 %v1177, %v1230
        %v1238 = vsub.f32 %v1178, %v1232
        %v1239 = vand.u32 2147483647, %v1236
        %v1240 = vand.u32 2147483647, %v1237
        %v1241 = vand.u32 2147483647, %v1238
        %v1242 = vsel %vm1200, %v1239, 0.0
        %v1243 = vsel %vm1200, %v1240, 0.0
        %v1244 = vadd.f32 %v1242, %v1243
        %v1245 = vsel %vm1200, %v1241, 0.0
        %v1246 = vadd.f32 %v1244, %v1245
        %1248 = vrot.lane.b32.xlu0 %v1246, 126
        %v1249 = vpop.permute.xlu0 %1248
        %v1251 = vsel %vm1213, %v1249, 0.0
        %1252 = vadd.xlane.f32.xlu0 %v1251
        %v1253 = vpop.xlane.xlu0 %1252
        %v1254 = vrot.slane %v1253, 4
        %v1255 = vadd.f32 %v1253, %v1254
        %v1256 = vrot.slane %v1255, 2
        %v1257 = vadd.f32 %v1255, %v1256
        %v1258 = vrot.slane %v1257, 1
        %v1259 = vadd.f32 %v1257, %v1258
        %s1260 = vtos %v1259
        %s1261 = sld [smem:[#allocation4 + $0xa]]
        %s1262 = sadd.f32 %s1261, %s1223
        %s1263 = scalar_lea.smem [#allocation4], 10
        %1264 = sst [smem:[%s1263]] %s1262
        %s1265 = sld [smem:[#allocation5 + $0xa]]
        %s1266 = sadd.f32 %s1265, %s1260
        %s1267 = scalar_lea.smem [#allocation5], 10
        %1268 = sst [smem:[%s1267]] %s1266
        %v1269 = vld [vmem:[%s211 + $0x2] sm:$0x3f]
        %v1270 = vld [vmem:[%s211 + $0xa] sm:$0x3f]
        %v1271 = vld [vmem:[%s211 + $0x12] sm:$0x3f]
        %v1272 = vld [vmem:[%s211] sm:$0x3f]
        %v1273 = vld [vmem:[%s211 + $0x8] sm:$0x3f]
        %v1274 = vld [vmem:[%s211 + $0x10] sm:$0x3f]
        %v1275 = vld [vmem:[%s218 + $0x2] sm:$0x3f]
        %v1276 = vld [vmem:[%s218 + $0xa] sm:$0x3f]
        %v1277 = vld [vmem:[%s218 + $0x12] sm:$0x3f]
        %v1278 = vld [vmem:[%s218] sm:$0x3f]
        %v1279 = vld [vmem:[%s218 + $0x8] sm:$0x3f]
        %v1280 = vld [vmem:[%s218 + $0x10] sm:$0x3f]
        %1284 = vrot.lane.b32.xlu0 %v1272, 126
        %v1285 = vpop.permute.xlu0 %1284
        %1286 = vrot.lane.b32.xlu0 %v1273, 126
        %v1287 = vpop.permute.xlu0 %1286
        %1288 = vrot.lane.b32.xlu0 %v1274, 126
        %v1289 = vpop.permute.xlu0 %1288
        %v1293 = vsub.f32 %v1269, %v1285
        %v1294 = vsub.f32 %v1270, %v1287
        %v1295 = vsub.f32 %v1271, %v1289
        %v1296 = vmul.f32 %v1293, %v1293
        %v1297 = vmul.f32 %v1294, %v1294
        %v1298 = vmul.f32 %v1295, %v1295
        %v1299 = vsel %vm1213, %v1296, 0.0
        %v1300 = vsel %vm1213, %v1297, 0.0
        %v1301 = vadd.f32 %v1299, %v1300
        %v1302 = vsel %vm1213, %v1298, 0.0
        %v1303 = vadd.f32 %v1301, %v1302
        %v1304 = vmul.f32 %v1303, -0.005
        %v1305 = vmul.f32 %v1304, 1.442695
        %v1306 = vpow.pop %v1305
        %v1307 = vsel %vm1213, %v1306, 0.0
        %1308 = vadd.xlane.f32.xlu0 %v1307
        %v1309 = vpop.xlane.xlu0 %1308
        %v1310 = vrot.slane %v1309, 4
        %v1311 = vadd.f32 %v1309, %v1310
        %v1312 = vrot.slane %v1311, 2
        %v1313 = vadd.f32 %v1311, %v1312
        %v1314 = vrot.slane %v1313, 1
        %v1315 = vadd.f32 %v1313, %v1314
        %s1316 = vtos %v1315
        %1320 = vrot.lane.b32.xlu0 %v1278, 126
        %v1321 = vpop.permute.xlu0 %1320
        %1322 = vrot.lane.b32.xlu0 %v1279, 126
        %v1323 = vpop.permute.xlu0 %1322
        %1324 = vrot.lane.b32.xlu0 %v1280, 126
        %v1325 = vpop.permute.xlu0 %1324
        %v1329 = vsub.f32 %v1275, %v1321
        %v1330 = vsub.f32 %v1276, %v1323
        %v1331 = vsub.f32 %v1277, %v1325
        %v1332 = vand.u32 2147483647, %v1329
        %v1333 = vand.u32 2147483647, %v1330
        %v1334 = vand.u32 2147483647, %v1331
        %v1335 = vsel %vm1213, %v1332, 0.0
        %v1336 = vsel %vm1213, %v1333, 0.0
        %v1337 = vadd.f32 %v1335, %v1336
        %v1338 = vsel %vm1213, %v1334, 0.0
        %v1339 = vadd.f32 %v1337, %v1338
        %v1340 = vsel %vm1213, %v1339, 0.0
        %1341 = vadd.xlane.f32.xlu0 %v1340
        %v1342 = vpop.xlane.xlu0 %1341
        %v1343 = vrot.slane %v1342, 4
        %v1344 = vadd.f32 %v1342, %v1343
        %v1345 = vrot.slane %v1344, 2
        %v1346 = vadd.f32 %v1344, %v1345
        %v1347 = vrot.slane %v1346, 1
        %v1348 = vadd.f32 %v1346, %v1347
        %s1349 = vtos %v1348
        %s1350 = sld [smem:[#allocation4 + $0xb]]
        %s1351 = sadd.f32 %s1350, %s1316
        %s1352 = scalar_lea.smem [#allocation4], 11
        %1353 = sst [smem:[%s1352]] %s1351
        %s1354 = sld [smem:[#allocation5 + $0xb]]
        %s1355 = sadd.f32 %s1354, %s1349
        %s1356 = scalar_lea.smem [#allocation5], 11
        %1357 = sst [smem:[%s1356]] %s1355
        %p1358 = scmp.gt.s32.totalorder %s14, 0
        // Predicated region
        $region109: #{smooth_loss_pallas.1} parent=95 // pred_check
          %p1359 = pneg %p1358
        $region110: #{smooth_loss_pallas.1} parent=95 // pred_check_branch
          %1361 = sbr.rel (%p1359) target = $region112
        $region111: #{smooth_loss_pallas.1} parent=95 // pred_region
          %v1362 = vld [vmem:[%s211] sm:$0x1]
          %v1363 = vld [vmem:[%s211 + $0x8] sm:$0x1]
          %v1364 = vld [vmem:[%s211 + $0x10] sm:$0x1]
          %v1365 = vld [vmem:[#allocation2 + $0x1] sm:$0x1]
          %v1366 = vld [vmem:[#allocation2 + $0x3] sm:$0x1]
          %v1367 = vld [vmem:[#allocation2 + $0x5] sm:$0x1]
          %v1368 = vld [vmem:[%s218] sm:$0x1]
          %v1369 = vld [vmem:[%s218 + $0x8] sm:$0x1]
          %v1370 = vld [vmem:[%s218 + $0x10] sm:$0x1]
          %v1371 = vld [vmem:[#allocation3 + $0x1] sm:$0x1]
          %v1372 = vld [vmem:[#allocation3 + $0x3] sm:$0x1]
          %v1373 = vld [vmem:[#allocation3 + $0x5] sm:$0x1]
          %v1374 = vsub.f32 %v1362, %v1365
          %v1375 = vsub.f32 %v1363, %v1366
          %v1376 = vsub.f32 %v1364, %v1367
          %v1377 = vmul.f32 %v1374, %v1374
          %v1378 = vmul.f32 %v1375, %v1375
          %v1379 = vmul.f32 %v1376, %v1376
          %vm1380 = vcmask 188416
          %v1381 = vsel %vm1380, %v1377, 0.0
          %v1382 = vsel %vm1380, %v1378, 0.0
          %v1383 = vadd.f32 %v1381, %v1382
          %v1384 = vsel %vm1380, %v1379, 0.0
          %v1385 = vadd.f32 %v1383, %v1384
          %v1386 = vmul.f32 %v1385, -0.005
          %v1387 = vmul.f32 %v1386, 1.442695
          %v1388 = vpow.pop %v1387
          %v1389 = vsel %vm1380, %v1388, 0.0
          %1390 = vadd.xlane.f32.xlu0 %v1389
          %v1391 = vpop.xlane.xlu0 %1390
          %v1392 = vrot.slane %v1391, 4
          %v1393 = vadd.f32 %v1391, %v1392
          %v1394 = vrot.slane %v1393, 2
          %v1395 = vadd.f32 %v1393, %v1394
          %v1396 = vrot.slane %v1395, 1
          %v1397 = vadd.f32 %v1395, %v1396
          %s1398 = vtos %v1397
          %v1399 = vsub.f32 %v1368, %v1371
          %v1400 = vsub.f32 %v1369, %v1372
          %v1401 = vsub.f32 %v1370, %v1373
          %v1402 = vand.u32 2147483647, %v1399
          %v1403 = vand.u32 2147483647, %v1400
          %v1404 = vand.u32 2147483647, %v1401
          %v1405 = vsel %vm1380, %v1402, 0.0
          %v1406 = vsel %vm1380, %v1403, 0.0
          %v1407 = vadd.f32 %v1405, %v1406
          %v1408 = vsel %vm1380, %v1404, 0.0
          %v1409 = vadd.f32 %v1407, %v1408
          %v1410 = vsel %vm1380, %v1409, 0.0
          %1411 = vadd.xlane.f32.xlu0 %v1410
          %v1412 = vpop.xlane.xlu0 %1411
          %v1413 = vrot.slane %v1412, 4
          %v1414 = vadd.f32 %v1412, %v1413
          %v1415 = vrot.slane %v1414, 2
          %v1416 = vadd.f32 %v1414, %v1415
          %v1417 = vrot.slane %v1416, 1
          %v1418 = vadd.f32 %v1416, %v1417
          %s1419 = vtos %v1418
          %s1420 = sld [smem:[#allocation4]]
          %s1421 = sadd.f32 %s1420, %s1398
          %1422 = sst [smem:[%s348]] %s1421
          %s1423 = sld [smem:[#allocation5]]
          %s1424 = sadd.f32 %s1423, %s1419
          %1425 = sst [smem:[%s352]] %s1424
          %v1426 = vld [vmem:[%s211] sm:$0x1]
          %v1427 = vld [vmem:[%s211 + $0x8] sm:$0x1]
          %v1428 = vld [vmem:[%s211 + $0x10] sm:$0x1]
          %v1429 = vld [vmem:[#allocation2 + $0x1] sm:$0x1]
          %v1430 = vld [vmem:[#allocation2 + $0x3] sm:$0x1]
          %v1431 = vld [vmem:[#allocation2 + $0x5] sm:$0x1]
          %v1432 = vld [vmem:[%s218] sm:$0x1]
          %v1433 = vld [vmem:[%s218 + $0x8] sm:$0x1]
          %v1434 = vld [vmem:[%s218 + $0x10] sm:$0x1]
          %v1435 = vld [vmem:[#allocation3 + $0x1] sm:$0x1]
          %v1436 = vld [vmem:[#allocation3 + $0x3] sm:$0x1]
          %v1437 = vld [vmem:[#allocation3 + $0x5] sm:$0x1]
          %1441 = vrot.lane.b32.xlu0 %v1429, 1
          %v1442 = vpop.permute.xlu0 %1441
          %1443 = vrot.lane.b32.xlu0 %v1430, 1
          %v1444 = vpop.permute.xlu0 %1443
          %1445 = vrot.lane.b32.xlu0 %v1431, 1
          %v1446 = vpop.permute.xlu0 %1445
          %v1450 = vsub.f32 %v1426, %v1442
          %v1451 = vsub.f32 %v1427, %v1444
          %v1452 = vsub.f32 %v1428, %v1446
          %v1453 = vmul.f32 %v1450, %v1450
          %v1454 = vmul.f32 %v1451, %v1451
          %v1455 = vmul.f32 %v1452, %v1452
          %vm1456 = vcmask 188424
          %v1457 = vsel %vm1456, %v1453, 0.0
          %v1458 = vsel %vm1456, %v1454, 0.0
          %v1459 = vadd.f32 %v1457, %v1458
          %v1460 = vsel %vm1456, %v1455, 0.0
          %v1461 = vadd.f32 %v1459, %v1460
          %v1462 = vmul.f32 %v1461, -0.005
          %v1463 = vmul.f32 %v1462, 1.442695
          %v1464 = vpow.pop %v1463
          %1466 = vrot.lane.b32.xlu0 %v1464, 127
          %v1467 = vpop.permute.xlu0 %1466
          %vm1469 = vcmask 180224
          %v1470 = vsel %vm1469, %v1467, 0.0
          %1471 = vadd.xlane.f32.xlu0 %v1470
          %v1472 = vpop.xlane.xlu0 %1471
          %v1473 = vrot.slane %v1472, 4
          %v1474 = vadd.f32 %v1472, %v1473
          %v1475 = vrot.slane %v1474, 2
          %v1476 = vadd.f32 %v1474, %v1475
          %v1477 = vrot.slane %v1476, 1
          %v1478 = vadd.f32 %v1476, %v1477
          %s1479 = vtos %v1478
          %1483 = vrot.lane.b32.xlu0 %v1435, 1
          %v1484 = vpop.permute.xlu0 %1483
          %1485 = vrot.lane.b32.xlu0 %v1436, 1
          %v1486 = vpop.permute.xlu0 %1485
          %1487 = vrot.lane.b32.xlu0 %v1437, 1
          %v1488 = vpop.permute.xlu0 %1487
          %v1492 = vsub.f32 %v1432, %v1484
          %v1493 = vsub.f32 %v1433, %v1486
          %v1494 = vsub.f32 %v1434, %v1488
          %v1495 = vand.u32 2147483647, %v1492
          %v1496 = vand.u32 2147483647, %v1493
          %v1497 = vand.u32 2147483647, %v1494
          %v1498 = vsel %vm1456, %v1495, 0.0
          %v1499 = vsel %vm1456, %v1496, 0.0
          %v1500 = vadd.f32 %v1498, %v1499
          %v1501 = vsel %vm1456, %v1497, 0.0
          %v1502 = vadd.f32 %v1500, %v1501
          %1504 = vrot.lane.b32.xlu0 %v1502, 127
          %v1505 = vpop.permute.xlu0 %1504
          %v1507 = vsel %vm1469, %v1505, 0.0
          %1508 = vadd.xlane.f32.xlu0 %v1507
          %v1509 = vpop.xlane.xlu0 %1508
          %v1510 = vrot.slane %v1509, 4
          %v1511 = vadd.f32 %v1509, %v1510
          %v1512 = vrot.slane %v1511, 2
          %v1513 = vadd.f32 %v1511, %v1512
          %v1514 = vrot.slane %v1513, 1
          %v1515 = vadd.f32 %v1513, %v1514
          %s1516 = vtos %v1515
          %s1517 = sld [smem:[#allocation4 + $0x2]]
          %s1518 = sadd.f32 %s1517, %s1479
          %1519 = sst [smem:[%s540]] %s1518
          %s1520 = sld [smem:[#allocation5 + $0x2]]
          %s1521 = sadd.f32 %s1520, %s1516
          %1522 = sst [smem:[%s544]] %s1521
          %v1523 = vld [vmem:[%s211] sm:$0x1]
          %v1524 = vld [vmem:[%s211 + $0x8] sm:$0x1]
          %v1525 = vld [vmem:[%s211 + $0x10] sm:$0x1]
          %v1526 = vld [vmem:[#allocation2 + $0x1] sm:$0x1]
          %v1527 = vld [vmem:[#allocation2 + $0x3] sm:$0x1]
          %v1528 = vld [vmem:[#allocation2 + $0x5] sm:$0x1]
          %v1529 = vld [vmem:[%s218] sm:$0x1]
          %v1530 = vld [vmem:[%s218 + $0x8] sm:$0x1]
          %v1531 = vld [vmem:[%s218 + $0x10] sm:$0x1]
          %v1532 = vld [vmem:[#allocation3 + $0x1] sm:$0x1]
          %v1533 = vld [vmem:[#allocation3 + $0x3] sm:$0x1]
          %v1534 = vld [vmem:[#allocation3 + $0x5] sm:$0x1]
          %1538 = vrot.lane.b32.xlu0 %v1526, 127
          %v1539 = vpop.permute.xlu0 %1538
          %1540 = vrot.lane.b32.xlu0 %v1527, 127
          %v1541 = vpop.permute.xlu0 %1540
          %1542 = vrot.lane.b32.xlu0 %v1528, 127
          %v1543 = vpop.permute.xlu0 %1542
          %v1547 = vsub.f32 %v1523, %v1539
          %v1548 = vsub.f32 %v1524, %v1541
          %v1549 = vsub.f32 %v1525, %v1543
          %v1550 = vmul.f32 %v1547, %v1547
          %v1551 = vmul.f32 %v1548, %v1548
          %v1552 = vmul.f32 %v1549, %v1549
          %v1553 = vsel %vm1469, %v1550, 0.0
          %v1554 = vsel %vm1469, %v1551, 0.0
          %v1555 = vadd.f32 %v1553, %v1554
          %v1556 = vsel %vm1469, %v1552, 0.0
          %v1557 = vadd.f32 %v1555, %v1556
          %v1558 = vmul.f32 %v1557, -0.005
          %v1559 = vmul.f32 %v1558, 1.442695
          %v1560 = vpow.pop %v1559
          %v1561 = vsel %vm1469, %v1560, 0.0
          %1562 = vadd.xlane.f32.xlu0 %v1561
          %v1563 = vpop.xlane.xlu0 %1562
          %v1564 = vrot.slane %v1563, 4
          %v1565 = vadd.f32 %v1563, %v1564
          %v1566 = vrot.slane %v1565, 2
          %v1567 = vadd.f32 %v1565, %v1566
          %v1568 = vrot.slane %v1567, 1
          %v1569 = vadd.f32 %v1567, %v1568
          %s1570 = vtos %v1569
          %1574 = vrot.lane.b32.xlu0 %v1532, 127
          %v1575 = vpop.permute.xlu0 %1574
          %1576 = vrot.lane.b32.xlu0 %v1533, 127
          %v1577 = vpop.permute.xlu0 %1576
          %1578 = vrot.lane.b32.xlu0 %v1534, 127
          %v1579 = vpop.permute.xlu0 %1578
          %v1583 = vsub.f32 %v1529, %v1575
          %v1584 = vsub.f32 %v1530, %v1577
          %v1585 = vsub.f32 %v1531, %v1579
          %v1586 = vand.u32 2147483647, %v1583
          %v1587 = vand.u32 2147483647, %v1584
          %v1588 = vand.u32 2147483647, %v1585
          %v1589 = vsel %vm1469, %v1586, 0.0
          %v1590 = vsel %vm1469, %v1587, 0.0
          %v1591 = vadd.f32 %v1589, %v1590
          %v1592 = vsel %vm1469, %v1588, 0.0
          %v1593 = vadd.f32 %v1591, %v1592
          %v1594 = vsel %vm1469, %v1593, 0.0
          %1595 = vadd.xlane.f32.xlu0 %v1594
          %v1596 = vpop.xlane.xlu0 %1595
          %v1597 = vrot.slane %v1596, 4
          %v1598 = vadd.f32 %v1596, %v1597
          %v1599 = vrot.slane %v1598, 2
          %v1600 = vadd.f32 %v1598, %v1599
          %v1601 = vrot.slane %v1600, 1
          %v1602 = vadd.f32 %v1600, %v1601
          %s1603 = vtos %v1602
          %s1604 = sld [smem:[#allocation4 + $0x3]]
          %s1605 = sadd.f32 %s1604, %s1570
          %1606 = sst [smem:[%s629]] %s1605
          %s1607 = sld [smem:[#allocation5 + $0x3]]
          %s1608 = sadd.f32 %s1607, %s1603
          %1609 = sst [smem:[%s633]] %s1608
          %v1610 = vld [vmem:[%s211] sm:$0x3]
          %v1611 = vld [vmem:[%s211 + $0x8] sm:$0x3]
          %v1612 = vld [vmem:[%s211 + $0x10] sm:$0x3]
          %v1613 = vld [vmem:[#allocation2] sm:$0x3]
          %v1614 = vld [vmem:[#allocation2 + $0x2] sm:$0x3]
          %v1615 = vld [vmem:[#allocation2 + $0x4] sm:$0x3]
          %v1616 = vld [vmem:[%s218] sm:$0x3]
          %v1617 = vld [vmem:[%s218 + $0x8] sm:$0x3]
          %v1618 = vld [vmem:[%s218 + $0x10] sm:$0x3]
          %v1619 = vld [vmem:[#allocation3] sm:$0x3]
          %v1620 = vld [vmem:[#allocation3 + $0x2] sm:$0x3]
          %v1621 = vld [vmem:[#allocation3 + $0x4] sm:$0x3]
          %v1622 = vsub.f32 %v1610, %v1613
          %v1623 = vsub.f32 %v1611, %v1614
          %v1624 = vsub.f32 %v1612, %v1615
          %v1625 = vmul.f32 %v1622, %v1622
          %v1626 = vmul.f32 %v1623, %v1623
          %v1627 = vmul.f32 %v1624, %v1624
          %vm1628 = vcmask 189440
          %v1629 = vsel %vm1628, %v1625, 0.0
          %v1630 = vsel %vm1628, %v1626, 0.0
          %v1631 = vadd.f32 %v1629, %v1630
          %v1632 = vsel %vm1628, %v1627, 0.0
          %v1633 = vadd.f32 %v1631, %v1632
          %v1634 = vmul.f32 %v1633, -0.005
          %v1635 = vmul.f32 %v1634, 1.442695
          %v1636 = vpow.pop %v1635
          %v1637 = vsel %vm1628, %v1636, 0.0
          %1638 = vadd.xlane.f32.xlu0 %v1637
          %v1639 = vpop.xlane.xlu0 %1638
          %v1640 = vrot.slane %v1639, 4
          %v1641 = vadd.f32 %v1639, %v1640
          %v1642 = vrot.slane %v1641, 2
          %v1643 = vadd.f32 %v1641, %v1642
          %v1644 = vrot.slane %v1643, 1
          %v1645 = vadd.f32 %v1643, %v1644
          %s1646 = vtos %v1645
          %v1647 = vsub.f32 %v1616, %v1619
          %v1648 = vsub.f32 %v1617, %v1620
          %v1649 = vsub.f32 %v1618, %v1621
          %v1650 = vand.u32 2147483647, %v1647
          %v1651 = vand.u32 2147483647, %v1648
          %v1652 = vand.u32 2147483647, %v1649
          %v1653 = vsel %vm1628, %v1650, 0.0
          %v1654 = vsel %vm1628, %v1651, 0.0
          %v1655 = vadd.f32 %v1653, %v1654
          %v1656 = vsel %vm1628, %v1652, 0.0
          %v1657 = vadd.f32 %v1655, %v1656
          %v1658 = vsel %vm1628, %v1657, 0.0
          %1659 = vadd.xlane.f32.xlu0 %v1658
          %v1660 = vpop.xlane.xlu0 %1659
          %v1661 = vrot.slane %v1660, 4
          %v1662 = vadd.f32 %v1660, %v1661
          %v1663 = vrot.slane %v1662, 2
          %v1664 = vadd.f32 %v1662, %v1663
          %v1665 = vrot.slane %v1664, 1
          %v1666 = vadd.f32 %v1664, %v1665
          %s1667 = vtos %v1666
          %s1668 = sld [smem:[#allocation4 + $0x4]]
          %s1669 = sadd.f32 %s1668, %s1646
          %1670 = sst [smem:[%s695]] %s1669
          %s1671 = sld [smem:[#allocation5 + $0x4]]
          %s1672 = sadd.f32 %s1671, %s1667
          %1673 = sst [smem:[%s699]] %s1672
          %v1674 = vld [vmem:[%s211] sm:$0x3]
          %v1675 = vld [vmem:[%s211 + $0x8] sm:$0x3]
          %v1676 = vld [vmem:[%s211 + $0x10] sm:$0x3]
          %v1677 = vld [vmem:[#allocation2] sm:$0x3]
          %v1678 = vld [vmem:[#allocation2 + $0x2] sm:$0x3]
          %v1679 = vld [vmem:[#allocation2 + $0x4] sm:$0x3]
          %v1680 = vld [vmem:[%s218] sm:$0x3]
          %v1681 = vld [vmem:[%s218 + $0x8] sm:$0x3]
          %v1682 = vld [vmem:[%s218 + $0x10] sm:$0x3]
          %v1683 = vld [vmem:[#allocation3] sm:$0x3]
          %v1684 = vld [vmem:[#allocation3 + $0x2] sm:$0x3]
          %v1685 = vld [vmem:[#allocation3 + $0x4] sm:$0x3]
          %1689 = vrot.lane.b32.xlu0 %v1677, 1
          %v1690 = vpop.permute.xlu0 %1689
          %1691 = vrot.lane.b32.xlu0 %v1678, 1
          %v1692 = vpop.permute.xlu0 %1691
          %1693 = vrot.lane.b32.xlu0 %v1679, 1
          %v1694 = vpop.permute.xlu0 %1693
          %v1698 = vsub.f32 %v1674, %v1690
          %v1699 = vsub.f32 %v1675, %v1692
          %v1700 = vsub.f32 %v1676, %v1694
          %v1701 = vmul.f32 %v1698, %v1698
          %v1702 = vmul.f32 %v1699, %v1699
          %v1703 = vmul.f32 %v1700, %v1700
          %vm1704 = vcmask 189448
          %v1705 = vsel %vm1704, %v1701, 0.0
          %v1706 = vsel %vm1704, %v1702, 0.0
          %v1707 = vadd.f32 %v1705, %v1706
          %v1708 = vsel %vm1704, %v1703, 0.0
          %v1709 = vadd.f32 %v1707, %v1708
          %v1710 = vmul.f32 %v1709, -0.005
          %v1711 = vmul.f32 %v1710, 1.442695
          %v1712 = vpow.pop %v1711
          %1714 = vrot.lane.b32.xlu0 %v1712, 127
          %v1715 = vpop.permute.xlu0 %1714
          %vm1717 = vcmask 181248
          %v1718 = vsel %vm1717, %v1715, 0.0
          %1719 = vadd.xlane.f32.xlu0 %v1718
          %v1720 = vpop.xlane.xlu0 %1719
          %v1721 = vrot.slane %v1720, 4
          %v1722 = vadd.f32 %v1720, %v1721
          %v1723 = vrot.slane %v1722, 2
          %v1724 = vadd.f32 %v1722, %v1723
          %v1725 = vrot.slane %v1724, 1
          %v1726 = vadd.f32 %v1724, %v1725
          %s1727 = vtos %v1726
          %1731 = vrot.lane.b32.xlu0 %v1683, 1
          %v1732 = vpop.permute.xlu0 %1731
          %1733 = vrot.lane.b32.xlu0 %v1684, 1
          %v1734 = vpop.permute.xlu0 %1733
          %1735 = vrot.lane.b32.xlu0 %v1685, 1
          %v1736 = vpop.permute.xlu0 %1735
          %v1740 = vsub.f32 %v1680, %v1732
          %v1741 = vsub.f32 %v1681, %v1734
          %v1742 = vsub.f32 %v1682, %v1736
          %v1743 = vand.u32 2147483647, %v1740
          %v1744 = vand.u32 2147483647, %v1741
          %v1745 = vand.u32 2147483647, %v1742
          %v1746 = vsel %vm1704, %v1743, 0.0
          %v1747 = vsel %vm1704, %v1744, 0.0
          %v1748 = vadd.f32 %v1746, %v1747
          %v1749 = vsel %vm1704, %v1745, 0.0
          %v1750 = vadd.f32 %v1748, %v1749
          %1752 = vrot.lane.b32.xlu0 %v1750, 127
          %v1753 = vpop.permute.xlu0 %1752
          %v1755 = vsel %vm1717, %v1753, 0.0
          %1756 = vadd.xlane.f32.xlu0 %v1755
          %v1757 = vpop.xlane.xlu0 %1756
          %v1758 = vrot.slane %v1757, 4
          %v1759 = vadd.f32 %v1757, %v1758
          %v1760 = vrot.slane %v1759, 2
          %v1761 = vadd.f32 %v1759, %v1760
          %v1762 = vrot.slane %v1761, 1
          %v1763 = vadd.f32 %v1761, %v1762
          %s1764 = vtos %v1763
          %s1765 = sld [smem:[#allocation4 + $0x6]]
          %s1766 = sadd.f32 %s1765, %s1727
          %1767 = sst [smem:[%s887]] %s1766
          %s1768 = sld [smem:[#allocation5 + $0x6]]
          %s1769 = sadd.f32 %s1768, %s1764
          %1770 = sst [smem:[%s891]] %s1769
          %v1771 = vld [vmem:[%s211] sm:$0x3]
          %v1772 = vld [vmem:[%s211 + $0x8] sm:$0x3]
          %v1773 = vld [vmem:[%s211 + $0x10] sm:$0x3]
          %v1774 = vld [vmem:[#allocation2] sm:$0x3]
          %v1775 = vld [vmem:[#allocation2 + $0x2] sm:$0x3]
          %v1776 = vld [vmem:[#allocation2 + $0x4] sm:$0x3]
          %v1777 = vld [vmem:[%s218] sm:$0x3]
          %v1778 = vld [vmem:[%s218 + $0x8] sm:$0x3]
          %v1779 = vld [vmem:[%s218 + $0x10] sm:$0x3]
          %v1780 = vld [vmem:[#allocation3] sm:$0x3]
          %v1781 = vld [vmem:[#allocation3 + $0x2] sm:$0x3]
          %v1782 = vld [vmem:[#allocation3 + $0x4] sm:$0x3]
          %1786 = vrot.lane.b32.xlu0 %v1774, 127
          %v1787 = vpop.permute.xlu0 %1786
          %1788 = vrot.lane.b32.xlu0 %v1775, 127
          %v1789 = vpop.permute.xlu0 %1788
          %1790 = vrot.lane.b32.xlu0 %v1776, 127
          %v1791 = vpop.permute.xlu0 %1790
          %v1795 = vsub.f32 %v1771, %v1787
          %v1796 = vsub.f32 %v1772, %v1789
          %v1797 = vsub.f32 %v1773, %v1791
          %v1798 = vmul.f32 %v1795, %v1795
          %v1799 = vmul.f32 %v1796, %v1796
          %v1800 = vmul.f32 %v1797, %v1797
          %v1801 = vsel %vm1717, %v1798, 0.0
          %v1802 = vsel %vm1717, %v1799, 0.0
          %v1803 = vadd.f32 %v1801, %v1802
          %v1804 = vsel %vm1717, %v1800, 0.0
          %v1805 = vadd.f32 %v1803, %v1804
          %v1806 = vmul.f32 %v1805, -0.005
          %v1807 = vmul.f32 %v1806, 1.442695
          %v1808 = vpow.pop %v1807
          %v1809 = vsel %vm1717, %v1808, 0.0
          %1810 = vadd.xlane.f32.xlu0 %v1809
          %v1811 = vpop.xlane.xlu0 %1810
          %v1812 = vrot.slane %v1811, 4
          %v1813 = vadd.f32 %v1811, %v1812
          %v1814 = vrot.slane %v1813, 2
          %v1815 = vadd.f32 %v1813, %v1814
          %v1816 = vrot.slane %v1815, 1
          %v1817 = vadd.f32 %v1815, %v1816
          %s1818 = vtos %v1817
          %1822 = vrot.lane.b32.xlu0 %v1780, 127
          %v1823 = vpop.permute.xlu0 %1822
          %1824 = vrot.lane.b32.xlu0 %v1781, 127
          %v1825 = vpop.permute.xlu0 %1824
          %1826 = vrot.lane.b32.xlu0 %v1782, 127
          %v1827 = vpop.permute.xlu0 %1826
          %v1831 = vsub.f32 %v1777, %v1823
          %v1832 = vsub.f32 %v1778, %v1825
          %v1833 = vsub.f32 %v1779, %v1827
          %v1834 = vand.u32 2147483647, %v1831
          %v1835 = vand.u32 2147483647, %v1832
          %v1836 = vand.u32 2147483647, %v1833
          %v1837 = vsel %vm1717, %v1834, 0.0
          %v1838 = vsel %vm1717, %v1835, 0.0
          %v1839 = vadd.f32 %v1837, %v1838
          %v1840 = vsel %vm1717, %v1836, 0.0
          %v1841 = vadd.f32 %v1839, %v1840
          %v1842 = vsel %vm1717, %v1841, 0.0
          %1843 = vadd.xlane.f32.xlu0 %v1842
          %v1844 = vpop.xlane.xlu0 %1843
          %v1845 = vrot.slane %v1844, 4
          %v1846 = vadd.f32 %v1844, %v1845
          %v1847 = vrot.slane %v1846, 2
          %v1848 = vadd.f32 %v1846, %v1847
          %v1849 = vrot.slane %v1848, 1
          %v1850 = vadd.f32 %v1848, %v1849
          %s1851 = vtos %v1850
          %s1852 = sld [smem:[#allocation4 + $0x7]]
          %s1853 = sadd.f32 %s1852, %s1818
          %1854 = sst [smem:[%s976]] %s1853
          %s1855 = sld [smem:[#allocation5 + $0x7]]
          %s1856 = sadd.f32 %s1855, %s1851
          %1857 = sst [smem:[%s980]] %s1856
          %v1858 = vld [vmem:[%s211] sm:$0x1]
          %v1859 = vld [vmem:[%s211 + $0x8] sm:$0x1]
          %v1860 = vld [vmem:[%s211 + $0x10] sm:$0x1]
          %v1861 = vld [vmem:[#allocation2 + $0x1] sm:$0x1]
          %v1862 = vld [vmem:[#allocation2 + $0x3] sm:$0x1]
          %v1863 = vld [vmem:[#allocation2 + $0x5] sm:$0x1]
          %v1864 = vld [vmem:[%s218] sm:$0x1]
          %v1865 = vld [vmem:[%s218 + $0x8] sm:$0x1]
          %v1866 = vld [vmem:[%s218 + $0x10] sm:$0x1]
          %v1867 = vld [vmem:[#allocation3 + $0x1] sm:$0x1]
          %v1868 = vld [vmem:[#allocation3 + $0x3] sm:$0x1]
          %v1869 = vld [vmem:[#allocation3 + $0x5] sm:$0x1]
          %1873 = vrot.lane.b32.xlu0 %v1861, 2
          %v1874 = vpop.permute.xlu0 %1873
          %1875 = vrot.lane.b32.xlu0 %v1862, 2
          %v1876 = vpop.permute.xlu0 %1875
          %1877 = vrot.lane.b32.xlu0 %v1863, 2
          %v1878 = vpop.permute.xlu0 %1877
          %v1882 = vsub.f32 %v1858, %v1874
          %v1883 = vsub.f32 %v1859, %v1876
          %v1884 = vsub.f32 %v1860, %v1878
          %v1885 = vmul.f32 %v1882, %v1882
          %v1886 = vmul.f32 %v1883, %v1883
          %v1887 = vmul.f32 %v1884, %v1884
          %vm1888 = vcmask 188432
          %v1889 = vsel %vm1888, %v1885, 0.0
          %v1890 = vsel %vm1888, %v1886, 0.0
          %v1891 = vadd.f32 %v1889, %v1890
          %v1892 = vsel %vm1888, %v1887, 0.0
          %v1893 = vadd.f32 %v1891, %v1892
          %v1894 = vmul.f32 %v1893, -0.005
          %v1895 = vmul.f32 %v1894, 1.442695
          %v1896 = vpow.pop %v1895
          %1898 = vrot.lane.b32.xlu0 %v1896, 126
          %v1899 = vpop.permute.xlu0 %1898
          %vm1901 = vcmask 172032
          %v1902 = vsel %vm1901, %v1899, 0.0
          %1903 = vadd.xlane.f32.xlu0 %v1902
          %v1904 = vpop.xlane.xlu0 %1903
          %v1905 = vrot.slane %v1904, 4
          %v1906 = vadd.f32 %v1904, %v1905
          %v1907 = vrot.slane %v1906, 2
          %v1908 = vadd.f32 %v1906, %v1907
          %v1909 = vrot.slane %v1908, 1
          %v1910 = vadd.f32 %v1908, %v1909
          %s1911 = vtos %v1910
          %1915 = vrot.lane.b32.xlu0 %v1867, 2
          %v1916 = vpop.permute.xlu0 %1915
          %1917 = vrot.lane.b32.xlu0 %v1868, 2
          %v1918 = vpop.permute.xlu0 %1917
          %1919 = vrot.lane.b32.xlu0 %v1869, 2
          %v1920 = vpop.permute.xlu0 %1919
          %v1924 = vsub.f32 %v1864, %v1916
          %v1925 = vsub.f32 %v1865, %v1918
          %v1926 = vsub.f32 %v1866, %v1920
          %v1927 = vand.u32 2147483647, %v1924
          %v1928 = vand.u32 2147483647, %v1925
          %v1929 = vand.u32 2147483647, %v1926
          %v1930 = vsel %vm1888, %v1927, 0.0
          %v1931 = vsel %vm1888, %v1928, 0.0
          %v1932 = vadd.f32 %v1930, %v1931
          %v1933 = vsel %vm1888, %v1929, 0.0
          %v1934 = vadd.f32 %v1932, %v1933
          %1936 = vrot.lane.b32.xlu0 %v1934, 126
          %v1937 = vpop.permute.xlu0 %1936
          %v1939 = vsel %vm1901, %v1937, 0.0
          %1940 = vadd.xlane.f32.xlu0 %v1939
          %v1941 = vpop.xlane.xlu0 %1940
          %v1942 = vrot.slane %v1941, 4
          %v1943 = vadd.f32 %v1941, %v1942
          %v1944 = vrot.slane %v1943, 2
          %v1945 = vadd.f32 %v1943, %v1944
          %v1946 = vrot.slane %v1945, 1
          %v1947 = vadd.f32 %v1945, %v1946
          %s1948 = vtos %v1947
          %s1949 = sld [smem:[#allocation4 + $0x8]]
          %s1950 = sadd.f32 %s1949, %s1911
          %1951 = sst [smem:[%s1075]] %s1950
          %s1952 = sld [smem:[#allocation5 + $0x8]]
          %s1953 = sadd.f32 %s1952, %s1948
          %1954 = sst [smem:[%s1079]] %s1953
          %v1955 = vld [vmem:[%s211] sm:$0x1]
          %v1956 = vld [vmem:[%s211 + $0x8] sm:$0x1]
          %v1957 = vld [vmem:[%s211 + $0x10] sm:$0x1]
          %v1958 = vld [vmem:[#allocation2 + $0x1] sm:$0x1]
          %v1959 = vld [vmem:[#allocation2 + $0x3] sm:$0x1]
          %v1960 = vld [vmem:[#allocation2 + $0x5] sm:$0x1]
          %v1961 = vld [vmem:[%s218] sm:$0x1]
          %v1962 = vld [vmem:[%s218 + $0x8] sm:$0x1]
          %v1963 = vld [vmem:[%s218 + $0x10] sm:$0x1]
          %v1964 = vld [vmem:[#allocation3 + $0x1] sm:$0x1]
          %v1965 = vld [vmem:[#allocation3 + $0x3] sm:$0x1]
          %v1966 = vld [vmem:[#allocation3 + $0x5] sm:$0x1]
          %1970 = vrot.lane.b32.xlu0 %v1958, 126
          %v1971 = vpop.permute.xlu0 %1970
          %1972 = vrot.lane.b32.xlu0 %v1959, 126
          %v1973 = vpop.permute.xlu0 %1972
          %1974 = vrot.lane.b32.xlu0 %v1960, 126
          %v1975 = vpop.permute.xlu0 %1974
          %v1979 = vsub.f32 %v1955, %v1971
          %v1980 = vsub.f32 %v1956, %v1973
          %v1981 = vsub.f32 %v1957, %v1975
          %v1982 = vmul.f32 %v1979, %v1979
          %v1983 = vmul.f32 %v1980, %v1980
          %v1984 = vmul.f32 %v1981, %v1981
          %v1985 = vsel %vm1901, %v1982, 0.0
          %v1986 = vsel %vm1901, %v1983, 0.0
          %v1987 = vadd.f32 %v1985, %v1986
          %v1988 = vsel %vm1901, %v1984, 0.0
          %v1989 = vadd.f32 %v1987, %v1988
          %v1990 = vmul.f32 %v1989, -0.005
          %v1991 = vmul.f32 %v1990, 1.442695
          %v1992 = vpow.pop %v1991
          %v1993 = vsel %vm1901, %v1992, 0.0
          %1994 = vadd.xlane.f32.xlu0 %v1993
          %v1995 = vpop.xlane.xlu0 %1994
          %v1996 = vrot.slane %v1995, 4
          %v1997 = vadd.f32 %v1995, %v1996
          %v1998 = vrot.slane %v1997, 2
          %v1999 = vadd.f32 %v1997, %v1998
          %v2000 = vrot.slane %v1999, 1
          %v2001 = vadd.f32 %v1999, %v2000
          %s2002 = vtos %v2001
          %2006 = vrot.lane.b32.xlu0 %v1964, 126
          %v2007 = vpop.permute.xlu0 %2006
          %2008 = vrot.lane.b32.xlu0 %v1965, 126
          %v2009 = vpop.permute.xlu0 %2008
          %2010 = vrot.lane.b32.xlu0 %v1966, 126
          %v2011 = vpop.permute.xlu0 %2010
          %v2015 = vsub.f32 %v1961, %v2007
          %v2016 = vsub.f32 %v1962, %v2009
          %v2017 = vsub.f32 %v1963, %v2011
          %v2018 = vand.u32 2147483647, %v2015
          %v2019 = vand.u32 2147483647, %v2016
          %v2020 = vand.u32 2147483647, %v2017
          %v2021 = vsel %vm1901, %v2018, 0.0
          %v2022 = vsel %vm1901, %v2019, 0.0
          %v2023 = vadd.f32 %v2021, %v2022
          %v2024 = vsel %vm1901, %v2020, 0.0
          %v2025 = vadd.f32 %v2023, %v2024
          %v2026 = vsel %vm1901, %v2025, 0.0
          %2027 = vadd.xlane.f32.xlu0 %v2026
          %v2028 = vpop.xlane.xlu0 %2027
          %v2029 = vrot.slane %v2028, 4
          %v2030 = vadd.f32 %v2028, %v2029
          %v2031 = vrot.slane %v2030, 2
          %v2032 = vadd.f32 %v2030, %v2031
          %v2033 = vrot.slane %v2032, 1
          %v2034 = vadd.f32 %v2032, %v2033
          %s2035 = vtos %v2034
          %s2036 = sld [smem:[#allocation4 + $0x9]]
          %s2037 = sadd.f32 %s2036, %s2002
          %2038 = sst [smem:[%s1164]] %s2037
          %s2039 = sld [smem:[#allocation5 + $0x9]]
          %s2040 = sadd.f32 %s2039, %s2035
          %2041 = sst [smem:[%s1168]] %s2040
          %v2042 = vld [vmem:[%s211] sm:$0x3]
          %v2043 = vld [vmem:[%s211 + $0x8] sm:$0x3]
          %v2044 = vld [vmem:[%s211 + $0x10] sm:$0x3]
          %v2045 = vld [vmem:[#allocation2] sm:$0x3]
          %v2046 = vld [vmem:[#allocation2 + $0x2] sm:$0x3]
          %v2047 = vld [vmem:[#allocation2 + $0x4] sm:$0x3]
          %v2048 = vld [vmem:[%s218] sm:$0x3]
          %v2049 = vld [vmem:[%s218 + $0x8] sm:$0x3]
          %v2050 = vld [vmem:[%s218 + $0x10] sm:$0x3]
          %v2051 = vld [vmem:[#allocation3] sm:$0x3]
          %v2052 = vld [vmem:[#allocation3 + $0x2] sm:$0x3]
          %v2053 = vld [vmem:[#allocation3 + $0x4] sm:$0x3]
          %2057 = vrot.lane.b32.xlu0 %v2045, 2
          %v2058 = vpop.permute.xlu0 %2057
          %2059 = vrot.lane.b32.xlu0 %v2046, 2
          %v2060 = vpop.permute.xlu0 %2059
          %2061 = vrot.lane.b32.xlu0 %v2047, 2
          %v2062 = vpop.permute.xlu0 %2061
          %v2066 = vsub.f32 %v2042, %v2058
          %v2067 = vsub.f32 %v2043, %v2060
          %v2068 = vsub.f32 %v2044, %v2062
          %v2069 = vmul.f32 %v2066, %v2066
          %v2070 = vmul.f32 %v2067, %v2067
          %v2071 = vmul.f32 %v2068, %v2068
          %vm2072 = vcmask 189456
          %v2073 = vsel %vm2072, %v2069, 0.0
          %v2074 = vsel %vm2072, %v2070, 0.0
          %v2075 = vadd.f32 %v2073, %v2074
          %v2076 = vsel %vm2072, %v2071, 0.0
          %v2077 = vadd.f32 %v2075, %v2076
          %v2078 = vmul.f32 %v2077, -0.005
          %v2079 = vmul.f32 %v2078, 1.442695
          %v2080 = vpow.pop %v2079
          %2082 = vrot.lane.b32.xlu0 %v2080, 126
          %v2083 = vpop.permute.xlu0 %2082
          %vm2085 = vcmask 173056
          %v2086 = vsel %vm2085, %v2083, 0.0
          %2087 = vadd.xlane.f32.xlu0 %v2086
          %v2088 = vpop.xlane.xlu0 %2087
          %v2089 = vrot.slane %v2088, 4
          %v2090 = vadd.f32 %v2088, %v2089
          %v2091 = vrot.slane %v2090, 2
          %v2092 = vadd.f32 %v2090, %v2091
          %v2093 = vrot.slane %v2092, 1
          %v2094 = vadd.f32 %v2092, %v2093
          %s2095 = vtos %v2094
          %2099 = vrot.lane.b32.xlu0 %v2051, 2
          %v2100 = vpop.permute.xlu0 %2099
          %2101 = vrot.lane.b32.xlu0 %v2052, 2
          %v2102 = vpop.permute.xlu0 %2101
          %2103 = vrot.lane.b32.xlu0 %v2053, 2
          %v2104 = vpop.permute.xlu0 %2103
          %v2108 = vsub.f32 %v2048, %v2100
          %v2109 = vsub.f32 %v2049, %v2102
          %v2110 = vsub.f32 %v2050, %v2104
          %v2111 = vand.u32 2147483647, %v2108
          %v2112 = vand.u32 2147483647, %v2109
          %v2113 = vand.u32 2147483647, %v2110
          %v2114 = vsel %vm2072, %v2111, 0.0
          %v2115 = vsel %vm2072, %v2112, 0.0
          %v2116 = vadd.f32 %v2114, %v2115
          %v2117 = vsel %vm2072, %v2113, 0.0
          %v2118 = vadd.f32 %v2116, %v2117
          %2120 = vrot.lane.b32.xlu0 %v2118, 126
          %v2121 = vpop.permute.xlu0 %2120
          %v2123 = vsel %vm2085, %v2121, 0.0
          %2124 = vadd.xlane.f32.xlu0 %v2123
          %v2125 = vpop.xlane.xlu0 %2124
          %v2126 = vrot.slane %v2125, 4
          %v2127 = vadd.f32 %v2125, %v2126
          %v2128 = vrot.slane %v2127, 2
          %v2129 = vadd.f32 %v2127, %v2128
          %v2130 = vrot.slane %v2129, 1
          %v2131 = vadd.f32 %v2129, %v2130
          %s2132 = vtos %v2131
          %s2133 = sld [smem:[#allocation4 + $0xa]]
          %s2134 = sadd.f32 %s2133, %s2095
          %2135 = sst [smem:[%s1263]] %s2134
          %s2136 = sld [smem:[#allocation5 + $0xa]]
          %s2137 = sadd.f32 %s2136, %s2132
          %2138 = sst [smem:[%s1267]] %s2137
          %v2139 = vld [vmem:[%s211] sm:$0x3]
          %v2140 = vld [vmem:[%s211 + $0x8] sm:$0x3]
          %v2141 = vld [vmem:[%s211 + $0x10] sm:$0x3]
          %v2142 = vld [vmem:[#allocation2] sm:$0x3]
          %v2143 = vld [vmem:[#allocation2 + $0x2] sm:$0x3]
          %v2144 = vld [vmem:[#allocation2 + $0x4] sm:$0x3]
          %v2145 = vld [vmem:[%s218] sm:$0x3]
          %v2146 = vld [vmem:[%s218 + $0x8] sm:$0x3]
          %v2147 = vld [vmem:[%s218 + $0x10] sm:$0x3]
          %v2148 = vld [vmem:[#allocation3] sm:$0x3]
          %v2149 = vld [vmem:[#allocation3 + $0x2] sm:$0x3]
          %v2150 = vld [vmem:[#allocation3 + $0x4] sm:$0x3]
          %2154 = vrot.lane.b32.xlu0 %v2142, 126
          %v2155 = vpop.permute.xlu0 %2154
          %2156 = vrot.lane.b32.xlu0 %v2143, 126
          %v2157 = vpop.permute.xlu0 %2156
          %2158 = vrot.lane.b32.xlu0 %v2144, 126
          %v2159 = vpop.permute.xlu0 %2158
          %v2163 = vsub.f32 %v2139, %v2155
          %v2164 = vsub.f32 %v2140, %v2157
          %v2165 = vsub.f32 %v2141, %v2159
          %v2166 = vmul.f32 %v2163, %v2163
          %v2167 = vmul.f32 %v2164, %v2164
          %v2168 = vmul.f32 %v2165, %v2165
          %v2169 = vsel %vm2085, %v2166, 0.0
          %v2170 = vsel %vm2085, %v2167, 0.0
          %v2171 = vadd.f32 %v2169, %v2170
          %v2172 = vsel %vm2085, %v2168, 0.0
          %v2173 = vadd.f32 %v2171, %v2172
          %v2174 = vmul.f32 %v2173, -0.005
          %v2175 = vmul.f32 %v2174, 1.442695
          %v2176 = vpow.pop %v2175
          %v2177 = vsel %vm2085, %v2176, 0.0
          %2178 = vadd.xlane.f32.xlu0 %v2177
          %v2179 = vpop.xlane.xlu0 %2178
          %v2180 = vrot.slane %v2179, 4
          %v2181 = vadd.f32 %v2179, %v2180
          %v2182 = vrot.slane %v2181, 2
          %v2183 = vadd.f32 %v2181, %v2182
          %v2184 = vrot.slane %v2183, 1
          %v2185 = vadd.f32 %v2183, %v2184
          %s2186 = vtos %v2185
          %2190 = vrot.lane.b32.xlu0 %v2148, 126
          %v2191 = vpop.permute.xlu0 %2190
          %2192 = vrot.lane.b32.xlu0 %v2149, 126
          %v2193 = vpop.permute.xlu0 %2192
          %2194 = vrot.lane.b32.xlu0 %v2150, 126
          %v2195 = vpop.permute.xlu0 %2194
          %v2199 = vsub.f32 %v2145, %v2191
          %v2200 = vsub.f32 %v2146, %v2193
          %v2201 = vsub.f32 %v2147, %v2195
          %v2202 = vand.u32 2147483647, %v2199
          %v2203 = vand.u32 2147483647, %v2200
          %v2204 = vand.u32 2147483647, %v2201
          %v2205 = vsel %vm2085, %v2202, 0.0
          %v2206 = vsel %vm2085, %v2203, 0.0
          %v2207 = vadd.f32 %v2205, %v2206
          %v2208 = vsel %vm2085, %v2204, 0.0
          %v2209 = vadd.f32 %v2207, %v2208
          %v2210 = vsel %vm2085, %v2209, 0.0
          %2211 = vadd.xlane.f32.xlu0 %v2210
          %v2212 = vpop.xlane.xlu0 %2211
          %v2213 = vrot.slane %v2212, 4
          %v2214 = vadd.f32 %v2212, %v2213
          %v2215 = vrot.slane %v2214, 2
          %v2216 = vadd.f32 %v2214, %v2215
          %v2217 = vrot.slane %v2216, 1
          %v2218 = vadd.f32 %v2216, %v2217
          %s2219 = vtos %v2218
          %s2220 = sld [smem:[#allocation4 + $0xb]]
          %s2221 = sadd.f32 %s2220, %s2186
          %2222 = sst [smem:[%s1352]] %s2221
          %s2223 = sld [smem:[#allocation5 + $0xb]]
          %s2224 = sadd.f32 %s2223, %s2219
          %2225 = sst [smem:[%s1356]] %s2224
        $region112: #{smooth_loss_pallas.1} parent=95 // pred_fallthru
          _
        %v2226 = vld [vmem:[%s211 + $0x6] sm:$0x3]
        %v2227 = vld [vmem:[%s211 + $0xe] sm:$0x3]
        %v2228 = vld [vmem:[%s211 + $0x16] sm:$0x3]
        %vm2229 = vcmask 189440
        %2230 = vst.msk [vmem:[#allocation2] sm:$0x3] %vm2229, %v2226
        %2231 = vst.msk [vmem:[#allocation2 + $0x2] sm:$0x3] %vm2229, %v2227
        %2232 = vst.msk [vmem:[#allocation2 + $0x4] sm:$0x3] %vm2229, %v2228
        %v2233 = vld [vmem:[%s218 + $0x6] sm:$0x3]
        %v2234 = vld [vmem:[%s218 + $0xe] sm:$0x3]
        %v2235 = vld [vmem:[%s218 + $0x16] sm:$0x3]
        %2236 = vst.msk [vmem:[#allocation3] sm:$0x3] %vm2229, %v2233
        %2237 = vst.msk [vmem:[#allocation3 + $0x2] sm:$0x3] %vm2229, %v2234
        %2238 = vst.msk [vmem:[#allocation3 + $0x4] sm:$0x3] %vm2229, %v2235
        %p2239 = scmp.eq.s32.totalorder %s14, 1
        // Predicated region
        $region113: #{smooth_loss_pallas.1} parent=95 // pred_check
          %p2240 = pneg %p2239
        $region114: #{smooth_loss_pallas.1} parent=95 // pred_check_branch
          %2242 = sbr.rel (%p2240) target = $region116
        $region115: #{smooth_loss_pallas.1} parent=95 // pred_region
          %s2243 = sld [smem:[#allocation4]]
          %s2244 = smul.f32 %s2243, 5.144033e-06
          %s2245 = sld [smem:[#allocation5]]
          %s2246 = smul.f32 %s2244, %s2245
          %s2247 = sadd.f32 %s2246, 0.0
          %s2248 = sld [smem:[#allocation4 + $0x1]]
          %s2249 = smul.f32 %s2248, 4.92281e-06
          %s2250 = sld [smem:[#allocation5 + $0x1]]
          %s2251 = smul.f32 %s2249, %s2250
          %s2252 = sadd.f32 %s2247, %s2251
          %s2253 = sld [smem:[#allocation4 + $0x2]]
          %s2254 = smul.f32 %s2253, 5.601064e-06
          %s2255 = sld [smem:[#allocation5 + $0x2]]
          %s2256 = smul.f32 %s2254, %s2255
          %s2257 = sadd.f32 %s2252, %s2256
          %s2258 = sld [smem:[#allocation4 + $0x3]]
          %s2259 = smul.f32 %s2258, 5.601064e-06
          %s2260 = sld [smem:[#allocation5 + $0x3]]
          %s2261 = smul.f32 %s2259, %s2260
          %s2262 = sadd.f32 %s2257, %s2261
          %s2263 = sld [smem:[#allocation4 + $0x4]]
          %s2264 = smul.f32 %s2263, 5.90514e-06
          %s2265 = sld [smem:[#allocation5 + $0x4]]
          %s2266 = smul.f32 %s2264, %s2265
          %s2267 = sadd.f32 %s2262, %s2266
          %s2268 = sld [smem:[#allocation4 + $0x5]]
          %s2269 = smul.f32 %s2268, 5.3805097e-06
          %s2270 = sld [smem:[#allocation5 + $0x5]]
          %s2271 = smul.f32 %s2269, %s2270
          %s2272 = sadd.f32 %s2267, %s2271
          %s2273 = sld [smem:[#allocation4 + $0x6]]
          %s2274 = smul.f32 %s2273, 6.4297933e-06
          %s2275 = sld [smem:[#allocation5 + $0x6]]
          %s2276 = smul.f32 %s2274, %s2275
          %s2277 = sadd.f32 %s2272, %s2276
          %s2278 = sld [smem:[#allocation4 + $0x7]]
          %s2279 = smul.f32 %s2278, 6.4297933e-06
          %s2280 = sld [smem:[#allocation5 + $0x7]]
          %s2281 = smul.f32 %s2279, %s2280
          %s2282 = sadd.f32 %s2277, %s2281
          %s2283 = sld [smem:[#allocation4 + $0x8]]
          %s2284 = smul.f32 %s2283, 6.1218243e-06
          %s2285 = sld [smem:[#allocation5 + $0x8]]
          %s2286 = smul.f32 %s2284, %s2285
          %s2287 = sadd.f32 %s2282, %s2286
          %s2288 = sld [smem:[#allocation4 + $0x9]]
          %s2289 = smul.f32 %s2288, 6.1218243e-06
          %s2290 = sld [smem:[#allocation5 + $0x9]]
          %s2291 = smul.f32 %s2289, %s2290
          %s2292 = sadd.f32 %s2287, %s2291
          %s2293 = sld [smem:[#allocation4 + $0xa]]
          %s2294 = smul.f32 %s2293, 7.0276046e-06
          %s2295 = sld [smem:[#allocation5 + $0xa]]
          %s2296 = smul.f32 %s2294, %s2295
          %s2297 = sadd.f32 %s2292, %s2296
          %s2298 = sld [smem:[#allocation4 + $0xb]]
          %s2299 = smul.f32 %s2298, 7.0276046e-06
          %s2300 = sld [smem:[#allocation5 + $0xb]]
          %s2301 = smul.f32 %s2299, %s2300
          %s2302 = sadd.f32 %s2297, %s2301
          %s2303 = scalar_lea.smem [#allocation8], 0
          %2304 = sst [smem:[%s2303]] %s2302
        $region116: #{smooth_loss_pallas.1} parent=95 // pred_fallthru
          _
        // Predicated region
        $region117: #{smooth_loss_pallas.1} parent=95 // pred_check
          %p2305 = pneg %p79
        $region118: #{smooth_loss_pallas.1} parent=95 // pred_check_branch
          %2307 = sbr.rel (%p2305) target = $region120
        $region119: #{smooth_loss_pallas.1} parent=95 // pred_region
          %2309 = vsyncadd [#allocation9], 0
          %s2311 = sshll.u32 %s2, 4
          %s2312 = int_to_ptr.hbm [resolvable:$true] %s2311
          %2314 = dma.smem_to_hbm [#allocation8], 16, %s2312, [#allocation9]
        $region120: #{smooth_loss_pallas.1} parent=95 // pred_fallthru
          _
        // Predicated region
        $region121: #{smooth_loss_pallas.1} parent=95 // pred_check
          %p2315 = pneg %p79
        $region122: #{smooth_loss_pallas.1} parent=95 // pred_check_branch
          %2317 = sbr.rel (%p2315) target = $region124
        $region123: #{smooth_loss_pallas.1} parent=95 // pred_region
          %2319 = dma.done [#allocation9], 16
        $region124: #{smooth_loss_pallas.1} parent=95 // pred_fallthru
          _
        %2320 = sfence
      $region96: #{smooth_loss_pallas.1} parent=5 // pred_fallthru
        _
      %p2321 = scmp.le.s32.totalorder 2, %s9
      // Predicated region
      $region125: #{smooth_loss_pallas.1} parent=5 // pred_check
        %p2322 = pneg %p2321
      $region126: #{smooth_loss_pallas.1} parent=5 // pred_check_branch
        %2324 = sbr.rel (%p2322) target = $region128
      $region127: #{smooth_loss_pallas.1} parent=5 // pred_region
        %s2325 = ssub.s32 %s9, 2
      $region128: #{smooth_loss_pallas.1} parent=5 // pred_fallthru
        _
    $region6: #{smooth_loss_pallas.1} parent=1 // loop_footer
      %s13 = sadd.s32 1, %s9
    $region7: #{smooth_loss_pallas.1} parent=1 // loop_footer_branch
      %8 = sbr.rel target = $region3
    $region8: #{smooth_loss_pallas.1} parent=1 // loop_exit
      _
    %2326 = vsyncpa [#allocation9], 1
    %s2327 = scalar_lea.sflag [#allocation9], 1
    %2328 = vsyncpa %s2327, 1

</llo_original>
